<compile_context>
chip_gen: v6e
topology: v6e:2x2x1
jax: 0.10.0
libtpu: 0.0.40
codegen_flags: <defaults>
</compile_context>

<pallas_src>
import functools

import jax
import jax.numpy as jnp
from jax.experimental import pallas as pl
from jax.experimental.pallas import tpu as pltpu


# ----------------------------- Pallas kernel --------------------------------
def _aspect_head_kernel(
    h_ref,      # (BT, SC, H)  hidden-state chunk (compute dtype)
    cls_ref,    # (BT, H)      CLS hidden state per batch element (compute dtype)
    mb_ref,     # (BT, SC)     additive key-padding bias, f32 (0 keep / -1e30 pad)
    wkv_ref,    # (H, 2H)      fused [Wk | Wv] in-projection (compute dtype)
    wrest_ref,  # (3, H, H)    stacked [Wq, Wo, W1] (compute dtype)
    vec_ref,    # (9, H)       [bq, bk, bv, bo, ln1_g, ln1_b, b1, ln2_g, ln2_b] f32
    esum_ref,   # (H, NH)      per-head sum selector, pre-scaled by 1/sqrt(head_dim)
    eexp_ref,   # (NH, H)      head -> feature expand selector
    w2_ref,     # (H, CP)      classifier output weight, lane-padded (compute dtype)
    b2_ref,     # (1, CP)      classifier output bias, lane-padded, f32
    o_ref,      # (BT, CP)     logits, lane-padded, f32
    q_sc,       # (BT, H)  f32 scratch: CLS query projection
    m_sc,       # (BT, NH) f32 scratch: running per-head max
    l_sc,       # (BT, NH) f32 scratch: running per-head softmax denominator
    ctx_sc,     # (BT, H)  f32 scratch: running (unnormalized) context
    *, eps, compute_dtype,
):
    BT, SC, H = h_ref.shape
    NH = eexp_ref.shape[0]
    s_idx = pl.program_id(1)

    def mm(a, b):
        # MXU matmul: operands in compute_dtype (bf16 by default), f32 accumulate.
        return jnp.dot(a.astype(compute_dtype), b, preferred_element_type=jnp.float32)

    def mmf(a, b):
        # Tiny exact-f32 dot (off the critical path; (BT, NH) x (NH, H)).
        return jnp.dot(a.astype(jnp.float32), b.astype(jnp.float32),
                       preferred_element_type=jnp.float32)

    vecs = vec_ref[...]                      # (9, H) f32
    bq, bk, bv, bo = vecs[0:1], vecs[1:2], vecs[2:3], vecs[3:4]
    g1, be1, b1v = vecs[4:5], vecs[5:6], vecs[6:7]
    g2, be2 = vecs[7:8], vecs[8:9]

    # ---- per-batch-tile init (first sequence chunk) -------------------------
    @pl.when(s_idx == 0)
    def _():
        q_sc[...] = mm(cls_ref[...], wrest_ref[0]) + bq        # query = CLS token
        m_sc[...] = jnp.full_like(m_sc, -1e30)
        l_sc[...] = jnp.zeros_like(l_sc)
        ctx_sc[...] = jnp.zeros_like(ctx_sc)

    # ---- fused K/V projection for this chunk (one MXU pass over the chunk) --
    xf = h_ref[...].reshape(BT * SC, H)
    kvf = mm(xf, wkv_ref[...])                                  # (BT*SC, 2H) f32
    kf = kvf[:, :H] + bk                                        # (BT*SC, H)
    vf = kvf[:, H:] + bv                                        # (BT*SC, H)

    # ---- per-head scores for the length-1 (CLS) query ------------------------
    #   score[b, s, n] = (1/sqrt(hd)) * sum_{d in head n} q[b, d] * k[b, s, d]
    # (scale folded into esum).  Score math stays f32 (needed for the -1e30 bias).
    q = q_sc[...]                                               # (BT, H) f32
    p3 = kf.reshape(BT, SC, H) * q[:, None, :]
    scores = mm(p3.reshape(BT * SC, H), esum_ref[...]).reshape(BT, SC, NH)
    scores = scores + mb_ref[...][:, :, None]                   # key-padding bias

    # ---- online softmax update over this key chunk ---------------------------
    # NOTE: a fully key-masked row attends uniformly to padding instead of
    # producing NaN like PyTorch's all -inf row (degenerate inputs only).
    m_prev = m_sc[...]
    m_new = jnp.maximum(m_prev, jnp.max(scores, axis=1))        # (BT, NH)
    alpha = jnp.exp(m_prev - m_new)                             # (BT, NH)
    e = jnp.exp(scores - m_new[:, None, :])                     # (BT, SC, NH)
    l_sc[...] = alpha * l_sc[...] + jnp.sum(e, axis=1)
    m_sc[...] = m_new

    e_full = mm(e.reshape(BT * SC, NH), eexp_ref[...])          # (BT*SC, H)
    alpha_full = mmf(alpha, eexp_ref[...])                      # (BT, H)
    ctx_chunk = jnp.sum((e_full * vf).reshape(BT, SC, H), axis=1)   # (BT, H)
    ctx_sc[...] = alpha_full * ctx_sc[...] + ctx_chunk

    # ---- finalize: out-proj + LayerNorm + classifier (last chunk only) -------
    @pl.when(s_idx == pl.num_programs(1) - 1)
    def _():
        inv_l = pl.reciprocal(l_sc[...], approx=True)           # EUP
        ctx = ctx_sc[...] * mmf(inv_l, eexp_ref[...])           # normalize per head
        attn = mm(ctx, wrest_ref[1]) + bo                       # (BT, H)

        mu = jnp.mean(attn, axis=-1, keepdims=True)
        var = jnp.mean((attn - mu) ** 2, axis=-1, keepdims=True)
        y = (attn - mu) * jax.lax.rsqrt(var + eps) * g1 + be1

        # classifier: Linear -> ReLU -> (Dropout = identity) -> LayerNorm -> Linear
        h1 = jnp.maximum(mm(y, wrest_ref[2]) + b1v, 0.0)
        mu2 = jnp.mean(h1, axis=-1, keepdims=True)
        var2 = jnp.mean((h1 - mu2) ** 2, axis=-1, keepdims=True)
        h2 = (h1 - mu2) * jax.lax.rsqrt(var2 + eps) * g2 + be2

        o_ref[...] = mm(h2, w2_ref[...]) + b2_ref[...]          # lane-dense store


# ------------------------------ wrapper --------------------------------------
def aspect_head_pallas(hidden_states, attention_mask, params, *, num_heads,
                       eps=1e-5, compute_dtype=jnp.bfloat16,
                       batch_tile=8, seq_chunk=128):
    """hidden_states: (B, S, H) f32; attention_mask: (B, S) {0,1}.

    compute_dtype=bf16 (default on all TPU generations — v5e/v6e/v7x MXUs are
    bf16-native) casts matmul operands to bf16 with f32 accumulation; softmax,
    LayerNorm and mask math stay f32.  Pass compute_dtype=jnp.float32 for
    bit-closer results.  seq_chunk bounds live VMEM per step; batch_tile*seq_chunk
    (default 8*128) fits comfortably in v7x's 64 MiB per-core VMEM.
    """
    B, S, H = hidden_states.shape
    C = params["w2"].shape[1]
    NH = num_heads
    assert H % NH == 0, "hidden size must be divisible by num_heads"
    hd = H // NH
    scale = 1.0 / float(hd) ** 0.5

    # Lane-dense classifier output: pad C up to a multiple of 128 lanes.
    CP = max(128, ((C + 127) // 128) * 128)

    # Batch tiling: BT multiple of 8 (sublane alignment of the (BT, CP) output
    # block) — or the whole (small) batch in one tile.
    if B <= 8:
        BT, B_pad = B, B
    else:
        BT = max(8, (min(batch_tile, B) // 8) * 8)
        B_pad = ((B + BT - 1) // BT) * BT

    # Sequence chunking: SC multiple of 128 (lane alignment of the (BT, SC) mask
    # block) — or the whole (short) sequence in one chunk.
    SCk = max(128, (seq_chunk // 128) * 128)
    if S <= SCk:
        SC, S_pad = S, S
    else:
        SC = SCk
        S_pad = ((S + SC - 1) // SC) * SC

    hs, am = hidden_states, attention_mask
    if S_pad != S:       # pad extra key positions as masked-out
        hs = jnp.concatenate([hs, jnp.zeros((B, S_pad - S, H), hs.dtype)], axis=1)
        am = jnp.concatenate([am, jnp.zeros((B, S_pad - S), am.dtype)], axis=1)
    if B_pad != B:       # padded batch rows: mask all-ones (avoid fully-masked rows)
        hs = jnp.concatenate([hs, jnp.zeros((B_pad - B, S_pad, H), hs.dtype)], axis=0)
        am = jnp.concatenate([am, jnp.ones((B_pad - B, S_pad), am.dtype)], axis=0)

    x = hs.astype(compute_dtype)                     # (B_pad, S_pad, H)
    cls = hs[:, 0, :].astype(compute_dtype)          # (B_pad, H) query source
    # Additive key-padding bias (0 keep / -1e30 pad), lane-dense (S last); the
    # head broadcast happens in-kernel at the add.  Must stay f32.
    mbias = (am.astype(jnp.float32) - 1.0) * 1e30    # (B_pad, S_pad)

    # Packed weights: fused K|V (one MXU pass per chunk) + [Wq, Wo, W1] stack.
    wkv = jnp.concatenate([params["wk"], params["wv"]], axis=1).astype(compute_dtype)
    wrest = jnp.stack([params["wq"], params["wo"], params["w1"]], axis=0).astype(compute_dtype)
    vecs = jnp.concatenate([params["bq"], params["bk"], params["bv"], params["bo"],
                            params["ln1_g"], params["ln1_b"], params["b1"],
                            params["ln2_g"], params["ln2_b"]],
                           axis=0).astype(jnp.float32)                         # (9, H)

    # Head selector matrices; attention scale folded into esum (constant).
    head_of_dim = jnp.arange(H) // hd
    eexp_f = (head_of_dim[None, :] == jnp.arange(NH)[:, None]).astype(jnp.float32)  # (NH,H)
    eexp = eexp_f.astype(compute_dtype)
    esum = (eexp_f.T * scale).astype(compute_dtype)                                  # (H,NH)

    w2p = jnp.zeros((H, CP), jnp.float32).at[:, :C].set(params["w2"]).astype(compute_dtype)
    b2p = jnp.zeros((1, CP), jnp.float32).at[:, :C].set(params["b2"])

    kernel = functools.partial(_aspect_head_kernel, eps=eps, compute_dtype=compute_dtype)

    # VMEM budget: ~3/4 of the per-core capacity (64 MiB on v7x, 128 MiB v5e/v6e).
    try:
        vmem_limit = min((int(pltpu.get_tpu_info().vmem_capacity_bytes) * 3) // 4,
                         110 * 1024 * 1024)
    except Exception:
        vmem_limit = 48 * 1024 * 1024

    def _const_index_map(ndim):
        zeros = (0,) * ndim
        return lambda b, s: zeros

    def build(single_buffer_weights):
        def inv_spec(shape):
            # Grid-invariant blocks: fetched once; single-buffer them to save VMEM.
            if single_buffer_weights:
                return pl.BlockSpec(shape, _const_index_map(len(shape)),
                                    pipeline_mode=pl.Buffered(1))
            return pl.BlockSpec(shape, _const_index_map(len(shape)))

        in_specs = [
            pl.BlockSpec((BT, SC, H), lambda b, s: (b, s, 0)),   # hidden-state chunk
            pl.BlockSpec((BT, H), lambda b, s: (b, 0)),          # CLS hidden state
            pl.BlockSpec((BT, SC), lambda b, s: (b, s)),         # additive mask bias
            inv_spec((H, 2 * H)),                                # fused K|V weight
            inv_spec((3, H, H)),                                 # [Wq, Wo, W1]
            inv_spec((9, H)),                                    # bias / LN vectors
            inv_spec((H, NH)),                                   # head-sum selector
            inv_spec((NH, H)),                                   # head-expand selector
            inv_spec((H, CP)),                                   # classifier W2
            inv_spec((1, CP)),                                   # classifier b2
        ]
        return pl.pallas_call(
            kernel,
            out_shape=jax.ShapeDtypeStruct((B_pad, CP), jnp.float32),
            grid_spec=pltpu.PrefetchScalarGridSpec(
                num_scalar_prefetch=0,
                grid=(B_pad // BT, S_pad // SC),
                in_specs=in_specs,
                out_specs=pl.BlockSpec((BT, CP), lambda b, s: (b, 0)),
                scratch_shapes=[
                    pltpu.VMEM((BT, H), jnp.float32),    # q
                    pltpu.VMEM((BT, NH), jnp.float32),   # running max
                    pltpu.VMEM((BT, NH), jnp.float32),   # running denom
                    pltpu.VMEM((BT, H), jnp.float32),    # running context
                ],
            ),
            compiler_params=pltpu.CompilerParams(
                # batch tiles independent (v7x 2-TC sharding); seq axis is the
                # online-softmax reduction -> arbitrary, last.
                dimension_semantics=("parallel", "arbitrary"),
                vmem_limit_bytes=int(vmem_limit),
            ),
        )

    args = (x, cls, mbias, wkv, wrest, vecs, esum, eexp, w2p, b2p)
    try:
        out = build(True)(*args)
    except Exception:
        # pipeline_mode=pl.Buffered(1) unsupported in this JAX build; fall back
        # to default (double-buffered) weight blocks — correctness unaffected.
        out = build(False)(*args)

    return out[:B, :C]


# ----------------------- plain-JAX reference (for checking) ------------------
def aspect_head_ref(hidden_states, attention_mask, params, *, num_heads, eps=1e-5):
    B, S, H = hidden_states.shape
    hd = H // num_heads
    scale = 1.0 / (hd ** 0.5)
    cls = hidden_states[:, 0, :]                                     # (B, H)
    q = cls @ params["wq"] + params["bq"][0]                         # (B, H)
    k = hidden_states @ params["wk"] + params["bk"][0]               # (B, S, H)
    v = hidden_states @ params["wv"] + params["bv"][0]               # (B, S, H)
    qh = q.reshape(B, num_heads, hd)
    kh = k.reshape(B, S, num_heads, hd)
    vh = v.reshape(B, S, num_heads, hd)
    scores = jnp.einsum("bhd,bshd->bhs", qh, kh) * scale             # (B, nh, S)
    mask = attention_mask.astype(bool)[:, None, :]
    scores = jnp.where(mask, scores, -1e30)
    a = jax.nn.softmax(scores, axis=-1)
    ctx = jnp.einsum("bhs,bshd->bhd", a, vh).reshape(B, H)
    attn = ctx @ params["wo"] + params["bo"][0]

    def ln(x, g, b):
        mu = jnp.mean(x, -1, keepdims=True)
        var = jnp.mean((x - mu) ** 2, -1, keepdims=True)
        return (x - mu) * jax.lax.rsqrt(var + eps) * g + b

    y = ln(attn, params["ln1_g"][0], params["ln1_b"][0])
    h1 = jnp.maximum(y @ params["w1"] + params["b1"][0], 0.0)
    h2 = ln(h1, params["ln2_g"][0], params["ln2_b"][0])
    return h2 @ params["w2"] + params["b2"][0]


# ------------------------------- main ----------------------------------------
if __name__ == "__main__":
    # ---------- test 1: small demo shapes (matches the module's tiny config) ----------
    B, S, H, NH, C = 2, 8, 32, 4, 3
    VOCAB = 100

    key = jax.random.PRNGKey(0)
    ks = jax.random.split(key, 12)

    # Synthetic "BERT": deterministic token embedding table (glue, not kernel).
    emb_table = jax.random.normal(ks[0], (VOCAB, H), jnp.float32) * 0.5
    input_ids = jax.random.randint(ks[1], (B, S), 0, VOCAB)
    attention_mask = jnp.array(
        [[1, 1, 1, 1, 1, 1, 1, 1],
         [1, 1, 1, 1, 1, 0, 0, 0]], dtype=jnp.int32)
    hidden_states = emb_table[input_ids]                       # (B, S, H) ~ last_hidden_state

    def wmk(k, shape, s=0.05):
        return jax.random.normal(k, shape, jnp.float32) * s

    params = {
        "wq": wmk(ks[2], (H, H)), "wk": wmk(ks[3], (H, H)), "wv": wmk(ks[4], (H, H)),
        "bq": jnp.zeros((1, H), jnp.float32),
        "bk": jnp.zeros((1, H), jnp.float32),
        "bv": jnp.zeros((1, H), jnp.float32),
        "wo": wmk(ks[5], (H, H)), "bo": wmk(ks[6], (1, H), 0.01),
        "ln1_g": jnp.ones((1, H), jnp.float32),
        "ln1_b": jnp.zeros((1, H), jnp.float32),
        "w1": wmk(ks[7], (H, H)), "b1": wmk(ks[8], (1, H), 0.01),
        "ln2_g": jnp.ones((1, H), jnp.float32),
        "ln2_b": jnp.zeros((1, H), jnp.float32),
        "w2": wmk(ks[9], (H, C)), "b2": wmk(ks[10], (1, C), 0.01),
    }

    ref = aspect_head_ref(hidden_states, attention_mask, params, num_heads=NH)

    # f32 path (tight check).
    logits = aspect_head_pallas(hidden_states, attention_mask, params, num_heads=NH,
                                compute_dtype=jnp.float32)
    logits = jax.block_until_ready(logits)
    assert logits.shape == (B, C)
    assert jnp.allclose(logits, ref, atol=2e-3, rtol=2e-3), (logits, ref)

    # default bf16-operand path (looser check).
    logits_bf16 = aspect_head_pallas(hidden_states, attention_mask, params, num_heads=NH)
    logits_bf16 = jax.block_until_ready(logits_bf16)
    assert jnp.allclose(logits_bf16, ref, atol=1e-1, rtol=1e-1), (logits_bf16, ref)

    # ---------- test 2: exercises S-chunking, batch tiling and padding ----------
    B2, S2, H2, NH2, C2 = 10, 200, 128, 8, 3          # -> BT=8 (B_pad=16), SC=128 (S_pad=256)
    k2 = jax.random.split(jax.random.PRNGKey(0), 16)
    hs2 = jax.random.normal(k2[0], (B2, S2, H2), jnp.float32)
    lens = jnp.array([200, 150, 120, 64, 32, 200, 17, 5, 90, 111])
    am2 = (jnp.arange(S2)[None, :] < lens[:, None]).astype(jnp.int32)

    params2 = {
        "wq": wmk(k2[1], (H2, H2)), "wk": wmk(k2[2], (H2, H2)), "wv": wmk(k2[3], (H2, H2)),
        "bq": wmk(k2[4], (1, H2), 0.02), "bk": wmk(k2[5], (1, H2), 0.02),
        "bv": wmk(k2[6], (1, H2), 0.02),
        "wo": wmk(k2[7], (H2, H2)), "bo": wmk(k2[8], (1, H2), 0.02),
        "ln1_g": 1.0 + wmk(k2[9], (1, H2), 0.1), "ln1_b": wmk(k2[10], (1, H2), 0.05),
        "w1": wmk(k2[11], (H2, H2)), "b1": wmk(k2[12], (1, H2), 0.02),
        "ln2_g": 1.0 + wmk(k2[13], (1, H2), 0.1), "ln2_b": wmk(k2[14], (1, H2), 0.05),
        "w2": wmk(k2[15], (H2, C2)), "b2": jnp.zeros((1, C2), jnp.float32),
    }

    ref2 = aspect_head_ref(hs2, am2, params2, num_heads=NH2)

    out2 = aspect_head_pallas(hs2, am2, params2, num_heads=NH2,
                              compute_dtype=jnp.float32, seq_chunk=128)
    out2 = jax.block_until_ready(out2)
    assert out2.shape == (B2, C2)
    assert jnp.allclose(out2, ref2, atol=5e-3, rtol=5e-3), (out2, ref2)

    out2_bf16 = aspect_head_pallas(hs2, am2, params2, num_heads=NH2, seq_chunk=128)
    out2_bf16 = jax.block_until_ready(out2_bf16)
    assert jnp.allclose(out2_bf16, ref2, atol=1.5e-1, rtol=1.5e-1), (out2_bf16, ref2)

    print("KERNEL_OK")
</pallas_src>

<mosaic_0001>
module attributes {stable_mosaic.version = 11 : i64} {
  func.func @_aspect_head_kernel(%arg0: i32, %arg1: i32, %arg2: memref<2x8x32xf32, #tpu.memory_space<vmem>>, %arg3: memref<2x32xf32, #tpu.memory_space<vmem>>, %arg4: memref<2x8xf32, #tpu.memory_space<vmem>>, %arg5: memref<32x64xf32, #tpu.memory_space<vmem>>, %arg6: memref<3x32x32xf32, #tpu.memory_space<vmem>>, %arg7: memref<9x32xf32, #tpu.memory_space<vmem>>, %arg8: memref<32x4xf32, #tpu.memory_space<vmem>>, %arg9: memref<4x32xf32, #tpu.memory_space<vmem>>, %arg10: memref<32x128xf32, #tpu.memory_space<vmem>>, %arg11: memref<1x128xf32, #tpu.memory_space<vmem>>, %arg12: memref<2x128xf32, #tpu.memory_space<vmem>>, %arg13: memref<2x32xf32, #tpu.memory_space<vmem>>, %arg14: memref<2x4xf32, #tpu.memory_space<vmem>>, %arg15: memref<2x4xf32, #tpu.memory_space<vmem>>, %arg16: memref<2x32xf32, #tpu.memory_space<vmem>>) attributes {dimension_semantics = [#tpu.dimension_semantics<parallel>, #tpu.dimension_semantics<arbitrary>], iteration_bounds = array<i64: 1, 1>, scalar_prefetch = 0 : i64, scratch_operands = 4 : i64, tpu.core_type = #tpu.core_type<tc>, window_params = [{transform_indices = @transform_0, window_bounds = array<i64: 2, 8, 32>}, {transform_indices = @transform_1, window_bounds = array<i64: 2, 32>}, {transform_indices = @transform_2, window_bounds = array<i64: 2, 8>}, {pipeline_mode = #tpu.pipeline_mode<synchronous>, transform_indices = @transform_3, window_bounds = array<i64: 32, 64>}, {pipeline_mode = #tpu.pipeline_mode<synchronous>, transform_indices = @transform_4, window_bounds = array<i64: 3, 32, 32>}, {pipeline_mode = #tpu.pipeline_mode<synchronous>, transform_indices = @transform_5, window_bounds = array<i64: 9, 32>}, {pipeline_mode = #tpu.pipeline_mode<synchronous>, transform_indices = @transform_6, window_bounds = array<i64: 32, 4>}, {pipeline_mode = #tpu.pipeline_mode<synchronous>, transform_indices = @transform_7, window_bounds = array<i64: 4, 32>}, {pipeline_mode = #tpu.pipeline_mode<synchronous>, transform_indices = @transform_8, window_bounds = array<i64: 32, 128>}, {pipeline_mode = #tpu.pipeline_mode<synchronous>, transform_indices = @transform_9, window_bounds = array<i64: 1, 128>}, {transform_indices = @transform_10, window_bounds = array<i64: 2, 128>}]} {
    %c0 = arith.constant 0 : index
    %c0_0 = arith.constant 0 : index
    %0 = vector.load %arg7[%c0, %c0_0] : memref<9x32xf32, #tpu.memory_space<vmem>>, vector<9x32xf32>
    %1 = vector.extract_strided_slice %0 {offsets = [0, 0], sizes = [1, 32], strides = [1, 1]} : vector<9x32xf32> to vector<1x32xf32>
    %2 = vector.extract_strided_slice %0 {offsets = [1, 0], sizes = [1, 32], strides = [1, 1]} : vector<9x32xf32> to vector<1x32xf32>
    %3 = vector.extract_strided_slice %0 {offsets = [2, 0], sizes = [1, 32], strides = [1, 1]} : vector<9x32xf32> to vector<1x32xf32>
    %4 = vector.extract_strided_slice %0 {offsets = [3, 0], sizes = [1, 32], strides = [1, 1]} : vector<9x32xf32> to vector<1x32xf32>
    %5 = vector.extract_strided_slice %0 {offsets = [4, 0], sizes = [1, 32], strides = [1, 1]} : vector<9x32xf32> to vector<1x32xf32>
    %6 = vector.extract_strided_slice %0 {offsets = [5, 0], sizes = [1, 32], strides = [1, 1]} : vector<9x32xf32> to vector<1x32xf32>
    %7 = vector.extract_strided_slice %0 {offsets = [6, 0], sizes = [1, 32], strides = [1, 1]} : vector<9x32xf32> to vector<1x32xf32>
    %8 = vector.extract_strided_slice %0 {offsets = [7, 0], sizes = [1, 32], strides = [1, 1]} : vector<9x32xf32> to vector<1x32xf32>
    %9 = vector.extract_strided_slice %0 {offsets = [8, 0], sizes = [1, 32], strides = [1, 1]} : vector<9x32xf32> to vector<1x32xf32>
    %c0_i32 = arith.constant 0 : i32
    %10 = arith.cmpi eq, %arg1, %c0_i32 : i32
    %11 = arith.extui %10 : i1 to i32
    %c0_i32_1 = arith.constant 0 : i32
    %12 = arith.cmpi ne, %11, %c0_i32_1 : i32
    scf.if %12 {
      %c0_37 = arith.constant 0 : index
      %c0_38 = arith.constant 0 : index
      %66 = vector.load %arg3[%c0_37, %c0_38] : memref<2x32xf32, #tpu.memory_space<vmem>>, vector<2x32xf32>
      %c0_39 = arith.constant 0 : index
      %c0_40 = arith.constant 0 : index
      %c0_41 = arith.constant 0 : index
      %67 = vector.load %arg6[%c0_39, %c0_40, %c0_41] : memref<3x32x32xf32, #tpu.memory_space<vmem>>, vector<1x32x32xf32>
      %68 = vector.shape_cast %67 : vector<1x32x32xf32> to vector<32x32xf32>
      %cst_42 = arith.constant dense<0.000000e+00> : vector<2x32xf32>
      %69 = tpu.matmul %66, %68, %cst_42 {dimension_numbers = #tpu.dot_dimension_numbers<[1], [0], [0], [1], [0, 0, 1, 1], [], []>} : vector<2x32xf32>, vector<32x32xf32>, vector<2x32xf32> -> vector<2x32xf32>
      %70 = vector.broadcast %1 : vector<1x32xf32> to vector<2x32xf32>
      %71 = arith.addf %69, %70 : vector<2x32xf32>
      %c0_43 = arith.constant 0 : index
      %c0_44 = arith.constant 0 : index
      %72 = vector.load %arg13[%c0_43, %c0_44] : memref<2x32xf32, #tpu.memory_space<vmem>>, vector<2x32xf32>
      tpu.vector_store %arg13[%c0_43, %c0_44], %71 {strides = array<i32>} : memref<2x32xf32, #tpu.memory_space<vmem>>, vector<2x32xf32>,
      %cst_45 = arith.constant -1.000000e+30 : f32
      %73 = vector.broadcast %cst_45 : f32 to vector<2x4xf32>
      %c0_46 = arith.constant 0 : index
      %c0_47 = arith.constant 0 : index
      %74 = vector.load %arg14[%c0_46, %c0_47] : memref<2x4xf32, #tpu.memory_space<vmem>>, vector<2x4xf32>
      tpu.vector_store %arg14[%c0_46, %c0_47], %73 {strides = array<i32>} : memref<2x4xf32, #tpu.memory_space<vmem>>, vector<2x4xf32>,
      %cst_48 = arith.constant 0.000000e+00 : f32
      %75 = vector.broadcast %cst_48 : f32 to vector<2x4xf32>
      %c0_49 = arith.constant 0 : index
      %c0_50 = arith.constant 0 : index
      %76 = vector.load %arg15[%c0_49, %c0_50] : memref<2x4xf32, #tpu.memory_space<vmem>>, vector<2x4xf32>
      tpu.vector_store %arg15[%c0_49, %c0_50], %75 {strides = array<i32>} : memref<2x4xf32, #tpu.memory_space<vmem>>, vector<2x4xf32>,
      %cst_51 = arith.constant 0.000000e+00 : f32
      %77 = vector.broadcast %cst_51 : f32 to vector<2x32xf32>
      %c0_52 = arith.constant 0 : index
      %c0_53 = arith.constant 0 : index
      %78 = vector.load %arg16[%c0_52, %c0_53] : memref<2x32xf32, #tpu.memory_space<vmem>>, vector<2x32xf32>
      tpu.vector_store %arg16[%c0_52, %c0_53], %77 {strides = array<i32>} : memref<2x32xf32, #tpu.memory_space<vmem>>, vector<2x32xf32>,
    } else {
    }
    %c0_2 = arith.constant 0 : index
    %c0_3 = arith.constant 0 : index
    %c0_4 = arith.constant 0 : index
    %13 = vector.load %arg2[%c0_2, %c0_3, %c0_4] : memref<2x8x32xf32, #tpu.memory_space<vmem>>, vector<2x8x32xf32>
    %14 = vector.shape_cast %13 : vector<2x8x32xf32> to vector<16x32xf32>
    %c0_5 = arith.constant 0 : index
    %c0_6 = arith.constant 0 : index
    %15 = vector.load %arg5[%c0_5, %c0_6] : memref<32x64xf32, #tpu.memory_space<vmem>>, vector<32x64xf32>
    %cst = arith.constant dense<0.000000e+00> : vector<16x64xf32>
    %16 = tpu.matmul %14, %15, %cst {dimension_numbers = #tpu.dot_dimension_numbers<[1], [0], [0], [1], [0, 0, 1, 1], [], []>} : vector<16x32xf32>, vector<32x64xf32>, vector<16x64xf32> -> vector<16x64xf32>
    %17 = vector.extract_strided_slice %16 {offsets = [0, 0], sizes = [16, 32], strides = [1, 1]} : vector<16x64xf32> to vector<16x32xf32>
    %18 = vector.broadcast %2 : vector<1x32xf32> to vector<16x32xf32>
    %19 = arith.addf %17, %18 : vector<16x32xf32>
    %20 = vector.extract_strided_slice %16 {offsets = [0, 32], sizes = [16, 32], strides = [1, 1]} : vector<16x64xf32> to vector<16x32xf32>
    %21 = vector.broadcast %3 : vector<1x32xf32> to vector<16x32xf32>
    %22 = arith.addf %20, %21 : vector<16x32xf32>
    %c0_7 = arith.constant 0 : index
    %c0_8 = arith.constant 0 : index
    %23 = vector.load %arg13[%c0_7, %c0_8] : memref<2x32xf32, #tpu.memory_space<vmem>>, vector<2x32xf32>
    %24 = vector.shape_cast %19 : vector<16x32xf32> to vector<2x8x32xf32>
    %25 = vector.shape_cast %23 : vector<2x32xf32> to vector<2x1x32xf32>
    %26 = vector.broadcast %25 : vector<2x1x32xf32> to vector<2x8x32xf32>
    %27 = arith.mulf %24, %26 : vector<2x8x32xf32>
    %28 = vector.shape_cast %27 : vector<2x8x32xf32> to vector<16x32xf32>
    %c0_9 = arith.constant 0 : index
    %c0_10 = arith.constant 0 : index
    %29 = vector.load %arg8[%c0_9, %c0_10] : memref<32x4xf32, #tpu.memory_space<vmem>>, vector<32x4xf32>
    %cst_11 = arith.constant dense<0.000000e+00> : vector<16x4xf32>
    %30 = tpu.matmul %28, %29, %cst_11 {dimension_numbers = #tpu.dot_dimension_numbers<[1], [0], [0], [1], [0, 0, 1, 1], [], []>} : vector<16x32xf32>, vector<32x4xf32>, vector<16x4xf32> -> vector<16x4xf32>
    %31 = vector.shape_cast %30 : vector<16x4xf32> to vector<2x8x4xf32>
    %c0_12 = arith.constant 0 : index
    %c0_13 = arith.constant 0 : index
    %32 = vector.load %arg4[%c0_12, %c0_13] : memref<2x8xf32, #tpu.memory_space<vmem>>, vector<2x8xf32>
    %33 = vector.shape_cast %32 : vector<2x8xf32> to vector<2x8x1xf32>
    %34 = vector.broadcast %33 : vector<2x8x1xf32> to vector<2x8x4xf32>
    %35 = arith.addf %31, %34 : vector<2x8x4xf32>
    %c0_14 = arith.constant 0 : index
    %c0_15 = arith.constant 0 : index
    %36 = vector.load %arg14[%c0_14, %c0_15] : memref<2x4xf32, #tpu.memory_space<vmem>>, vector<2x4xf32>
    %cst_16 = arith.constant dense<0xFF800000> : vector<2x4xf32>
    %37 = vector.multi_reduction <maximumf>, %35, %cst_16 [1] : vector<2x8x4xf32> to vector<2x4xf32>
    %38 = arith.maximumf %36, %37 : vector<2x4xf32>
    %39 = arith.subf %36, %38 : vector<2x4xf32>
    %40 = math.exp %39 : vector<2x4xf32>
    %41 = vector.shape_cast %38 : vector<2x4xf32> to vector<2x1x4xf32>
    %42 = vector.broadcast %41 : vector<2x1x4xf32> to vector<2x8x4xf32>
    %43 = arith.subf %35, %42 : vector<2x8x4xf32>
    %44 = math.exp %43 : vector<2x8x4xf32>
    %c0_17 = arith.constant 0 : index
    %c0_18 = arith.constant 0 : index
    %45 = vector.load %arg15[%c0_17, %c0_18] : memref<2x4xf32, #tpu.memory_space<vmem>>, vector<2x4xf32>
    %46 = arith.mulf %40, %45 : vector<2x4xf32>
    %cst_19 = arith.constant dense<0.000000e+00> : vector<2x4xf32>
    %47 = vector.multi_reduction <add>, %44, %cst_19 [1] : vector<2x8x4xf32> to vector<2x4xf32>
    %48 = arith.addf %46, %47 : vector<2x4xf32>
    %c0_20 = arith.constant 0 : index
    %c0_21 = arith.constant 0 : index
    %49 = vector.load %arg15[%c0_20, %c0_21] : memref<2x4xf32, #tpu.memory_space<vmem>>, vector<2x4xf32>
    tpu.vector_store %arg15[%c0_20, %c0_21], %48 {strides = array<i32>} : memref<2x4xf32, #tpu.memory_space<vmem>>, vector<2x4xf32>,
    %c0_22 = arith.constant 0 : index
    %c0_23 = arith.constant 0 : index
    %50 = vector.load %arg14[%c0_22, %c0_23] : memref<2x4xf32, #tpu.memory_space<vmem>>, vector<2x4xf32>
    tpu.vector_store %arg14[%c0_22, %c0_23], %38 {strides = array<i32>} : memref<2x4xf32, #tpu.memory_space<vmem>>, vector<2x4xf32>,
    %51 = vector.shape_cast %44 : vector<2x8x4xf32> to vector<16x4xf32>
    %c0_24 = arith.constant 0 : index
    %c0_25 = arith.constant 0 : index
    %52 = vector.load %arg9[%c0_24, %c0_25] : memref<4x32xf32, #tpu.memory_space<vmem>>, vector<4x32xf32>
    %cst_26 = arith.constant dense<0.000000e+00> : vector<16x32xf32>
    %53 = tpu.matmul %51, %52, %cst_26 {dimension_numbers = #tpu.dot_dimension_numbers<[1], [0], [0], [1], [0, 0, 1, 1], [], []>} : vector<16x4xf32>, vector<4x32xf32>, vector<16x32xf32> -> vector<16x32xf32>
    %c0_27 = arith.constant 0 : index
    %c0_28 = arith.constant 0 : index
    %54 = vector.load %arg9[%c0_27, %c0_28] : memref<4x32xf32, #tpu.memory_space<vmem>>, vector<4x32xf32>
    %cst_29 = arith.constant dense<0.000000e+00> : vector<2x32xf32>
    %55 = tpu.matmul %40, %54, %cst_29 {dimension_numbers = #tpu.dot_dimension_numbers<[1], [0], [0], [1], [0, 0, 1, 1], [], []>} : vector<2x4xf32>, vector<4x32xf32>, vector<2x32xf32> -> vector<2x32xf32>
    %56 = arith.mulf %53, %22 : vector<16x32xf32>
    %57 = vector.shape_cast %56 : vector<16x32xf32> to vector<2x8x32xf32>
    %cst_30 = arith.constant dense<0.000000e+00> : vector<2x32xf32>
    %58 = vector.multi_reduction <add>, %57, %cst_30 [1] : vector<2x8x32xf32> to vector<2x32xf32>
    %c0_31 = arith.constant 0 : index
    %c0_32 = arith.constant 0 : index
    %59 = vector.load %arg16[%c0_31, %c0_32] : memref<2x32xf32, #tpu.memory_space<vmem>>, vector<2x32xf32>
    %60 = arith.mulf %55, %59 : vector<2x32xf32>
    %61 = arith.addf %60, %58 : vector<2x32xf32>
    %c0_33 = arith.constant 0 : index
    %c0_34 = arith.constant 0 : index
    %62 = vector.load %arg16[%c0_33, %c0_34] : memref<2x32xf32, #tpu.memory_space<vmem>>, vector<2x32xf32>
    tpu.vector_store %arg16[%c0_33, %c0_34], %61 {strides = array<i32>} : memref<2x32xf32, #tpu.memory_space<vmem>>, vector<2x32xf32>,
    %c0_i32_35 = arith.constant 0 : i32
    %63 = arith.cmpi eq, %arg1, %c0_i32_35 : i32
    %64 = arith.extui %63 : i1 to i32
    %c0_i32_36 = arith.constant 0 : i32
    %65 = arith.cmpi ne, %64, %c0_i32_36 : i32
    scf.if %65 {
      %c0_37 = arith.constant 0 : index
      %c0_38 = arith.constant 0 : index
      %66 = vector.load %arg15[%c0_37, %c0_38] : memref<2x4xf32, #tpu.memory_space<vmem>>, vector<2x4xf32>
      %67 = tpu.reciprocal %66 {approx = true} : vector<2x4xf32> -> vector<2x4xf32>
      %c0_39 = arith.constant 0 : index
      %c0_40 = arith.constant 0 : index
      %68 = vector.load %arg16[%c0_39, %c0_40] : memref<2x32xf32, #tpu.memory_space<vmem>>, vector<2x32xf32>
      %c0_41 = arith.constant 0 : index
      %c0_42 = arith.constant 0 : index
      %69 = vector.load %arg9[%c0_41, %c0_42] : memref<4x32xf32, #tpu.memory_space<vmem>>, vector<4x32xf32>
      %cst_43 = arith.constant dense<0.000000e+00> : vector<2x32xf32>
      %70 = tpu.matmul %67, %69, %cst_43 {dimension_numbers = #tpu.dot_dimension_numbers<[1], [0], [0], [1], [0, 0, 1, 1], [], []>} : vector<2x4xf32>, vector<4x32xf32>, vector<2x32xf32> -> vector<2x32xf32>
      %71 = arith.mulf %68, %70 : vector<2x32xf32>
      %c1 = arith.constant 1 : index
      %c0_44 = arith.constant 0 : index
      %c0_45 = arith.constant 0 : index
      %72 = vector.load %arg6[%c1, %c0_44, %c0_45] : memref<3x32x32xf32, #tpu.memory_space<vmem>>, vector<1x32x32xf32>
      %73 = vector.shape_cast %72 : vector<1x32x32xf32> to vector<32x32xf32>
      %cst_46 = arith.constant dense<0.000000e+00> : vector<2x32xf32>
      %74 = tpu.matmul %71, %73, %cst_46 {dimension_numbers = #tpu.dot_dimension_numbers<[1], [0], [0], [1], [0, 0, 1, 1], [], []>} : vector<2x32xf32>, vector<32x32xf32>, vector<2x32xf32> -> vector<2x32xf32>
      %75 = vector.broadcast %4 : vector<1x32xf32> to vector<2x32xf32>
      %76 = arith.addf %74, %75 : vector<2x32xf32>
      %cst_47 = arith.constant dense<0.000000e+00> : vector<2xf32>
      %77 = vector.multi_reduction <add>, %76, %cst_47 [1] : vector<2x32xf32> to vector<2xf32>
      %78 = vector.shape_cast %77 : vector<2xf32> to vector<2x1xf32>
      %cst_48 = arith.constant 3.200000e+01 : f32
      %79 = vector.broadcast %cst_48 : f32 to vector<2x1xf32>
      %80 = arith.divf %78, %79 : vector<2x1xf32>
      %81 = vector.broadcast %80 : vector<2x1xf32> to vector<2x32xf32>
      %82 = arith.subf %76, %81 : vector<2x32xf32>
      %83 = arith.mulf %82, %82 : vector<2x32xf32>
      %cst_49 = arith.constant dense<0.000000e+00> : vector<2xf32>
      %84 = vector.multi_reduction <add>, %83, %cst_49 [1] : vector<2x32xf32> to vector<2xf32>
      %85 = vector.shape_cast %84 : vector<2xf32> to vector<2x1xf32>
      %cst_50 = arith.constant 3.200000e+01 : f32
      %86 = vector.broadcast %cst_50 : f32 to vector<2x1xf32>
      %87 = arith.divf %85, %86 : vector<2x1xf32>
      %88 = vector.broadcast %80 : vector<2x1xf32> to vector<2x32xf32>
      %89 = arith.subf %76, %88 : vector<2x32xf32>
      %cst_51 = arith.constant 9.99999974E-6 : f32
      %90 = vector.broadcast %cst_51 : f32 to vector<2x1xf32>
      %91 = arith.addf %87, %90 : vector<2x1xf32>
      %92 = math.rsqrt %91 : vector<2x1xf32>
      %93 = vector.broadcast %92 : vector<2x1xf32> to vector<2x32xf32>
      %94 = arith.mulf %89, %93 : vector<2x32xf32>
      %95 = vector.broadcast %5 : vector<1x32xf32> to vector<2x32xf32>
      %96 = arith.mulf %94, %95 : vector<2x32xf32>
      %97 = vector.broadcast %6 : vector<1x32xf32> to vector<2x32xf32>
      %98 = arith.addf %96, %97 : vector<2x32xf32>
      %c2 = arith.constant 2 : index
      %c0_52 = arith.constant 0 : index
      %c0_53 = arith.constant 0 : index
      %99 = vector.load %arg6[%c2, %c0_52, %c0_53] : memref<3x32x32xf32, #tpu.memory_space<vmem>>, vector<1x32x32xf32>
      %100 = vector.shape_cast %99 : vector<1x32x32xf32> to vector<32x32xf32>
      %cst_54 = arith.constant dense<0.000000e+00> : vector<2x32xf32>
      %101 = tpu.matmul %98, %100, %cst_54 {dimension_numbers = #tpu.dot_dimension_numbers<[1], [0], [0], [1], [0, 0, 1, 1], [], []>} : vector<2x32xf32>, vector<32x32xf32>, vector<2x32xf32> -> vector<2x32xf32>
      %102 = vector.broadcast %7 : vector<1x32xf32> to vector<2x32xf32>
      %103 = arith.addf %101, %102 : vector<2x32xf32>
      %cst_55 = arith.constant 0.000000e+00 : f32
      %104 = vector.broadcast %cst_55 : f32 to vector<2x32xf32>
      %105 = arith.maximumf %103, %104 : vector<2x32xf32>
      %cst_56 = arith.constant dense<0.000000e+00> : vector<2xf32>
      %106 = vector.multi_reduction <add>, %105, %cst_56 [1] : vector<2x32xf32> to vector<2xf32>
      %107 = vector.shape_cast %106 : vector<2xf32> to vector<2x1xf32>
      %cst_57 = arith.constant 3.200000e+01 : f32
      %108 = vector.broadcast %cst_57 : f32 to vector<2x1xf32>
      %109 = arith.divf %107, %108 : vector<2x1xf32>
      %110 = vector.broadcast %109 : vector<2x1xf32> to vector<2x32xf32>
      %111 = arith.subf %105, %110 : vector<2x32xf32>
      %112 = arith.mulf %111, %111 : vector<2x32xf32>
      %cst_58 = arith.constant dense<0.000000e+00> : vector<2xf32>
      %113 = vector.multi_reduction <add>, %112, %cst_58 [1] : vector<2x32xf32> to vector<2xf32>
      %114 = vector.shape_cast %113 : vector<2xf32> to vector<2x1xf32>
      %cst_59 = arith.constant 3.200000e+01 : f32
      %115 = vector.broadcast %cst_59 : f32 to vector<2x1xf32>
      %116 = arith.divf %114, %115 : vector<2x1xf32>
      %117 = vector.broadcast %109 : vector<2x1xf32> to vector<2x32xf32>
      %118 = arith.subf %105, %117 : vector<2x32xf32>
      %cst_60 = arith.constant 9.99999974E-6 : f32
      %119 = vector.broadcast %cst_60 : f32 to vector<2x1xf32>
      %120 = arith.addf %116, %119 : vector<2x1xf32>
      %121 = math.rsqrt %120 : vector<2x1xf32>
      %122 = vector.broadcast %121 : vector<2x1xf32> to vector<2x32xf32>
      %123 = arith.mulf %118, %122 : vector<2x32xf32>
      %124 = vector.broadcast %8 : vector<1x32xf32> to vector<2x32xf32>
      %125 = arith.mulf %123, %124 : vector<2x32xf32>
      %126 = vector.broadcast %9 : vector<1x32xf32> to vector<2x32xf32>
      %127 = arith.addf %125, %126 : vector<2x32xf32>
      %c0_61 = arith.constant 0 : index
      %c0_62 = arith.constant 0 : index
      %128 = vector.load %arg10[%c0_61, %c0_62] : memref<32x128xf32, #tpu.memory_space<vmem>>, vector<32x128xf32>
      %cst_63 = arith.constant dense<0.000000e+00> : vector<2x128xf32>
      %129 = tpu.matmul %127, %128, %cst_63 {dimension_numbers = #tpu.dot_dimension_numbers<[1], [0], [0], [1], [0, 0, 1, 1], [], []>} : vector<2x32xf32>, vector<32x128xf32>, vector<2x128xf32> -> vector<2x128xf32>
      %c0_64 = arith.constant 0 : index
      %c0_65 = arith.constant 0 : index
      %130 = vector.load %arg11[%c0_64, %c0_65] : memref<1x128xf32, #tpu.memory_space<vmem>>, vector<1x128xf32>
      %131 = vector.broadcast %130 : vector<1x128xf32> to vector<2x128xf32>
      %132 = arith.addf %129, %131 : vector<2x128xf32>
      %c0_66 = arith.constant 0 : index
      %c0_67 = arith.constant 0 : index
      %133 = vector.load %arg12[%c0_66, %c0_67] : memref<2x128xf32, #tpu.memory_space<vmem>>, vector<2x128xf32>
      tpu.vector_store %arg12[%c0_66, %c0_67], %132 {strides = array<i32>} : memref<2x128xf32, #tpu.memory_space<vmem>>, vector<2x128xf32>,
    } else {
    }
    return
  }
  func.func @transform_0(%arg0: i32, %arg1: i32) -> (i32, i32, i32) {
    %c0_i32 = arith.constant 0 : i32
    %c0_i32_0 = arith.constant 0 : i32
    return %arg0, %arg1, %c0_i32 : i32, i32, i32
  }
  func.func @transform_1(%arg0: i32, %arg1: i32) -> (i32, i32) {
    %c0_i32 = arith.constant 0 : i32
    %c0_i32_0 = arith.constant 0 : i32
    return %arg0, %c0_i32 : i32, i32
  }
  func.func @transform_2(%arg0: i32, %arg1: i32) -> (i32, i32) {
    %c0_i32 = arith.constant 0 : i32
    return %arg0, %arg1 : i32, i32
  }
  func.func @transform_3(%arg0: i32, %arg1: i32) -> (i32, i32) {
    %c0_i32 = arith.constant 0 : i32
    %c0_i32_0 = arith.constant 0 : i32
    %c0_i32_1 = arith.constant 0 : i32
    return %c0_i32, %c0_i32_0 : i32, i32
  }
  func.func @transform_4(%arg0: i32, %arg1: i32) -> (i32, i32, i32) {
    %c0_i32 = arith.constant 0 : i32
    %c0_i32_0 = arith.constant 0 : i32
    %c0_i32_1 = arith.constant 0 : i32
    %c0_i32_2 = arith.constant 0 : i32
    return %c0_i32, %c0_i32_0, %c0_i32_1 : i32, i32, i32
  }
  func.func @transform_5(%arg0: i32, %arg1: i32) -> (i32, i32) {
    %c0_i32 = arith.constant 0 : i32
    %c0_i32_0 = arith.constant 0 : i32
    %c0_i32_1 = arith.constant 0 : i32
    return %c0_i32, %c0_i32_0 : i32, i32
  }
  func.func @transform_6(%arg0: i32, %arg1: i32) -> (i32, i32) {
    %c0_i32 = arith.constant 0 : i32
    %c0_i32_0 = arith.constant 0 : i32
    %c0_i32_1 = arith.constant 0 : i32
    return %c0_i32, %c0_i32_0 : i32, i32
  }
  func.func @transform_7(%arg0: i32, %arg1: i32) -> (i32, i32) {
    %c0_i32 = arith.constant 0 : i32
    %c0_i32_0 = arith.constant 0 : i32
    %c0_i32_1 = arith.constant 0 : i32
    return %c0_i32, %c0_i32_0 : i32, i32
  }
  func.func @transform_8(%arg0: i32, %arg1: i32) -> (i32, i32) {
    %c0_i32 = arith.constant 0 : i32
    %c0_i32_0 = arith.constant 0 : i32
    %c0_i32_1 = arith.constant 0 : i32
    return %c0_i32, %c0_i32_0 : i32, i32
  }
  func.func @transform_9(%arg0: i32, %arg1: i32) -> (i32, i32) {
    %c0_i32 = arith.constant 0 : i32
    %c0_i32_0 = arith.constant 0 : i32
    %c0_i32_1 = arith.constant 0 : i32
    return %c0_i32, %c0_i32_0 : i32, i32
  }
  func.func @transform_10(%arg0: i32, %arg1: i32) -> (i32, i32) {
    %c0_i32 = arith.constant 0 : i32
    %c0_i32_0 = arith.constant 0 : i32
    return %arg0, %c0_i32 : i32, i32
  }
}

module attributes {stable_mosaic.version = 11 : i64} {
  func.func @_aspect_head_kernel(%arg0: i32, %arg1: i32, %arg2: memref<2x8x32xf32, #tpu.memory_space<vmem>>, %arg3: memref<2x32xf32, #tpu.memory_space<vmem>>, %arg4: memref<2x8xf32, #tpu.memory_space<vmem>>, %arg5: memref<32x64xf32, #tpu.memory_space<vmem>>, %arg6: memref<3x32x32xf32, #tpu.memory_space<vmem>>, %arg7: memref<9x32xf32, #tpu.memory_space<vmem>>, %arg8: memref<32x4xf32, #tpu.memory_space<vmem>>, %arg9: memref<4x32xf32, #tpu.memory_space<vmem>>, %arg10: memref<32x128xf32, #tpu.memory_space<vmem>>, %arg11: memref<1x128xf32, #tpu.memory_space<vmem>>, %arg12: memref<2x128xf32, #tpu.memory_space<vmem>>, %arg13: memref<2x32xf32, #tpu.memory_space<vmem>>, %arg14: memref<2x4xf32, #tpu.memory_space<vmem>>, %arg15: memref<2x4xf32, #tpu.memory_space<vmem>>, %arg16: memref<2x32xf32, #tpu.memory_space<vmem>>) attributes {dimension_semantics = [#tpu.dimension_semantics<parallel>, #tpu.dimension_semantics<arbitrary>], iteration_bounds = array<i64: 1, 1>, scalar_prefetch = 0 : i64, scratch_operands = 4 : i64, tpu.core_type = #tpu.core_type<tc>, window_params = [{transform_indices = @transform_0, window_bounds = array<i64: 2, 8, 32>}, {transform_indices = @transform_1, window_bounds = array<i64: 2, 32>}, {transform_indices = @transform_2, window_bounds = array<i64: 2, 8>}, {pipeline_mode = #tpu.pipeline_mode<synchronous>, transform_indices = @transform_3, window_bounds = array<i64: 32, 64>}, {pipeline_mode = #tpu.pipeline_mode<synchronous>, transform_indices = @transform_4, window_bounds = array<i64: 3, 32, 32>}, {pipeline_mode = #tpu.pipeline_mode<synchronous>, transform_indices = @transform_5, window_bounds = array<i64: 9, 32>}, {pipeline_mode = #tpu.pipeline_mode<synchronous>, transform_indices = @transform_6, window_bounds = array<i64: 32, 4>}, {pipeline_mode = #tpu.pipeline_mode<synchronous>, transform_indices = @transform_7, window_bounds = array<i64: 4, 32>}, {pipeline_mode = #tpu.pipeline_mode<synchronous>, transform_indices = @transform_8, window_bounds = array<i64: 32, 128>}, {pipeline_mode = #tpu.pipeline_mode<synchronous>, transform_indices = @transform_9, window_bounds = array<i64: 1, 128>}, {transform_indices = @transform_10, window_bounds = array<i64: 2, 128>}]} {
    %c0 = arith.constant 0 : index
    %c0_0 = arith.constant 0 : index
    %0 = vector.load %arg7[%c0, %c0_0] : memref<9x32xf32, #tpu.memory_space<vmem>>, vector<9x32xf32>
    %1 = vector.extract_strided_slice %0 {offsets = [0, 0], sizes = [1, 32], strides = [1, 1]} : vector<9x32xf32> to vector<1x32xf32>
    %2 = vector.extract_strided_slice %0 {offsets = [1, 0], sizes = [1, 32], strides = [1, 1]} : vector<9x32xf32> to vector<1x32xf32>
    %3 = vector.extract_strided_slice %0 {offsets = [2, 0], sizes = [1, 32], strides = [1, 1]} : vector<9x32xf32> to vector<1x32xf32>
    %4 = vector.extract_strided_slice %0 {offsets = [3, 0], sizes = [1, 32], strides = [1, 1]} : vector<9x32xf32> to vector<1x32xf32>
    %5 = vector.extract_strided_slice %0 {offsets = [4, 0], sizes = [1, 32], strides = [1, 1]} : vector<9x32xf32> to vector<1x32xf32>
    %6 = vector.extract_strided_slice %0 {offsets = [5, 0], sizes = [1, 32], strides = [1, 1]} : vector<9x32xf32> to vector<1x32xf32>
    %7 = vector.extract_strided_slice %0 {offsets = [6, 0], sizes = [1, 32], strides = [1, 1]} : vector<9x32xf32> to vector<1x32xf32>
    %8 = vector.extract_strided_slice %0 {offsets = [7, 0], sizes = [1, 32], strides = [1, 1]} : vector<9x32xf32> to vector<1x32xf32>
    %9 = vector.extract_strided_slice %0 {offsets = [8, 0], sizes = [1, 32], strides = [1, 1]} : vector<9x32xf32> to vector<1x32xf32>
    %c0_i32 = arith.constant 0 : i32
    %10 = arith.cmpi eq, %arg1, %c0_i32 : i32
    %11 = arith.extui %10 : i1 to i32
    %c0_i32_1 = arith.constant 0 : i32
    %12 = arith.cmpi ne, %11, %c0_i32_1 : i32
    scf.if %12 {
      %c0_37 = arith.constant 0 : index
      %c0_38 = arith.constant 0 : index
      %66 = vector.load %arg3[%c0_37, %c0_38] : memref<2x32xf32, #tpu.memory_space<vmem>>, vector<2x32xf32>
      %c0_39 = arith.constant 0 : index
      %c0_40 = arith.constant 0 : index
      %c0_41 = arith.constant 0 : index
      %67 = vector.load %arg6[%c0_39, %c0_40, %c0_41] : memref<3x32x32xf32, #tpu.memory_space<vmem>>, vector<1x32x32xf32>
      %68 = vector.shape_cast %67 : vector<1x32x32xf32> to vector<32x32xf32>
      %cst_42 = arith.constant dense<0.000000e+00> : vector<2x32xf32>
      %69 = tpu.matmul %66, %68, %cst_42 {dimension_numbers = #tpu.dot_dimension_numbers<[1], [0], [0], [1], [0, 0, 1, 1], [], []>} : vector<2x32xf32>, vector<32x32xf32>, vector<2x32xf32> -> vector<2x32xf32>
      %70 = vector.broadcast %1 : vector<1x32xf32> to vector<2x32xf32>
      %71 = arith.addf %69, %70 : vector<2x32xf32>
      %c0_43 = arith.constant 0 : index
      %c0_44 = arith.constant 0 : index
      %72 = vector.load %arg13[%c0_43, %c0_44] : memref<2x32xf32, #tpu.memory_space<vmem>>, vector<2x32xf32>
      tpu.vector_store %arg13[%c0_43, %c0_44], %71 {strides = array<i32>} : memref<2x32xf32, #tpu.memory_space<vmem>>, vector<2x32xf32>,
      %cst_45 = arith.constant -1.000000e+30 : f32
      %73 = vector.broadcast %cst_45 : f32 to vector<2x4xf32>
      %c0_46 = arith.constant 0 : index
      %c0_47 = arith.constant 0 : index
      %74 = vector.load %arg14[%c0_46, %c0_47] : memref<2x4xf32, #tpu.memory_space<vmem>>, vector<2x4xf32>
      tpu.vector_store %arg14[%c0_46, %c0_47], %73 {strides = array<i32>} : memref<2x4xf32, #tpu.memory_space<vmem>>, vector<2x4xf32>,
      %cst_48 = arith.constant 0.000000e+00 : f32
      %75 = vector.broadcast %cst_48 : f32 to vector<2x4xf32>
      %c0_49 = arith.constant 0 : index
      %c0_50 = arith.constant 0 : index
      %76 = vector.load %arg15[%c0_49, %c0_50] : memref<2x4xf32, #tpu.memory_space<vmem>>, vector<2x4xf32>
      tpu.vector_store %arg15[%c0_49, %c0_50], %75 {strides = array<i32>} : memref<2x4xf32, #tpu.memory_space<vmem>>, vector<2x4xf32>,
      %cst_51 = arith.constant 0.000000e+00 : f32
      %77 = vector.broadcast %cst_51 : f32 to vector<2x32xf32>
      %c0_52 = arith.constant 0 : index
      %c0_53 = arith.constant 0 : index
      %78 = vector.load %arg16[%c0_52, %c0_53] : memref<2x32xf32, #tpu.memory_space<vmem>>, vector<2x32xf32>
      tpu.vector_store %arg16[%c0_52, %c0_53], %77 {strides = array<i32>} : memref<2x32xf32, #tpu.memory_space<vmem>>, vector<2x32xf32>,
    } else {
    }
    %c0_2 = arith.constant 0 : index
    %c0_3 = arith.constant 0 : index
    %c0_4 = arith.constant 0 : index
    %13 = vector.load %arg2[%c0_2, %c0_3, %c0_4] : memref<2x8x32xf32, #tpu.memory_space<vmem>>, vector<2x8x32xf32>
    %14 = vector.shape_cast %13 : vector<2x8x32xf32> to vector<16x32xf32>
    %c0_5 = arith.constant 0 : index
    %c0_6 = arith.constant 0 : index
    %15 = vector.load %arg5[%c0_5, %c0_6] : memref<32x64xf32, #tpu.memory_space<vmem>>, vector<32x64xf32>
    %cst = arith.constant dense<0.000000e+00> : vector<16x64xf32>
    %16 = tpu.matmul %14, %15, %cst {dimension_numbers = #tpu.dot_dimension_numbers<[1], [0], [0], [1], [0, 0, 1, 1], [], []>} : vector<16x32xf32>, vector<32x64xf32>, vector<16x64xf32> -> vector<16x64xf32>
    %17 = vector.extract_strided_slice %16 {offsets = [0, 0], sizes = [16, 32], strides = [1, 1]} : vector<16x64xf32> to vector<16x32xf32>
    %18 = vector.broadcast %2 : vector<1x32xf32> to vector<16x32xf32>
    %19 = arith.addf %17, %18 : vector<16x32xf32>
    %20 = vector.extract_strided_slice %16 {offsets = [0, 32], sizes = [16, 32], strides = [1, 1]} : vector<16x64xf32> to vector<16x32xf32>
    %21 = vector.broadcast %3 : vector<1x32xf32> to vector<16x32xf32>
    %22 = arith.addf %20, %21 : vector<16x32xf32>
    %c0_7 = arith.constant 0 : index
    %c0_8 = arith.constant 0 : index
    %23 = vector.load %arg13[%c0_7, %c0_8] : memref<2x32xf32, #tpu.memory_space<vmem>>, vector<2x32xf32>
    %24 = vector.shape_cast %19 : vector<16x32xf32> to vector<2x8x32xf32>
    %25 = vector.shape_cast %23 : vector<2x32xf32> to vector<2x1x32xf32>
    %26 = vector.broadcast %25 : vector<2x1x32xf32> to vector<2x8x32xf32>
    %27 = arith.mulf %24, %26 : vector<2x8x32xf32>
    %28 = vector.shape_cast %27 : vector<2x8x32xf32> to vector<16x32xf32>
    %c0_9 = arith.constant 0 : index
    %c0_10 = arith.constant 0 : index
    %29 = vector.load %arg8[%c0_9, %c0_10] : memref<32x4xf32, #tpu.memory_space<vmem>>, vector<32x4xf32>
    %cst_11 = arith.constant dense<0.000000e+00> : vector<16x4xf32>
    %30 = tpu.matmul %28, %29, %cst_11 {dimension_numbers = #tpu.dot_dimension_numbers<[1], [0], [0], [1], [0, 0, 1, 1], [], []>} : vector<16x32xf32>, vector<32x4xf32>, vector<16x4xf32> -> vector<16x4xf32>
    %31 = vector.shape_cast %30 : vector<16x4xf32> to vector<2x8x4xf32>
    %c0_12 = arith.constant 0 : index
    %c0_13 = arith.constant 0 : index
    %32 = vector.load %arg4[%c0_12, %c0_13] : memref<2x8xf32, #tpu.memory_space<vmem>>, vector<2x8xf32>
    %33 = vector.shape_cast %32 : vector<2x8xf32> to vector<2x8x1xf32>
    %34 = vector.broadcast %33 : vector<2x8x1xf32> to vector<2x8x4xf32>
    %35 = arith.addf %31, %34 : vector<2x8x4xf32>
    %c0_14 = arith.constant 0 : index
    %c0_15 = arith.constant 0 : index
    %36 = vector.load %arg14[%c0_14, %c0_15] : memref<2x4xf32, #tpu.memory_space<vmem>>, vector<2x4xf32>
    %cst_16 = arith.constant dense<0xFF800000> : vector<2x4xf32>
    %37 = vector.multi_reduction <maximumf>, %35, %cst_16 [1] : vector<2x8x4xf32> to vector<2x4xf32>
    %38 = arith.maximumf %36, %37 : vector<2x4xf32>
    %39 = arith.subf %36, %38 : vector<2x4xf32>
    %40 = math.exp %39 : vector<2x4xf32>
    %41 = vector.shape_cast %38 : vector<2x4xf32> to vector<2x1x4xf32>
    %42 = vector.broadcast %41 : vector<2x1x4xf32> to vector<2x8x4xf32>
    %43 = arith.subf %35, %42 : vector<2x8x4xf32>
    %44 = math.exp %43 : vector<2x8x4xf32>
    %c0_17 = arith.constant 0 : index
    %c0_18 = arith.constant 0 : index
    %45 = vector.load %arg15[%c0_17, %c0_18] : memref<2x4xf32, #tpu.memory_space<vmem>>, vector<2x4xf32>
    %46 = arith.mulf %40, %45 : vector<2x4xf32>
    %cst_19 = arith.constant dense<0.000000e+00> : vector<2x4xf32>
    %47 = vector.multi_reduction <add>, %44, %cst_19 [1] : vector<2x8x4xf32> to vector<2x4xf32>
    %48 = arith.addf %46, %47 : vector<2x4xf32>
    %c0_20 = arith.constant 0 : index
    %c0_21 = arith.constant 0 : index
    %49 = vector.load %arg15[%c0_20, %c0_21] : memref<2x4xf32, #tpu.memory_space<vmem>>, vector<2x4xf32>
    tpu.vector_store %arg15[%c0_20, %c0_21], %48 {strides = array<i32>} : memref<2x4xf32, #tpu.memory_space<vmem>>, vector<2x4xf32>,
    %c0_22 = arith.constant 0 : index
    %c0_23 = arith.constant 0 : index
    %50 = vector.load %arg14[%c0_22, %c0_23] : memref<2x4xf32, #tpu.memory_space<vmem>>, vector<2x4xf32>
    tpu.vector_store %arg14[%c0_22, %c0_23], %38 {strides = array<i32>} : memref<2x4xf32, #tpu.memory_space<vmem>>, vector<2x4xf32>,
    %51 = vector.shape_cast %44 : vector<2x8x4xf32> to vector<16x4xf32>
    %c0_24 = arith.constant 0 : index
    %c0_25 = arith.constant 0 : index
    %52 = vector.load %arg9[%c0_24, %c0_25] : memref<4x32xf32, #tpu.memory_space<vmem>>, vector<4x32xf32>
    %cst_26 = arith.constant dense<0.000000e+00> : vector<16x32xf32>
    %53 = tpu.matmul %51, %52, %cst_26 {dimension_numbers = #tpu.dot_dimension_numbers<[1], [0], [0], [1], [0, 0, 1, 1], [], []>} : vector<16x4xf32>, vector<4x32xf32>, vector<16x32xf32> -> vector<16x32xf32>
    %c0_27 = arith.constant 0 : index
    %c0_28 = arith.constant 0 : index
    %54 = vector.load %arg9[%c0_27, %c0_28] : memref<4x32xf32, #tpu.memory_space<vmem>>, vector<4x32xf32>
    %cst_29 = arith.constant dense<0.000000e+00> : vector<2x32xf32>
    %55 = tpu.matmul %40, %54, %cst_29 {dimension_numbers = #tpu.dot_dimension_numbers<[1], [0], [0], [1], [0, 0, 1, 1], [], []>} : vector<2x4xf32>, vector<4x32xf32>, vector<2x32xf32> -> vector<2x32xf32>
    %56 = arith.mulf %53, %22 : vector<16x32xf32>
    %57 = vector.shape_cast %56 : vector<16x32xf32> to vector<2x8x32xf32>
    %cst_30 = arith.constant dense<0.000000e+00> : vector<2x32xf32>
    %58 = vector.multi_reduction <add>, %57, %cst_30 [1] : vector<2x8x32xf32> to vector<2x32xf32>
    %c0_31 = arith.constant 0 : index
    %c0_32 = arith.constant 0 : index
    %59 = vector.load %arg16[%c0_31, %c0_32] : memref<2x32xf32, #tpu.memory_space<vmem>>, vector<2x32xf32>
    %60 = arith.mulf %55, %59 : vector<2x32xf32>
    %61 = arith.addf %60, %58 : vector<2x32xf32>
    %c0_33 = arith.constant 0 : index
    %c0_34 = arith.constant 0 : index
    %62 = vector.load %arg16[%c0_33, %c0_34] : memref<2x32xf32, #tpu.memory_space<vmem>>, vector<2x32xf32>
    tpu.vector_store %arg16[%c0_33, %c0_34], %61 {strides = array<i32>} : memref<2x32xf32, #tpu.memory_space<vmem>>, vector<2x32xf32>,
    %c0_i32_35 = arith.constant 0 : i32
    %63 = arith.cmpi eq, %arg1, %c0_i32_35 : i32
    %64 = arith.extui %63 : i1 to i32
    %c0_i32_36 = arith.constant 0 : i32
    %65 = arith.cmpi ne, %64, %c0_i32_36 : i32
    scf.if %65 {
      %c0_37 = arith.constant 0 : index
      %c0_38 = arith.constant 0 : index
      %66 = vector.load %arg15[%c0_37, %c0_38] : memref<2x4xf32, #tpu.memory_space<vmem>>, vector<2x4xf32>
      %67 = tpu.reciprocal %66 {approx = true} : vector<2x4xf32> -> vector<2x4xf32>
      %c0_39 = arith.constant 0 : index
      %c0_40 = arith.constant 0 : index
      %68 = vector.load %arg16[%c0_39, %c0_40] : memref<2x32xf32, #tpu.memory_space<vmem>>, vector<2x32xf32>
      %c0_41 = arith.constant 0 : index
      %c0_42 = arith.constant 0 : index
      %69 = vector.load %arg9[%c0_41, %c0_42] : memref<4x32xf32, #tpu.memory_space<vmem>>, vector<4x32xf32>
      %cst_43 = arith.constant dense<0.000000e+00> : vector<2x32xf32>
      %70 = tpu.matmul %67, %69, %cst_43 {dimension_numbers = #tpu.dot_dimension_numbers<[1], [0], [0], [1], [0, 0, 1, 1], [], []>} : vector<2x4xf32>, vector<4x32xf32>, vector<2x32xf32> -> vector<2x32xf32>
      %71 = arith.mulf %68, %70 : vector<2x32xf32>
      %c1 = arith.constant 1 : index
      %c0_44 = arith.constant 0 : index
      %c0_45 = arith.constant 0 : index
      %72 = vector.load %arg6[%c1, %c0_44, %c0_45] : memref<3x32x32xf32, #tpu.memory_space<vmem>>, vector<1x32x32xf32>
      %73 = vector.shape_cast %72 : vector<1x32x32xf32> to vector<32x32xf32>
      %cst_46 = arith.constant dense<0.000000e+00> : vector<2x32xf32>
      %74 = tpu.matmul %71, %73, %cst_46 {dimension_numbers = #tpu.dot_dimension_numbers<[1], [0], [0], [1], [0, 0, 1, 1], [], []>} : vector<2x32xf32>, vector<32x32xf32>, vector<2x32xf32> -> vector<2x32xf32>
      %75 = vector.broadcast %4 : vector<1x32xf32> to vector<2x32xf32>
      %76 = arith.addf %74, %75 : vector<2x32xf32>
      %cst_47 = arith.constant dense<0.000000e+00> : vector<2xf32>
      %77 = vector.multi_reduction <add>, %76, %cst_47 [1] : vector<2x32xf32> to vector<2xf32>
      %78 = vector.shape_cast %77 : vector<2xf32> to vector<2x1xf32>
      %cst_48 = arith.constant 3.200000e+01 : f32
      %79 = vector.broadcast %cst_48 : f32 to vector<2x1xf32>
      %80 = arith.divf %78, %79 : vector<2x1xf32>
      %81 = vector.broadcast %80 : vector<2x1xf32> to vector<2x32xf32>
      %82 = arith.subf %76, %81 : vector<2x32xf32>
      %83 = arith.mulf %82, %82 : vector<2x32xf32>
      %cst_49 = arith.constant dense<0.000000e+00> : vector<2xf32>
      %84 = vector.multi_reduction <add>, %83, %cst_49 [1] : vector<2x32xf32> to vector<2xf32>
      %85 = vector.shape_cast %84 : vector<2xf32> to vector<2x1xf32>
      %cst_50 = arith.constant 3.200000e+01 : f32
      %86 = vector.broadcast %cst_50 : f32 to vector<2x1xf32>
      %87 = arith.divf %85, %86 : vector<2x1xf32>
      %88 = vector.broadcast %80 : vector<2x1xf32> to vector<2x32xf32>
      %89 = arith.subf %76, %88 : vector<2x32xf32>
      %cst_51 = arith.constant 9.99999974E-6 : f32
      %90 = vector.broadcast %cst_51 : f32 to vector<2x1xf32>
      %91 = arith.addf %87, %90 : vector<2x1xf32>
      %92 = math.rsqrt %91 : vector<2x1xf32>
      %93 = vector.broadcast %92 : vector<2x1xf32> to vector<2x32xf32>
      %94 = arith.mulf %89, %93 : vector<2x32xf32>
      %95 = vector.broadcast %5 : vector<1x32xf32> to vector<2x32xf32>
      %96 = arith.mulf %94, %95 : vector<2x32xf32>
      %97 = vector.broadcast %6 : vector<1x32xf32> to vector<2x32xf32>
      %98 = arith.addf %96, %97 : vector<2x32xf32>
      %c2 = arith.constant 2 : index
      %c0_52 = arith.constant 0 : index
      %c0_53 = arith.constant 0 : index
      %99 = vector.load %arg6[%c2, %c0_52, %c0_53] : memref<3x32x32xf32, #tpu.memory_space<vmem>>, vector<1x32x32xf32>
      %100 = vector.shape_cast %99 : vector<1x32x32xf32> to vector<32x32xf32>
      %cst_54 = arith.constant dense<0.000000e+00> : vector<2x32xf32>
      %101 = tpu.matmul %98, %100, %cst_54 {dimension_numbers = #tpu.dot_dimension_numbers<[1], [0], [0], [1], [0, 0, 1, 1], [], []>} : vector<2x32xf32>, vector<32x32xf32>, vector<2x32xf32> -> vector<2x32xf32>
      %102 = vector.broadcast %7 : vector<1x32xf32> to vector<2x32xf32>
      %103 = arith.addf %101, %102 : vector<2x32xf32>
      %cst_55 = arith.constant 0.000000e+00 : f32
      %104 = vector.broadcast %cst_55 : f32 to vector<2x32xf32>
      %105 = arith.maximumf %103, %104 : vector<2x32xf32>
      %cst_56 = arith.constant dense<0.000000e+00> : vector<2xf32>
      %106 = vector.multi_reduction <add>, %105, %cst_56 [1] : vector<2x32xf32> to vector<2xf32>
      %107 = vector.shape_cast %106 : vector<2xf32> to vector<2x1xf32>
      %cst_57 = arith.constant 3.200000e+01 : f32
      %108 = vector.broadcast %cst_57 : f32 to vector<2x1xf32>
      %109 = arith.divf %107, %108 : vector<2x1xf32>
      %110 = vector.broadcast %109 : vector<2x1xf32> to vector<2x32xf32>
      %111 = arith.subf %105, %110 : vector<2x32xf32>
      %112 = arith.mulf %111, %111 : vector<2x32xf32>
      %cst_58 = arith.constant dense<0.000000e+00> : vector<2xf32>
      %113 = vector.multi_reduction <add>, %112, %cst_58 [1] : vector<2x32xf32> to vector<2xf32>
      %114 = vector.shape_cast %113 : vector<2xf32> to vector<2x1xf32>
      %cst_59 = arith.constant 3.200000e+01 : f32
      %115 = vector.broadcast %cst_59 : f32 to vector<2x1xf32>
      %116 = arith.divf %114, %115 : vector<2x1xf32>
      %117 = vector.broadcast %109 : vector<2x1xf32> to vector<2x32xf32>
      %118 = arith.subf %105, %117 : vector<2x32xf32>
      %cst_60 = arith.constant 9.99999974E-6 : f32
      %119 = vector.broadcast %cst_60 : f32 to vector<2x1xf32>
      %120 = arith.addf %116, %119 : vector<2x1xf32>
      %121 = math.rsqrt %120 : vector<2x1xf32>
      %122 = vector.broadcast %121 : vector<2x1xf32> to vector<2x32xf32>
      %123 = arith.mulf %118, %122 : vector<2x32xf32>
      %124 = vector.broadcast %8 : vector<1x32xf32> to vector<2x32xf32>
      %125 = arith.mulf %123, %124 : vector<2x32xf32>
      %126 = vector.broadcast %9 : vector<1x32xf32> to vector<2x32xf32>
      %127 = arith.addf %125, %126 : vector<2x32xf32>
      %c0_61 = arith.constant 0 : index
      %c0_62 = arith.constant 0 : index
      %128 = vector.load %arg10[%c0_61, %c0_62] : memref<32x128xf32, #tpu.memory_space<vmem>>, vector<32x128xf32>
      %cst_63 = arith.constant dense<0.000000e+00> : vector<2x128xf32>
      %129 = tpu.matmul %127, %128, %cst_63 {dimension_numbers = #tpu.dot_dimension_numbers<[1], [0], [0], [1], [0, 0, 1, 1], [], []>} : vector<2x32xf32>, vector<32x128xf32>, vector<2x128xf32> -> vector<2x128xf32>
      %c0_64 = arith.constant 0 : index
      %c0_65 = arith.constant 0 : index
      %130 = vector.load %arg11[%c0_64, %c0_65] : memref<1x128xf32, #tpu.memory_space<vmem>>, vector<1x128xf32>
      %131 = vector.broadcast %130 : vector<1x128xf32> to vector<2x128xf32>
      %132 = arith.addf %129, %131 : vector<2x128xf32>
      %c0_66 = arith.constant 0 : index
      %c0_67 = arith.constant 0 : index
      %133 = vector.load %arg12[%c0_66, %c0_67] : memref<2x128xf32, #tpu.memory_space<vmem>>, vector<2x128xf32>
      tpu.vector_store %arg12[%c0_66, %c0_67], %132 {strides = array<i32>} : memref<2x128xf32, #tpu.memory_space<vmem>>, vector<2x128xf32>,
    } else {
    }
    return
  }
  func.func @transform_0(%arg0: i32, %arg1: i32) -> (i32, i32, i32) {
    %c0_i32 = arith.constant 0 : i32
    %c0_i32_0 = arith.constant 0 : i32
    return %arg0, %arg1, %c0_i32 : i32, i32, i32
  }
  func.func @transform_1(%arg0: i32, %arg1: i32) -> (i32, i32) {
    %c0_i32 = arith.constant 0 : i32
    %c0_i32_0 = arith.constant 0 : i32
    return %arg0, %c0_i32 : i32, i32
  }
  func.func @transform_2(%arg0: i32, %arg1: i32) -> (i32, i32) {
    %c0_i32 = arith.constant 0 : i32
    return %arg0, %arg1 : i32, i32
  }
  func.func @transform_3(%arg0: i32, %arg1: i32) -> (i32, i32) {
    %c0_i32 = arith.constant 0 : i32
    %c0_i32_0 = arith.constant 0 : i32
    %c0_i32_1 = arith.constant 0 : i32
    return %c0_i32, %c0_i32_0 : i32, i32
  }
  func.func @transform_4(%arg0: i32, %arg1: i32) -> (i32, i32, i32) {
    %c0_i32 = arith.constant 0 : i32
    %c0_i32_0 = arith.constant 0 : i32
    %c0_i32_1 = arith.constant 0 : i32
    %c0_i32_2 = arith.constant 0 : i32
    return %c0_i32, %c0_i32_0, %c0_i32_1 : i32, i32, i32
  }
  func.func @transform_5(%arg0: i32, %arg1: i32) -> (i32, i32) {
    %c0_i32 = arith.constant 0 : i32
    %c0_i32_0 = arith.constant 0 : i32
    %c0_i32_1 = arith.constant 0 : i32
    return %c0_i32, %c0_i32_0 : i32, i32
  }
  func.func @transform_6(%arg0: i32, %arg1: i32) -> (i32, i32) {
    %c0_i32 = arith.constant 0 : i32
    %c0_i32_0 = arith.constant 0 : i32
    %c0_i32_1 = arith.constant 0 : i32
    return %c0_i32, %c0_i32_0 : i32, i32
  }
  func.func @transform_7(%arg0: i32, %arg1: i32) -> (i32, i32) {
    %c0_i32 = arith.constant 0 : i32
    %c0_i32_0 = arith.constant 0 : i32
    %c0_i32_1 = arith.constant 0 : i32
    return %c0_i32, %c0_i32_0 : i32, i32
  }
  func.func @transform_8(%arg0: i32, %arg1: i32) -> (i32, i32) {
    %c0_i32 = arith.constant 0 : i32
    %c0_i32_0 = arith.constant 0 : i32
    %c0_i32_1 = arith.constant 0 : i32
    return %c0_i32, %c0_i32_0 : i32, i32
  }
  func.func @transform_9(%arg0: i32, %arg1: i32) -> (i32, i32) {
    %c0_i32 = arith.constant 0 : i32
    %c0_i32_0 = arith.constant 0 : i32
    %c0_i32_1 = arith.constant 0 : i32
    return %c0_i32, %c0_i32_0 : i32, i32
  }
  func.func @transform_10(%arg0: i32, %arg1: i32) -> (i32, i32) {
    %c0_i32 = arith.constant 0 : i32
    %c0_i32_0 = arith.constant 0 : i32
    return %arg0, %c0_i32 : i32, i32
  }
}

</mosaic_0001>

<llo_original>
// kernel: tpu_custom_call.1
$region0: #{tpu_custom_call.1}
  #allocation0 [shape = 'u32[]', space=smem, size = 0x4, offset = 0x4, fixed_abs, tag = 'smem constant byte address 0x4 - core index']
  #allocation1 [shape = 'u32[144,128]{1,0:T(1,128)}', space=vmem, size = 0x12000, scoped, tag = 'internal scratch']
  #allocation2 [shape = 'f32[2,32]{1,0:T(2,128)}', space=vmem, size = 0x400, scoped, tag = 'scratch operand']
  #allocation3 [shape = 'f32[2,4]{1,0:T(2,128)}', space=vmem, size = 0x400, scoped, tag = 'scratch operand']
  #allocation4 [shape = 'f32[2,4]{1,0:T(2,128)}', space=vmem, size = 0x400, scoped, tag = 'scratch operand']
  #allocation5 [shape = 'f32[2,32]{1,0:T(2,128)}', space=vmem, size = 0x400, scoped, tag = 'scratch operand']
  %s0 = inlined_call_operand.hbm [shape: f32[2,8,32], index: 0, kind: input, shape index: {}]
  %s1 = inlined_call_operand.vmem [shape: f32[2,32], index: 1, kind: input, shape index: {}]
  %s2 = inlined_call_operand.hbm [shape: f32[2,8], index: 2, kind: input, shape index: {}]
  %s3 = inlined_call_operand.vmem [shape: f32[32,64], index: 3, kind: input, shape index: {}]
  %s4 = inlined_call_operand.hbm [shape: f32[3,32,32], index: 4, kind: input, shape index: {}]
  %s5 = inlined_call_operand.hbm [shape: f32[9,32], index: 5, kind: input, shape index: {}]
  %s6 = inlined_call_operand.vmem [shape: f32[32,4], index: 6, kind: input, shape index: {}]
  %s7 = inlined_call_operand.vmem [shape: f32[4,32], index: 7, kind: input, shape index: {}]
  %s8 = inlined_call_operand.hbm [shape: f32[32,128], index: 8, kind: input, shape index: {}]
  %s9 = inlined_call_operand.vmem [shape: f32[1,128], index: 9, kind: input, shape index: {}]
  %s10 = inlined_call_operand.hbm [shape: f32[2,128], index: 10, kind: output, shape index: {}]
  %s11 = sld [smem:[#allocation0]]
  $region78: #{tpu_custom_call.1} parent=0
    _
  %s13 = ssub.s32 1, %s11
  %s14 = scalar_select 0, %s13, %s11
  $region1: #{tpu_custom_call.1} parent=0
    #allocation6 [shape = 'u8[8192]{0}', space=vmem, size = 0x2000, scoped, tag = 'input window, operand 0, single buffered']
    #allocation7 [shape = 's32[1]{0}', space=sflag, size = 0x4, scoped, tag = 'scoped memory for tpu_custom_call.1']
    #allocation8 [shape = 's32[1]{0}', space=sflag, size = 0x4, scoped, tag = 'scoped memory for tpu_custom_call.1']
    #allocation9 [shape = 'u8[1024]{0}', space=vmem, size = 0x400, scoped, tag = 'input window, operand 2, single buffered']
    #allocation10 [shape = 's32[1]{0}', space=sflag, size = 0x4, scoped, tag = 'scoped memory for tpu_custom_call.1']
    #allocation11 [shape = 'u8[49152]{0}', space=vmem, size = 0xc000, scoped, tag = 'input window, operand 4, single buffered']
    #allocation12 [shape = 'u8[8192]{0}', space=vmem, size = 0x2000, scoped, tag = 'input window, operand 5, single buffered']
    #allocation13 [shape = 's32[1]{0}', space=sflag, size = 0x4, scoped, tag = 'scoped memory for tpu_custom_call.1']
    #allocation14 [shape = 'u8[16384]{0}', space=vmem, size = 0x4000, scoped, tag = 'input window, operand 8, single buffered']
    #allocation15 [shape = 'u8[1024]{0}', space=vmem, size = 0x400, scoped, tag = 'output window, operand 0, single buffered']
    %15 = vsyncpa [#allocation7], 0
    %16 = vsyncpa [#allocation10], 0
    %17 = vsyncpa [#allocation13], 0
    %18 = vsyncpa [#allocation8], 0
    // Predicated region
    $region2: #{tpu_custom_call.1} parent=1 // pred_check
      _
    $region3: #{tpu_custom_call.1} parent=1 // pred_check_branch
      %20 = sbr.rel (0) target = $region5
    $region4: #{tpu_custom_call.1} parent=1 // pred_region
      %s22 = ssub.s32 256, 256
      %23 = vsyncadd [#allocation7], %s22
      %s24 = sshll.u32 [#allocation6], 4
      %s25 = int_to_ptr.vmem [resolvable:$true] %s24
      %30 = dma.hbm_to_vmem [thread:$0]  %s0, 256, %s25, [#allocation7], 128, 128, 8
    $region5: #{tpu_custom_call.1} parent=1 // pred_fallthru
      _
    // Predicated region
    $region6: #{tpu_custom_call.1} parent=1 // pred_check
      _
    $region7: #{tpu_custom_call.1} parent=1 // pred_check_branch
      %32 = sbr.rel (0) target = $region9
    $region8: #{tpu_custom_call.1} parent=1 // pred_region
      _
    $region9: #{tpu_custom_call.1} parent=1 // pred_fallthru
      _
    // Predicated region
    $region10: #{tpu_custom_call.1} parent=1 // pred_check
      _
    $region11: #{tpu_custom_call.1} parent=1 // pred_check_branch
      %34 = sbr.rel (0) target = $region13
    $region12: #{tpu_custom_call.1} parent=1 // pred_region
      %s36 = ssub.s32 32, 32
      %37 = vsyncadd [#allocation10], %s36
      %s39 = sshll.u32 [#allocation9], 4
      %s40 = int_to_ptr.vmem [resolvable:$true] %s39
      %42 = dma.hbm_to_vmem [thread:$0]  %s2, 32, %s40, [#allocation10]
    $region13: #{tpu_custom_call.1} parent=1 // pred_fallthru
      _
    // Predicated region
    $region14: #{tpu_custom_call.1} parent=1 // pred_check
      _
    $region15: #{tpu_custom_call.1} parent=1 // pred_check_branch
      %44 = sbr.rel (0) target = $region17
    $region16: #{tpu_custom_call.1} parent=1 // pred_region
      _
    $region17: #{tpu_custom_call.1} parent=1 // pred_fallthru
      _
    // Predicated region
    $region18: #{tpu_custom_call.1} parent=1 // pred_check
      _
    $region19: #{tpu_custom_call.1} parent=1 // pred_check_branch
      %46 = sbr.rel (0) target = $region21
    $region20: #{tpu_custom_call.1} parent=1 // pred_region
      %s48 = ssub.s32 1536, 1536
      %49 = vsyncadd [#allocation10], %s48
      %s50 = sshll.u32 [#allocation11], 4
      %s51 = int_to_ptr.vmem [resolvable:$true] %s50
      %56 = dma.hbm_to_vmem [thread:$0]  %s4, 1536, %s51, [#allocation10], 128, 128, 8
    $region21: #{tpu_custom_call.1} parent=1 // pred_fallthru
      _
    // Predicated region
    $region22: #{tpu_custom_call.1} parent=1 // pred_check
      _
    $region23: #{tpu_custom_call.1} parent=1 // pred_check_branch
      %58 = sbr.rel (0) target = $region25
    $region24: #{tpu_custom_call.1} parent=1 // pred_region
      %s60 = ssub.s32 256, 256
      %61 = vsyncadd [#allocation13], %s60
      %s62 = sshll.u32 [#allocation12], 4
      %s63 = int_to_ptr.vmem [resolvable:$true] %s62
      %68 = dma.hbm_to_vmem [thread:$0]  %s5, 256, %s63, [#allocation13], 128, 128, 8
    $region25: #{tpu_custom_call.1} parent=1 // pred_fallthru
      _
    // Predicated region
    $region26: #{tpu_custom_call.1} parent=1 // pred_check
      _
    $region27: #{tpu_custom_call.1} parent=1 // pred_check_branch
      %70 = sbr.rel (0) target = $region29
    $region28: #{tpu_custom_call.1} parent=1 // pred_region
      _
    $region29: #{tpu_custom_call.1} parent=1 // pred_fallthru
      _
    // Predicated region
    $region30: #{tpu_custom_call.1} parent=1 // pred_check
      _
    $region31: #{tpu_custom_call.1} parent=1 // pred_check_branch
      %72 = sbr.rel (0) target = $region33
    $region32: #{tpu_custom_call.1} parent=1 // pred_region
      _
    $region33: #{tpu_custom_call.1} parent=1 // pred_fallthru
      _
    // Predicated region
    $region34: #{tpu_custom_call.1} parent=1 // pred_check
      _
    $region35: #{tpu_custom_call.1} parent=1 // pred_check_branch
      %74 = sbr.rel (0) target = $region37
    $region36: #{tpu_custom_call.1} parent=1 // pred_region
      %s76 = ssub.s32 512, 512
      %77 = vsyncadd [#allocation13], %s76
      %s78 = sshll.u32 [#allocation14], 4
      %s79 = int_to_ptr.vmem [resolvable:$true] %s78
      %84 = dma.hbm_to_vmem [thread:$0]  %s8, 512, %s79, [#allocation13], 128, 128, 8
    $region37: #{tpu_custom_call.1} parent=1 // pred_fallthru
      _
    // Predicated region
    $region38: #{tpu_custom_call.1} parent=1 // pred_check
      _
    $region39: #{tpu_custom_call.1} parent=1 // pred_check_branch
      %86 = sbr.rel (0) target = $region41
    $region40: #{tpu_custom_call.1} parent=1 // pred_region
      _
    $region41: #{tpu_custom_call.1} parent=1 // pred_fallthru
      _
    // Predicated region
    $region42: #{tpu_custom_call.1} parent=1 // pred_check
      _
    $region43: #{tpu_custom_call.1} parent=1 // pred_check_branch
      %88 = sbr.rel (0) target = $region45
    $region44: #{tpu_custom_call.1} parent=1 // pred_region
      %89 = dma.done [#allocation7], 256
    $region45: #{tpu_custom_call.1} parent=1 // pred_fallthru
      _
    // Predicated region
    $region46: #{tpu_custom_call.1} parent=1 // pred_check
      _
    $region47: #{tpu_custom_call.1} parent=1 // pred_check_branch
      %91 = sbr.rel (0) target = $region49
    $region48: #{tpu_custom_call.1} parent=1 // pred_region
      %92 = dma.done [#allocation10], 32
    $region49: #{tpu_custom_call.1} parent=1 // pred_fallthru
      _
    // Predicated region
    $region50: #{tpu_custom_call.1} parent=1 // pred_check
      _
    $region51: #{tpu_custom_call.1} parent=1 // pred_check_branch
      %94 = sbr.rel (0) target = $region53
    $region52: #{tpu_custom_call.1} parent=1 // pred_region
      %95 = dma.done [#allocation10], 1536
    $region53: #{tpu_custom_call.1} parent=1 // pred_fallthru
      _
    // Predicated region
    $region54: #{tpu_custom_call.1} parent=1 // pred_check
      _
    $region55: #{tpu_custom_call.1} parent=1 // pred_check_branch
      %97 = sbr.rel (0) target = $region57
    $region56: #{tpu_custom_call.1} parent=1 // pred_region
      %98 = dma.done [#allocation13], 256
    $region57: #{tpu_custom_call.1} parent=1 // pred_fallthru
      _
    // Predicated region
    $region58: #{tpu_custom_call.1} parent=1 // pred_check
      _
    $region59: #{tpu_custom_call.1} parent=1 // pred_check_branch
      %100 = sbr.rel (0) target = $region61
    $region60: #{tpu_custom_call.1} parent=1 // pred_region
      %101 = dma.done [#allocation13], 512
    $region61: #{tpu_custom_call.1} parent=1 // pred_fallthru
      _
    %v102 = vld [vmem:[#allocation12] sm:$0xff]
    %v103 = vld [vmem:[#allocation12 + $0x8] sm:$0x1]
    %p104 = scmp.eq.s32.totalorder 0, 0
    // Predicated region
    $region62: #{tpu_custom_call.1} parent=1 // pred_check
      %p105 = pneg %p104
    $region63: #{tpu_custom_call.1} parent=1 // pred_check_branch
      %107 = sbr.rel (%p105) target = $region65
    $region64: #{tpu_custom_call.1} parent=1 // pred_region
      %v108 = vld [vmem:[%s1] sm:$0x3]
      %v109 = vld [vmem:[#allocation11] sm:$0xff]
      %v110 = vld [vmem:[#allocation11 + $0x8] sm:$0xff]
      %v111 = vld [vmem:[#allocation11 + $0x10] sm:$0xff]
      %v112 = vld [vmem:[#allocation11 + $0x18] sm:$0xff]
      %v113 = vlaneseq
      %v114 = vshrl.u32 %v113, 7
      %v115 = vsub.s32 0, %v114
      %v116 = vrot.slane %v102, %v115
      %vm117 = vcmask 261120
      %v119 = vsel %vm117, %v108, 0
      %121 = vmatprep.subr.mxu0 0.0
      %122 = vmatpush1.msra.mxu0 0.0
      %123 = vmatprep.subr.mxu0 0.0
      %124 = vmatpush1.msra.mxu0 0.0
      %125 = vmatprep.subr.mxu0 0.0
      %126 = vmatpush1.msra.mxu0 0.0
      %127 = vmatprep.subr.mxu0 0.0
      %128 = vmatpush1.msra.mxu0 0.0
      %129 = vmatprep.subr.mxu0 0.0
      %130 = vmatpush1.msra.mxu0 0.0
      %131 = vmatprep.subr.mxu0 0.0
      %132 = vmatpush1.msra.mxu0 0.0
      %133 = vmatprep.subr.mxu0 0.0
      %134 = vmatpush1.msra.mxu0 0.0
      %135 = vmatprep.subr.mxu0 0.0
      %136 = vmatpush1.msra.mxu0 0.0
      %137 = vmatprep.subr.mxu0 0.0
      %138 = vmatpush1.msra.mxu0 0.0
      %139 = vmatprep.subr.mxu0 0.0
      %140 = vmatpush1.msra.mxu0 0.0
      %141 = vmatprep.subr.mxu0 0.0
      %142 = vmatpush1.msra.mxu0 0.0
      %143 = vmatprep.subr.mxu0 0.0
      %144 = vmatpush1.msra.mxu0 0.0
      %145 = vmatprep.subr.mxu0 0.0
      %146 = vmatpush1.msra.mxu0 %v112
      %147 = vmatprep.subr.mxu0 0.0
      %148 = vmatpush1.msra.mxu0 %v111
      %149 = vmatprep.subr.mxu0 0.0
      %150 = vmatpush1.msra.mxu0 %v110
      %151 = vmatprep.subr.mxu0 0.0
      %152 = vmatpush1.msra.mxu0 %v109
      %153 = vmatprep.subr.mxu0 0.0
      %154 = vmatpush2.msra.mxu0 0.0
      %155 = vmatprep.subr.mxu0 0.0
      %156 = vmatpush2.msra.mxu0 0.0
      %157 = vmatprep.subr.mxu0 0.0
      %158 = vmatpush2.msra.mxu0 0.0
      %159 = vmatprep.subr.mxu0 0.0
      %160 = vmatpush2.msra.mxu0 0.0
      %161 = vmatprep.subr.mxu0 0.0
      %162 = vmatpush2.msra.mxu0 0.0
      %163 = vmatprep.subr.mxu0 0.0
      %164 = vmatpush2.msra.mxu0 0.0
      %165 = vmatprep.subr.mxu0 0.0
      %166 = vmatpush2.msra.mxu0 0.0
      %167 = vmatprep.subr.mxu0 0.0
      %168 = vmatpush2.msra.mxu0 0.0
      %169 = vmatprep.subr.mxu0 0.0
      %170 = vmatpush2.msra.mxu0 0.0
      %171 = vmatprep.subr.mxu0 0.0
      %172 = vmatpush2.msra.mxu0 0.0
      %173 = vmatprep.subr.mxu0 0.0
      %174 = vmatpush2.msra.mxu0 0.0
      %175 = vmatprep.subr.mxu0 0.0
      %176 = vmatpush2.msra.mxu0 0.0
      %177 = vmatprep.subr.mxu0 0.0
      %178 = vmatpush2.msra.mxu0 0.0
      %179 = vmatprep.subr.mxu0 0.0
      %180 = vmatpush2.msra.mxu0 0.0
      %181 = vmatprep.subr.mxu0 0.0
      %182 = vmatpush2.msra.mxu0 0.0
      %183 = vmatprep.subr.mxu0 0.0
      %184 = vmatpush2.msra.mxu0 0.0
      %185 = vmatprep.mubr.f32.mxu0 0.0
      %186 = vmatmul.mubr.f32.gmra.mxu0 %v119
      %v187 = vpop.f32.mrf.mxu0
      %v188 = vadd.f32 %v116, %v187
      %v189 = vpop.f32.mrf.mxu0
      %190 = vdwg.mxu0
      %vm191 = vcmask 254976
      %192 = vst.msk [vmem:[#allocation2] sm:$0x3] %vm191, %v188
      %vm193 = vcmask 25600
      %194 = vst.msk [vmem:[#allocation3] sm:$0x3] %vm193, -1e+30
      %195 = vst.msk [vmem:[#allocation4] sm:$0x3] %vm193, 0.0
      %196 = vst.msk [vmem:[#allocation5] sm:$0x3] %vm191, 0.0
    $region65: #{tpu_custom_call.1} parent=1 // pred_fallthru
      _
    %v197 = vld [vmem:[#allocation6] sm:$0xff]
    %v198 = vld [vmem:[#allocation6 + $0x8] sm:$0xff]
    %v199 = vld [vmem:[%s3] sm:$0xff]
    %v200 = vld [vmem:[%s3 + $0x8] sm:$0xff]
    %v201 = vld [vmem:[%s3 + $0x10] sm:$0xff]
    %v202 = vld [vmem:[%s3 + $0x18] sm:$0xff]
    %vm203 = vcmask 261120
    %v205 = vsel %vm203, %v197, 0
    %v208 = vsel %vm203, %v198, 0
    %210 = vmatprep.subr.mxu0 0.0
    %211 = vmatpush1.msra.mxu0 0.0
    %212 = vmatprep.subr.mxu0 0.0
    %213 = vmatpush1.msra.mxu0 0.0
    %214 = vmatprep.subr.mxu0 0.0
    %215 = vmatpush1.msra.mxu0 0.0
    %216 = vmatprep.subr.mxu0 0.0
    %217 = vmatpush1.msra.mxu0 0.0
    %218 = vmatprep.subr.mxu0 0.0
    %219 = vmatpush1.msra.mxu0 0.0
    %220 = vmatprep.subr.mxu0 0.0
    %221 = vmatpush1.msra.mxu0 0.0
    %222 = vmatprep.subr.mxu0 0.0
    %223 = vmatpush1.msra.mxu0 0.0
    %224 = vmatprep.subr.mxu0 0.0
    %225 = vmatpush1.msra.mxu0 0.0
    %226 = vmatprep.subr.mxu0 0.0
    %227 = vmatpush1.msra.mxu0 0.0
    %228 = vmatprep.subr.mxu0 0.0
    %229 = vmatpush1.msra.mxu0 0.0
    %230 = vmatprep.subr.mxu0 0.0
    %231 = vmatpush1.msra.mxu0 0.0
    %232 = vmatprep.subr.mxu0 0.0
    %233 = vmatpush1.msra.mxu0 0.0
    %234 = vmatprep.subr.mxu0 0.0
    %235 = vmatpush1.msra.mxu0 %v202
    %236 = vmatprep.subr.mxu0 0.0
    %237 = vmatpush1.msra.mxu0 %v201
    %238 = vmatprep.subr.mxu0 0.0
    %239 = vmatpush1.msra.mxu0 %v200
    %240 = vmatprep.subr.mxu0 0.0
    %241 = vmatpush1.msra.mxu0 %v199
    %242 = vmatprep.subr.mxu0 0.0
    %243 = vmatpush2.msra.mxu0 0.0
    %244 = vmatprep.subr.mxu0 0.0
    %245 = vmatpush2.msra.mxu0 0.0
    %246 = vmatprep.subr.mxu0 0.0
    %247 = vmatpush2.msra.mxu0 0.0
    %248 = vmatprep.subr.mxu0 0.0
    %249 = vmatpush2.msra.mxu0 0.0
    %250 = vmatprep.subr.mxu0 0.0
    %251 = vmatpush2.msra.mxu0 0.0
    %252 = vmatprep.subr.mxu0 0.0
    %253 = vmatpush2.msra.mxu0 0.0
    %254 = vmatprep.subr.mxu0 0.0
    %255 = vmatpush2.msra.mxu0 0.0
    %256 = vmatprep.subr.mxu0 0.0
    %257 = vmatpush2.msra.mxu0 0.0
    %258 = vmatprep.subr.mxu0 0.0
    %259 = vmatpush2.msra.mxu0 0.0
    %260 = vmatprep.subr.mxu0 0.0
    %261 = vmatpush2.msra.mxu0 0.0
    %262 = vmatprep.subr.mxu0 0.0
    %263 = vmatpush2.msra.mxu0 0.0
    %264 = vmatprep.subr.mxu0 0.0
    %265 = vmatpush2.msra.mxu0 0.0
    %266 = vmatprep.subr.mxu0 0.0
    %267 = vmatpush2.msra.mxu0 0.0
    %268 = vmatprep.subr.mxu0 0.0
    %269 = vmatpush2.msra.mxu0 0.0
    %270 = vmatprep.subr.mxu0 0.0
    %271 = vmatpush2.msra.mxu0 0.0
    %272 = vmatprep.subr.mxu0 0.0
    %273 = vmatpush2.msra.mxu0 0.0
    %274 = vmatprep.mubr.f32.mxu0 0.0
    %275 = vmatmul.mubr.f32.gmra.mxu0 %v205
    %v276 = vpop.f32.mrf.mxu0
    %v277 = vadd.f32 0.0, %v276
    %v278 = vpop.f32.mrf.mxu0
    %279 = vmatprep.mubr.f32.mxu0 0.0
    %280 = vmatmul.mubr.f32.gmra.mxu0 %v208
    %v281 = vpop.f32.mrf.mxu0
    %v282 = vadd.f32 0.0, %v281
    %v283 = vpop.f32.mrf.mxu0
    %284 = vdwg.mxu0
    %v285 = vlaneseq
    %v286 = vshrl.u32 %v285, 7
    %v287 = vsub.s32 1, %v286
    %v288 = vrot.slane %v102, %v287
    %v289 = vadd.f32 %v277, %v288
    %v290 = vadd.f32 %v282, %v288
    %v291 = vlaneseq
    %v292 = vshrl.u32 %v291, 7
    %v293 = vsub.s32 2, %v292
    %v294 = vrot.slane %v102, %v293
    %296 = vrot.lane.b32.xlu0 %v294, 32
    %v297 = vpop.permute.xlu0 %296
    %v299 = vadd.f32 %v277, %v297
    %v300 = vadd.f32 %v282, %v297
    %v301 = vld [vmem:[#allocation2] sm:$0x3]
    %v304 = vunpack.c.l.s4 1966171168
    %v305 = vunpack.c.0.s8 %v304
    %v306 = vlaneseq
    %v307 = vshrl.u32 %v306, 7
    %v308 = vsub.s32 %v305, %v307
    %v309 = vrot.slane %v301, %v308
    %v310 = vcombine.high %v309, %v309
    %v312 = vunpack.c.l.s4 1966171168
    %v313 = vunpack.c.0.s8 %v312
    %v314 = vlaneseq
    %v315 = vshrl.u32 %v314, 7
    %v316 = vsub.s32 %v313, %v315
    %v317 = vrot.slane %v309, %v316
    %v319 = vunpack.c.l.s4 1966171168
    %v320 = vunpack.c.0.s8 %v319
    %v321 = vlaneseq
    %v322 = vshrl.u32 %v321, 7
    %v323 = vsub.s32 %v320, %v322
    %v324 = vrot.slane %v310, %v323
    %v325 = vlaneseq
    %v326 = vshrl.u32 %v325, 7
    %v327 = vsub.s32 0, %v326
    %v328 = vrot.slane %v317, %v327
    %v329 = vlaneseq
    %v330 = vshrl.u32 %v329, 7
    %v331 = vsub.s32 0, %v330
    %v332 = vrot.slane %v324, %v331
    %v335 = vmul.f32 %v289, %v328
    %v336 = vmul.f32 %v290, %v332
    %v337 = vld [vmem:[%s6] sm:$0xff]
    %v338 = vld [vmem:[%s6 + $0x8] sm:$0xff]
    %v339 = vld [vmem:[%s6 + $0x10] sm:$0xff]
    %v340 = vld [vmem:[%s6 + $0x18] sm:$0xff]
    %v342 = vsel %vm203, %v335, 0
    %v345 = vsel %vm203, %v336, 0
    %347 = vmatprep.subr.mxu0 0.0
    %348 = vmatpush1.msra.mxu0 0.0
    %349 = vmatprep.subr.mxu0 0.0
    %350 = vmatpush1.msra.mxu0 0.0
    %351 = vmatprep.subr.mxu0 0.0
    %352 = vmatpush1.msra.mxu0 0.0
    %353 = vmatprep.subr.mxu0 0.0
    %354 = vmatpush1.msra.mxu0 0.0
    %355 = vmatprep.subr.mxu0 0.0
    %356 = vmatpush1.msra.mxu0 0.0
    %357 = vmatprep.subr.mxu0 0.0
    %358 = vmatpush1.msra.mxu0 0.0
    %359 = vmatprep.subr.mxu0 0.0
    %360 = vmatpush1.msra.mxu0 0.0
    %361 = vmatprep.subr.mxu0 0.0
    %362 = vmatpush1.msra.mxu0 0.0
    %363 = vmatprep.subr.mxu0 0.0
    %364 = vmatpush1.msra.mxu0 0.0
    %365 = vmatprep.subr.mxu0 0.0
    %366 = vmatpush1.msra.mxu0 0.0
    %367 = vmatprep.subr.mxu0 0.0
    %368 = vmatpush1.msra.mxu0 0.0
    %369 = vmatprep.subr.mxu0 0.0
    %370 = vmatpush1.msra.mxu0 0.0
    %371 = vmatprep.subr.mxu0 0.0
    %372 = vmatpush1.msra.mxu0 %v340
    %373 = vmatprep.subr.mxu0 0.0
    %374 = vmatpush1.msra.mxu0 %v339
    %375 = vmatprep.subr.mxu0 0.0
    %376 = vmatpush1.msra.mxu0 %v338
    %377 = vmatprep.subr.mxu0 0.0
    %378 = vmatpush1.msra.mxu0 %v337
    %379 = vmatprep.subr.mxu0 0.0
    %380 = vmatpush2.msra.mxu0 0.0
    %381 = vmatprep.subr.mxu0 0.0
    %382 = vmatpush2.msra.mxu0 0.0
    %383 = vmatprep.subr.mxu0 0.0
    %384 = vmatpush2.msra.mxu0 0.0
    %385 = vmatprep.subr.mxu0 0.0
    %386 = vmatpush2.msra.mxu0 0.0
    %387 = vmatprep.subr.mxu0 0.0
    %388 = vmatpush2.msra.mxu0 0.0
    %389 = vmatprep.subr.mxu0 0.0
    %390 = vmatpush2.msra.mxu0 0.0
    %391 = vmatprep.subr.mxu0 0.0
    %392 = vmatpush2.msra.mxu0 0.0
    %393 = vmatprep.subr.mxu0 0.0
    %394 = vmatpush2.msra.mxu0 0.0
    %395 = vmatprep.subr.mxu0 0.0
    %396 = vmatpush2.msra.mxu0 0.0
    %397 = vmatprep.subr.mxu0 0.0
    %398 = vmatpush2.msra.mxu0 0.0
    %399 = vmatprep.subr.mxu0 0.0
    %400 = vmatpush2.msra.mxu0 0.0
    %401 = vmatprep.subr.mxu0 0.0
    %402 = vmatpush2.msra.mxu0 0.0
    %403 = vmatprep.subr.mxu0 0.0
    %404 = vmatpush2.msra.mxu0 0.0
    %405 = vmatprep.subr.mxu0 0.0
    %406 = vmatpush2.msra.mxu0 0.0
    %407 = vmatprep.subr.mxu0 0.0
    %408 = vmatpush2.msra.mxu0 0.0
    %409 = vmatprep.subr.mxu0 0.0
    %410 = vmatpush2.msra.mxu0 0.0
    %411 = vmatprep.mubr.f32.mxu0 0.0
    %412 = vmatmul.mubr.f32.gmra.mxu0 %v342
    %v413 = vpop.f32.mrf.mxu0
    %v414 = vadd.f32 0.0, %v413
    %v415 = vpop.f32.mrf.mxu0
    %416 = vmatprep.mubr.f32.mxu0 0.0
    %417 = vmatmul.mubr.f32.gmra.mxu0 %v345
    %v418 = vpop.f32.mrf.mxu0
    %v419 = vadd.f32 0.0, %v418
    %v420 = vpop.f32.mrf.mxu0
    %421 = vdwg.mxu0
    %v422 = vld [vmem:[#allocation9] sm:$0x3]
    %v423 = vlaneseq
    %v424 = vshrl.u32 %v423, 7
    %v425 = vsub.s32 0, %v424
    %v426 = vrot.slane %v422, %v425
    %428 = vbcast.lane.b32.xlu0 %v426, 256
    %v429 = vpop.permute.xlu0 %428
    %v430 = vlaneseq
    %v431 = vshrl.u32 %v430, 7
    %v432 = vsub.s32 1, %v431
    %v433 = vrot.slane %v422, %v432
    %435 = vbcast.lane.b32.xlu0 %v433, 256
    %v436 = vpop.permute.xlu0 %435
    %v437 = vadd.f32 %v414, %v429
    %v438 = vadd.f32 %v419, %v436
    %v439 = vld [vmem:[#allocation3] sm:$0x3]
    %vm440 = vcmask 31744
    %v441 = vsel %vm440, %v437, -inf
    %v442 = vrot.slane %v441, 4
    %v443 = vmax.f32 %v441, %v442
    %v444 = vrot.slane %v443, 2
    %v445 = vmax.f32 %v443, %v444
    %v446 = vrot.slane %v445, 1
    %v447 = vmax.f32 %v445, %v446
    %v448 = vsel %vm440, %v438, -inf
    %v449 = vrot.slane %v448, 4
    %v450 = vmax.f32 %v448, %v449
    %v451 = vrot.slane %v450, 2
    %v452 = vmax.f32 %v450, %v451
    %v453 = vrot.slane %v452, 1
    %v454 = vmax.f32 %v452, %v453
    %vm457 = vcmask 1041409
    %v458 = vsel %vm457, %v454, %v447
    %v460 = vmax.f32 %v439, %v458
    %v461 = vsub.f32 %v439, %v460
    %v462 = vmul.f32 %v461, 1.442695
    %v463 = vpow.pop %v462
    %v466 = vunpack.c.l.s4 1966171168
    %v467 = vunpack.c.0.s8 %v466
    %v468 = vlaneseq
    %v469 = vshrl.u32 %v468, 7
    %v470 = vsub.s32 %v467, %v469
    %v471 = vrot.slane %v460, %v470
    %v472 = vcombine.high %v471, %v471
    %v474 = vunpack.c.l.s4 1966171168
    %v475 = vunpack.c.0.s8 %v474
    %v476 = vlaneseq
    %v477 = vshrl.u32 %v476, 7
    %v478 = vsub.s32 %v475, %v477
    %v479 = vrot.slane %v471, %v478
    %v481 = vunpack.c.l.s4 1966171168
    %v482 = vunpack.c.0.s8 %v481
    %v483 = vlaneseq
    %v484 = vshrl.u32 %v483, 7
    %v485 = vsub.s32 %v482, %v484
    %v486 = vrot.slane %v472, %v485
    %v487 = vlaneseq
    %v488 = vshrl.u32 %v487, 7
    %v489 = vsub.s32 0, %v488
    %v490 = vrot.slane %v479, %v489
    %v491 = vlaneseq
    %v492 = vshrl.u32 %v491, 7
    %v493 = vsub.s32 0, %v492
    %v494 = vrot.slane %v486, %v493
    %v497 = vsub.f32 %v437, %v490
    %v498 = vsub.f32 %v438, %v494
    %v499 = vmul.f32 %v497, 1.442695
    %v500 = vpow.pop %v499
    %v501 = vmul.f32 %v498, 1.442695
    %v502 = vpow.pop %v501
    %v503 = vld [vmem:[#allocation4] sm:$0x3]
    %v504 = vmul.f32 %v463, %v503
    %v505 = vsel %vm440, %v500, 0.0
    %v506 = vrot.slane %v505, 4
    %v507 = vadd.f32 %v505, %v506
    %v508 = vrot.slane %v507, 2
    %v509 = vadd.f32 %v507, %v508
    %v510 = vrot.slane %v509, 1
    %v511 = vadd.f32 %v509, %v510
    %v512 = vsel %vm440, %v502, 0.0
    %v513 = vrot.slane %v512, 4
    %v514 = vadd.f32 %v512, %v513
    %v515 = vrot.slane %v514, 2
    %v516 = vadd.f32 %v514, %v515
    %v517 = vrot.slane %v516, 1
    %v518 = vadd.f32 %v516, %v517
    %v521 = vsel %vm457, %v518, %v511
    %v523 = vadd.f32 %v504, %v521
    %vm524 = vcmask 25600
    %525 = vst.msk [vmem:[#allocation4] sm:$0x3] %vm524, %v523
    %526 = vst.msk [vmem:[#allocation3] sm:$0x3] %vm524, %v460
    %v527 = vld [vmem:[%s7] sm:$0xf]
    %v529 = vsel %vm440, %v500, 0
    %v532 = vsel %vm440, %v502, 0
    %vm534 = vcmask 1043456
    %v536 = vsel %vm534, %v527, 0
    %538 = vmatprep.subr.mxu0 0.0
    %539 = vmatpush1.msra.mxu0 0.0
    %540 = vmatprep.subr.mxu0 0.0
    %541 = vmatpush1.msra.mxu0 0.0
    %542 = vmatprep.subr.mxu0 0.0
    %543 = vmatpush1.msra.mxu0 0.0
    %544 = vmatprep.subr.mxu0 0.0
    %545 = vmatpush1.msra.mxu0 0.0
    %546 = vmatprep.subr.mxu0 0.0
    %547 = vmatpush1.msra.mxu0 0.0
    %548 = vmatprep.subr.mxu0 0.0
    %549 = vmatpush1.msra.mxu0 0.0
    %550 = vmatprep.subr.mxu0 0.0
    %551 = vmatpush1.msra.mxu0 0.0
    %552 = vmatprep.subr.mxu0 0.0
    %553 = vmatpush1.msra.mxu0 0.0
    %554 = vmatprep.subr.mxu0 0.0
    %555 = vmatpush1.msra.mxu0 0.0
    %556 = vmatprep.subr.mxu0 0.0
    %557 = vmatpush1.msra.mxu0 0.0
    %558 = vmatprep.subr.mxu0 0.0
    %559 = vmatpush1.msra.mxu0 0.0
    %560 = vmatprep.subr.mxu0 0.0
    %561 = vmatpush1.msra.mxu0 0.0
    %562 = vmatprep.subr.mxu0 0.0
    %563 = vmatpush1.msra.mxu0 0.0
    %564 = vmatprep.subr.mxu0 0.0
    %565 = vmatpush1.msra.mxu0 0.0
    %566 = vmatprep.subr.mxu0 0.0
    %567 = vmatpush1.msra.mxu0 0.0
    %568 = vmatprep.subr.mxu0 0.0
    %569 = vmatpush1.msra.mxu0 %v536
    %570 = vmatprep.subr.mxu0 0.0
    %571 = vmatpush2.msra.mxu0 0.0
    %572 = vmatprep.subr.mxu0 0.0
    %573 = vmatpush2.msra.mxu0 0.0
    %574 = vmatprep.subr.mxu0 0.0
    %575 = vmatpush2.msra.mxu0 0.0
    %576 = vmatprep.subr.mxu0 0.0
    %577 = vmatpush2.msra.mxu0 0.0
    %578 = vmatprep.subr.mxu0 0.0
    %579 = vmatpush2.msra.mxu0 0.0
    %580 = vmatprep.subr.mxu0 0.0
    %581 = vmatpush2.msra.mxu0 0.0
    %582 = vmatprep.subr.mxu0 0.0
    %583 = vmatpush2.msra.mxu0 0.0
    %584 = vmatprep.subr.mxu0 0.0
    %585 = vmatpush2.msra.mxu0 0.0
    %586 = vmatprep.subr.mxu0 0.0
    %587 = vmatpush2.msra.mxu0 0.0
    %588 = vmatprep.subr.mxu0 0.0
    %589 = vmatpush2.msra.mxu0 0.0
    %590 = vmatprep.subr.mxu0 0.0
    %591 = vmatpush2.msra.mxu0 0.0
    %592 = vmatprep.subr.mxu0 0.0
    %593 = vmatpush2.msra.mxu0 0.0
    %594 = vmatprep.subr.mxu0 0.0
    %595 = vmatpush2.msra.mxu0 0.0
    %596 = vmatprep.subr.mxu0 0.0
    %597 = vmatpush2.msra.mxu0 0.0
    %598 = vmatprep.subr.mxu0 0.0
    %599 = vmatpush2.msra.mxu0 0.0
    %600 = vmatprep.subr.mxu0 0.0
    %601 = vmatpush2.msra.mxu0 0.0
    %602 = vmatprep.mubr.f32.mxu0 0.0
    %603 = vmatmul.mubr.f32.gmra.mxu0 %v529
    %v604 = vpop.f32.mrf.mxu0
    %v605 = vadd.f32 0.0, %v604
    %v606 = vpop.f32.mrf.mxu0
    %607 = vmatprep.mubr.f32.mxu0 0.0
    %608 = vmatmul.mubr.f32.gmra.mxu0 %v532
    %v609 = vpop.f32.mrf.mxu0
    %v610 = vadd.f32 0.0, %v609
    %v611 = vpop.f32.mrf.mxu0
    %612 = vdwg.mxu0
    %v614 = vsel %vm440, %v463, 0
    %616 = vmatprep.subr.mxu0 0.0
    %617 = vmatpush1.msra.mxu0 0.0
    %618 = vmatprep.subr.mxu0 0.0
    %619 = vmatpush1.msra.mxu0 0.0
    %620 = vmatprep.subr.mxu0 0.0
    %621 = vmatpush1.msra.mxu0 0.0
    %622 = vmatprep.subr.mxu0 0.0
    %623 = vmatpush1.msra.mxu0 0.0
    %624 = vmatprep.subr.mxu0 0.0
    %625 = vmatpush1.msra.mxu0 0.0
    %626 = vmatprep.subr.mxu0 0.0
    %627 = vmatpush1.msra.mxu0 0.0
    %628 = vmatprep.subr.mxu0 0.0
    %629 = vmatpush1.msra.mxu0 0.0
    %630 = vmatprep.subr.mxu0 0.0
    %631 = vmatpush1.msra.mxu0 0.0
    %632 = vmatprep.subr.mxu0 0.0
    %633 = vmatpush1.msra.mxu0 0.0
    %634 = vmatprep.subr.mxu0 0.0
    %635 = vmatpush1.msra.mxu0 0.0
    %636 = vmatprep.subr.mxu0 0.0
    %637 = vmatpush1.msra.mxu0 0.0
    %638 = vmatprep.subr.mxu0 0.0
    %639 = vmatpush1.msra.mxu0 0.0
    %640 = vmatprep.subr.mxu0 0.0
    %641 = vmatpush1.msra.mxu0 0.0
    %642 = vmatprep.subr.mxu0 0.0
    %643 = vmatpush1.msra.mxu0 0.0
    %644 = vmatprep.subr.mxu0 0.0
    %645 = vmatpush1.msra.mxu0 0.0
    %646 = vmatprep.subr.mxu0 0.0
    %647 = vmatpush1.msra.mxu0 %v536
    %648 = vmatprep.subr.mxu0 0.0
    %649 = vmatpush2.msra.mxu0 0.0
    %650 = vmatprep.subr.mxu0 0.0
    %651 = vmatpush2.msra.mxu0 0.0
    %652 = vmatprep.subr.mxu0 0.0
    %653 = vmatpush2.msra.mxu0 0.0
    %654 = vmatprep.subr.mxu0 0.0
    %655 = vmatpush2.msra.mxu0 0.0
    %656 = vmatprep.subr.mxu0 0.0
    %657 = vmatpush2.msra.mxu0 0.0
    %658 = vmatprep.subr.mxu0 0.0
    %659 = vmatpush2.msra.mxu0 0.0
    %660 = vmatprep.subr.mxu0 0.0
    %661 = vmatpush2.msra.mxu0 0.0
    %662 = vmatprep.subr.mxu0 0.0
    %663 = vmatpush2.msra.mxu0 0.0
    %664 = vmatprep.subr.mxu0 0.0
    %665 = vmatpush2.msra.mxu0 0.0
    %666 = vmatprep.subr.mxu0 0.0
    %667 = vmatpush2.msra.mxu0 0.0
    %668 = vmatprep.subr.mxu0 0.0
    %669 = vmatpush2.msra.mxu0 0.0
    %670 = vmatprep.subr.mxu0 0.0
    %671 = vmatpush2.msra.mxu0 0.0
    %672 = vmatprep.subr.mxu0 0.0
    %673 = vmatpush2.msra.mxu0 0.0
    %674 = vmatprep.subr.mxu0 0.0
    %675 = vmatpush2.msra.mxu0 0.0
    %676 = vmatprep.subr.mxu0 0.0
    %677 = vmatpush2.msra.mxu0 0.0
    %678 = vmatprep.subr.mxu0 0.0
    %679 = vmatpush2.msra.mxu0 0.0
    %680 = vmatprep.mubr.f32.mxu0 0.0
    %681 = vmatmul.mubr.f32.gmra.mxu0 %v614
    %v682 = vpop.f32.mrf.mxu0
    %v683 = vadd.f32 0.0, %v682
    %v684 = vpop.f32.mrf.mxu0
    %685 = vdwg.mxu0
    %688 = vrot.lane.b32.xlu0 %v299, 96
    %v689 = vpop.permute.xlu0 %688
    %690 = vrot.lane.b32.xlu0 %v300, 96
    %v691 = vpop.permute.xlu0 %690
    %v694 = vmul.f32 %v605, %v689
    %v695 = vmul.f32 %v610, %v691
    %v696 = vsel %vm203, %v694, 0.0
    %v697 = vrot.slane %v696, 4
    %v698 = vadd.f32 %v696, %v697
    %v699 = vrot.slane %v698, 2
    %v700 = vadd.f32 %v698, %v699
    %v701 = vrot.slane %v700, 1
    %v702 = vadd.f32 %v700, %v701
    %v703 = vsel %vm203, %v695, 0.0
    %v704 = vrot.slane %v703, 4
    %v705 = vadd.f32 %v703, %v704
    %v706 = vrot.slane %v705, 2
    %v707 = vadd.f32 %v705, %v706
    %v708 = vrot.slane %v707, 1
    %v709 = vadd.f32 %v707, %v708
    %v710 = vld [vmem:[#allocation5] sm:$0x3]
    %v711 = vmul.f32 %v683, %v710
    %v714 = vsel %vm457, %v709, %v702
    %v716 = vadd.f32 %v711, %v714
    %vm717 = vcmask 254976
    %718 = vst.msk [vmem:[#allocation5] sm:$0x3] %vm717, %v716
    // Predicated region
    $region66: #{tpu_custom_call.1} parent=1 // pred_check
      %p719 = pneg %p104
    $region67: #{tpu_custom_call.1} parent=1 // pred_check_branch
      %721 = sbr.rel (%p719) target = $region69
    $region68: #{tpu_custom_call.1} parent=1 // pred_region
      %v722 = vld [vmem:[#allocation4] sm:$0x3]
      %v723 = vrcp.pop %v722
      %v724 = vld [vmem:[#allocation5] sm:$0x3]
      %v725 = vld [vmem:[%s7] sm:$0xf]
      %v727 = vsel %vm440, %v723, 0
      %v730 = vsel %vm534, %v725, 0
      %732 = vmatprep.subr.mxu0 0.0
      %733 = vmatpush1.msra.mxu0 0.0
      %734 = vmatprep.subr.mxu0 0.0
      %735 = vmatpush1.msra.mxu0 0.0
      %736 = vmatprep.subr.mxu0 0.0
      %737 = vmatpush1.msra.mxu0 0.0
      %738 = vmatprep.subr.mxu0 0.0
      %739 = vmatpush1.msra.mxu0 0.0
      %740 = vmatprep.subr.mxu0 0.0
      %741 = vmatpush1.msra.mxu0 0.0
      %742 = vmatprep.subr.mxu0 0.0
      %743 = vmatpush1.msra.mxu0 0.0
      %744 = vmatprep.subr.mxu0 0.0
      %745 = vmatpush1.msra.mxu0 0.0
      %746 = vmatprep.subr.mxu0 0.0
      %747 = vmatpush1.msra.mxu0 0.0
      %748 = vmatprep.subr.mxu0 0.0
      %749 = vmatpush1.msra.mxu0 0.0
      %750 = vmatprep.subr.mxu0 0.0
      %751 = vmatpush1.msra.mxu0 0.0
      %752 = vmatprep.subr.mxu0 0.0
      %753 = vmatpush1.msra.mxu0 0.0
      %754 = vmatprep.subr.mxu0 0.0
      %755 = vmatpush1.msra.mxu0 0.0
      %756 = vmatprep.subr.mxu0 0.0
      %757 = vmatpush1.msra.mxu0 0.0
      %758 = vmatprep.subr.mxu0 0.0
      %759 = vmatpush1.msra.mxu0 0.0
      %760 = vmatprep.subr.mxu0 0.0
      %761 = vmatpush1.msra.mxu0 0.0
      %762 = vmatprep.subr.mxu0 0.0
      %763 = vmatpush1.msra.mxu0 %v730
      %764 = vmatprep.subr.mxu0 0.0
      %765 = vmatpush2.msra.mxu0 0.0
      %766 = vmatprep.subr.mxu0 0.0
      %767 = vmatpush2.msra.mxu0 0.0
      %768 = vmatprep.subr.mxu0 0.0
      %769 = vmatpush2.msra.mxu0 0.0
      %770 = vmatprep.subr.mxu0 0.0
      %771 = vmatpush2.msra.mxu0 0.0
      %772 = vmatprep.subr.mxu0 0.0
      %773 = vmatpush2.msra.mxu0 0.0
      %774 = vmatprep.subr.mxu0 0.0
      %775 = vmatpush2.msra.mxu0 0.0
      %776 = vmatprep.subr.mxu0 0.0
      %777 = vmatpush2.msra.mxu0 0.0
      %778 = vmatprep.subr.mxu0 0.0
      %779 = vmatpush2.msra.mxu0 0.0
      %780 = vmatprep.subr.mxu0 0.0
      %781 = vmatpush2.msra.mxu0 0.0
      %782 = vmatprep.subr.mxu0 0.0
      %783 = vmatpush2.msra.mxu0 0.0
      %784 = vmatprep.subr.mxu0 0.0
      %785 = vmatpush2.msra.mxu0 0.0
      %786 = vmatprep.subr.mxu0 0.0
      %787 = vmatpush2.msra.mxu0 0.0
      %788 = vmatprep.subr.mxu0 0.0
      %789 = vmatpush2.msra.mxu0 0.0
      %790 = vmatprep.subr.mxu0 0.0
      %791 = vmatpush2.msra.mxu0 0.0
      %792 = vmatprep.subr.mxu0 0.0
      %793 = vmatpush2.msra.mxu0 0.0
      %794 = vmatprep.subr.mxu0 0.0
      %795 = vmatpush2.msra.mxu0 0.0
      %796 = vmatprep.mubr.f32.mxu0 0.0
      %797 = vmatmul.mubr.f32.gmra.mxu0 %v727
      %v798 = vpop.f32.mrf.mxu0
      %v799 = vadd.f32 0.0, %v798
      %v800 = vpop.f32.mrf.mxu0
      %801 = vdwg.mxu0
      %v802 = vmul.f32 %v724, %v799
      %s803 = scalar_lea.vmem [#allocation11], 32
      %v804 = vld [vmem:[%s803] sm:$0xff]
      %v805 = vld [vmem:[%s803 + $0x8] sm:$0xff]
      %v806 = vld [vmem:[%s803 + $0x10] sm:$0xff]
      %v807 = vld [vmem:[%s803 + $0x18] sm:$0xff]
      %v808 = vlaneseq
      %v809 = vshrl.u32 %v808, 7
      %v810 = vsub.s32 3, %v809
      %v811 = vrot.slane %v102, %v810
      %v813 = vsel %vm203, %v802, 0
      %815 = vmatprep.subr.mxu0 0.0
      %816 = vmatpush1.msra.mxu0 0.0
      %817 = vmatprep.subr.mxu0 0.0
      %818 = vmatpush1.msra.mxu0 0.0
      %819 = vmatprep.subr.mxu0 0.0
      %820 = vmatpush1.msra.mxu0 0.0
      %821 = vmatprep.subr.mxu0 0.0
      %822 = vmatpush1.msra.mxu0 0.0
      %823 = vmatprep.subr.mxu0 0.0
      %824 = vmatpush1.msra.mxu0 0.0
      %825 = vmatprep.subr.mxu0 0.0
      %826 = vmatpush1.msra.mxu0 0.0
      %827 = vmatprep.subr.mxu0 0.0
      %828 = vmatpush1.msra.mxu0 0.0
      %829 = vmatprep.subr.mxu0 0.0
      %830 = vmatpush1.msra.mxu0 0.0
      %831 = vmatprep.subr.mxu0 0.0
      %832 = vmatpush1.msra.mxu0 0.0
      %833 = vmatprep.subr.mxu0 0.0
      %834 = vmatpush1.msra.mxu0 0.0
      %835 = vmatprep.subr.mxu0 0.0
      %836 = vmatpush1.msra.mxu0 0.0
      %837 = vmatprep.subr.mxu0 0.0
      %838 = vmatpush1.msra.mxu0 0.0
      %839 = vmatprep.subr.mxu0 0.0
      %840 = vmatpush1.msra.mxu0 %v807
      %841 = vmatprep.subr.mxu0 0.0
      %842 = vmatpush1.msra.mxu0 %v806
      %843 = vmatprep.subr.mxu0 0.0
      %844 = vmatpush1.msra.mxu0 %v805
      %845 = vmatprep.subr.mxu0 0.0
      %846 = vmatpush1.msra.mxu0 %v804
      %847 = vmatprep.subr.mxu0 0.0
      %848 = vmatpush2.msra.mxu0 0.0
      %849 = vmatprep.subr.mxu0 0.0
      %850 = vmatpush2.msra.mxu0 0.0
      %851 = vmatprep.subr.mxu0 0.0
      %852 = vmatpush2.msra.mxu0 0.0
      %853 = vmatprep.subr.mxu0 0.0
      %854 = vmatpush2.msra.mxu0 0.0
      %855 = vmatprep.subr.mxu0 0.0
      %856 = vmatpush2.msra.mxu0 0.0
      %857 = vmatprep.subr.mxu0 0.0
      %858 = vmatpush2.msra.mxu0 0.0
      %859 = vmatprep.subr.mxu0 0.0
      %860 = vmatpush2.msra.mxu0 0.0
      %861 = vmatprep.subr.mxu0 0.0
      %862 = vmatpush2.msra.mxu0 0.0
      %863 = vmatprep.subr.mxu0 0.0
      %864 = vmatpush2.msra.mxu0 0.0
      %865 = vmatprep.subr.mxu0 0.0
      %866 = vmatpush2.msra.mxu0 0.0
      %867 = vmatprep.subr.mxu0 0.0
      %868 = vmatpush2.msra.mxu0 0.0
      %869 = vmatprep.subr.mxu0 0.0
      %870 = vmatpush2.msra.mxu0 0.0
      %871 = vmatprep.subr.mxu0 0.0
      %872 = vmatpush2.msra.mxu0 0.0
      %873 = vmatprep.subr.mxu0 0.0
      %874 = vmatpush2.msra.mxu0 0.0
      %875 = vmatprep.subr.mxu0 0.0
      %876 = vmatpush2.msra.mxu0 0.0
      %877 = vmatprep.subr.mxu0 0.0
      %878 = vmatpush2.msra.mxu0 0.0
      %879 = vmatprep.mubr.f32.mxu0 0.0
      %880 = vmatmul.mubr.f32.gmra.mxu0 %v813
      %v881 = vpop.f32.mrf.mxu0
      %v882 = vadd.f32 %v811, %v881
      %v883 = vpop.f32.mrf.mxu0
      %884 = vdwg.mxu0
      %v885 = vsel %vm717, %v882, 0.0
      %886 = vadd.xlane.f32.xlu0 %v885
      %v887 = vpop.xlane.xlu0 %886
      %v888 = vrcp.pop 32.0
      %v889 = vmul.f32 %v887, %v888
      %v890 = vsub.f32 %v882, %v889
      %v891 = vmul.f32 %v890, %v890
      %v892 = vsel %vm717, %v891, 0.0
      %893 = vadd.xlane.f32.xlu0 %v892
      %v894 = vpop.xlane.xlu0 %893
      %v895 = vmul.f32 %v894, %v888
      %v896 = vadd.f32 %v895, 1e-05
      %v897 = vrsqrt.pop %v896
      %v898 = vmul.f32 %v890, %v897
      %v899 = vlaneseq
      %v900 = vshrl.u32 %v899, 7
      %v901 = vsub.s32 4, %v900
      %v902 = vrot.slane %v102, %v901
      %v903 = vmul.f32 %v898, %v902
      %v904 = vlaneseq
      %v905 = vshrl.u32 %v904, 7
      %v906 = vsub.s32 5, %v905
      %v907 = vrot.slane %v102, %v906
      %v908 = vadd.f32 %v903, %v907
      %s909 = scalar_lea.vmem [#allocation11], 64
      %v910 = vld [vmem:[%s909] sm:$0xff]
      %v911 = vld [vmem:[%s909 + $0x8] sm:$0xff]
      %v912 = vld [vmem:[%s909 + $0x10] sm:$0xff]
      %v913 = vld [vmem:[%s909 + $0x18] sm:$0xff]
      %v914 = vlaneseq
      %v915 = vshrl.u32 %v914, 7
      %v916 = vsub.s32 6, %v915
      %v917 = vrot.slane %v102, %v916
      %v919 = vsel %vm203, %v908, 0
      %921 = vmatprep.subr.mxu0 0.0
      %922 = vmatpush1.msra.mxu0 0.0
      %923 = vmatprep.subr.mxu0 0.0
      %924 = vmatpush1.msra.mxu0 0.0
      %925 = vmatprep.subr.mxu0 0.0
      %926 = vmatpush1.msra.mxu0 0.0
      %927 = vmatprep.subr.mxu0 0.0
      %928 = vmatpush1.msra.mxu0 0.0
      %929 = vmatprep.subr.mxu0 0.0
      %930 = vmatpush1.msra.mxu0 0.0
      %931 = vmatprep.subr.mxu0 0.0
      %932 = vmatpush1.msra.mxu0 0.0
      %933 = vmatprep.subr.mxu0 0.0
      %934 = vmatpush1.msra.mxu0 0.0
      %935 = vmatprep.subr.mxu0 0.0
      %936 = vmatpush1.msra.mxu0 0.0
      %937 = vmatprep.subr.mxu0 0.0
      %938 = vmatpush1.msra.mxu0 0.0
      %939 = vmatprep.subr.mxu0 0.0
      %940 = vmatpush1.msra.mxu0 0.0
      %941 = vmatprep.subr.mxu0 0.0
      %942 = vmatpush1.msra.mxu0 0.0
      %943 = vmatprep.subr.mxu0 0.0
      %944 = vmatpush1.msra.mxu0 0.0
      %945 = vmatprep.subr.mxu0 0.0
      %946 = vmatpush1.msra.mxu0 %v913
      %947 = vmatprep.subr.mxu0 0.0
      %948 = vmatpush1.msra.mxu0 %v912
      %949 = vmatprep.subr.mxu0 0.0
      %950 = vmatpush1.msra.mxu0 %v911
      %951 = vmatprep.subr.mxu0 0.0
      %952 = vmatpush1.msra.mxu0 %v910
      %953 = vmatprep.subr.mxu0 0.0
      %954 = vmatpush2.msra.mxu0 0.0
      %955 = vmatprep.subr.mxu0 0.0
      %956 = vmatpush2.msra.mxu0 0.0
      %957 = vmatprep.subr.mxu0 0.0
      %958 = vmatpush2.msra.mxu0 0.0
      %959 = vmatprep.subr.mxu0 0.0
      %960 = vmatpush2.msra.mxu0 0.0
      %961 = vmatprep.subr.mxu0 0.0
      %962 = vmatpush2.msra.mxu0 0.0
      %963 = vmatprep.subr.mxu0 0.0
      %964 = vmatpush2.msra.mxu0 0.0
      %965 = vmatprep.subr.mxu0 0.0
      %966 = vmatpush2.msra.mxu0 0.0
      %967 = vmatprep.subr.mxu0 0.0
      %968 = vmatpush2.msra.mxu0 0.0
      %969 = vmatprep.subr.mxu0 0.0
      %970 = vmatpush2.msra.mxu0 0.0
      %971 = vmatprep.subr.mxu0 0.0
      %972 = vmatpush2.msra.mxu0 0.0
      %973 = vmatprep.subr.mxu0 0.0
      %974 = vmatpush2.msra.mxu0 0.0
      %975 = vmatprep.subr.mxu0 0.0
      %976 = vmatpush2.msra.mxu0 0.0
      %977 = vmatprep.subr.mxu0 0.0
      %978 = vmatpush2.msra.mxu0 0.0
      %979 = vmatprep.subr.mxu0 0.0
      %980 = vmatpush2.msra.mxu0 0.0
      %981 = vmatprep.subr.mxu0 0.0
      %982 = vmatpush2.msra.mxu0 0.0
      %983 = vmatprep.subr.mxu0 0.0
      %984 = vmatpush2.msra.mxu0 0.0
      %985 = vmatprep.mubr.f32.mxu0 0.0
      %986 = vmatmul.mubr.f32.gmra.mxu0 %v919
      %v987 = vpop.f32.mrf.mxu0
      %v988 = vadd.f32 %v917, %v987
      %v989 = vpop.f32.mrf.mxu0
      %990 = vdwg.mxu0
      %v991 = vmax.f32 %v988, 0.0
      %v992 = vsel %vm717, %v991, 0.0
      %993 = vadd.xlane.f32.xlu0 %v992
      %v994 = vpop.xlane.xlu0 %993
      %v995 = vmul.f32 %v994, %v888
      %v996 = vsub.f32 %v991, %v995
      %v997 = vmul.f32 %v996, %v996
      %v998 = vsel %vm717, %v997, 0.0
      %999 = vadd.xlane.f32.xlu0 %v998
      %v1000 = vpop.xlane.xlu0 %999
      %v1001 = vmul.f32 %v1000, %v888
      %v1002 = vadd.f32 %v1001, 1e-05
      %v1003 = vrsqrt.pop %v1002
      %v1004 = vmul.f32 %v996, %v1003
      %v1005 = vlaneseq
      %v1006 = vshrl.u32 %v1005, 7
      %v1007 = vsub.s32 7, %v1006
      %v1008 = vrot.slane %v102, %v1007
      %v1009 = vmul.f32 %v1004, %v1008
      %v1010 = vlaneseq
      %v1011 = vshrl.u32 %v1010, 7
      %v1012 = vsub.s32 0, %v1011
      %v1013 = vrot.slane %v103, %v1012
      %v1014 = vadd.f32 %v1009, %v1013
      %v1015 = vld [vmem:[#allocation14] sm:$0xff]
      %v1016 = vld [vmem:[#allocation14 + $0x8] sm:$0xff]
      %v1017 = vld [vmem:[#allocation14 + $0x10] sm:$0xff]
      %v1018 = vld [vmem:[#allocation14 + $0x18] sm:$0xff]
      %v1019 = vld [vmem:[%s9] sm:$0x1]
      %v1021 = vlaneseq
      %v1022 = vshrl.u32 %v1021, 7
      %v1023 = vsub.s32 0, %v1022
      %v1024 = vrot.slane %v1019, %v1023
      %v1027 = vsel %vm203, %v1014, 0
      %1029 = vmatprep.subr.mxu0 0.0
      %1030 = vmatpush1.msra.mxu0 0.0
      %1031 = vmatprep.subr.mxu0 0.0
      %1032 = vmatpush1.msra.mxu0 0.0
      %1033 = vmatprep.subr.mxu0 0.0
      %1034 = vmatpush1.msra.mxu0 0.0
      %1035 = vmatprep.subr.mxu0 0.0
      %1036 = vmatpush1.msra.mxu0 0.0
      %1037 = vmatprep.subr.mxu0 0.0
      %1038 = vmatpush1.msra.mxu0 0.0
      %1039 = vmatprep.subr.mxu0 0.0
      %1040 = vmatpush1.msra.mxu0 0.0
      %1041 = vmatprep.subr.mxu0 0.0
      %1042 = vmatpush1.msra.mxu0 0.0
      %1043 = vmatprep.subr.mxu0 0.0
      %1044 = vmatpush1.msra.mxu0 0.0
      %1045 = vmatprep.subr.mxu0 0.0
      %1046 = vmatpush1.msra.mxu0 0.0
      %1047 = vmatprep.subr.mxu0 0.0
      %1048 = vmatpush1.msra.mxu0 0.0
      %1049 = vmatprep.subr.mxu0 0.0
      %1050 = vmatpush1.msra.mxu0 0.0
      %1051 = vmatprep.subr.mxu0 0.0
      %1052 = vmatpush1.msra.mxu0 0.0
      %1053 = vmatprep.subr.mxu0 0.0
      %1054 = vmatpush1.msra.mxu0 %v1018
      %1055 = vmatprep.subr.mxu0 0.0
      %1056 = vmatpush1.msra.mxu0 %v1017
      %1057 = vmatprep.subr.mxu0 0.0
      %1058 = vmatpush1.msra.mxu0 %v1016
      %1059 = vmatprep.subr.mxu0 0.0
      %1060 = vmatpush1.msra.mxu0 %v1015
      %1061 = vmatprep.subr.mxu0 0.0
      %1062 = vmatpush2.msra.mxu0 0.0
      %1063 = vmatprep.subr.mxu0 0.0
      %1064 = vmatpush2.msra.mxu0 0.0
      %1065 = vmatprep.subr.mxu0 0.0
      %1066 = vmatpush2.msra.mxu0 0.0
      %1067 = vmatprep.subr.mxu0 0.0
      %1068 = vmatpush2.msra.mxu0 0.0
      %1069 = vmatprep.subr.mxu0 0.0
      %1070 = vmatpush2.msra.mxu0 0.0
      %1071 = vmatprep.subr.mxu0 0.0
      %1072 = vmatpush2.msra.mxu0 0.0
      %1073 = vmatprep.subr.mxu0 0.0
      %1074 = vmatpush2.msra.mxu0 0.0
      %1075 = vmatprep.subr.mxu0 0.0
      %1076 = vmatpush2.msra.mxu0 0.0
      %1077 = vmatprep.subr.mxu0 0.0
      %1078 = vmatpush2.msra.mxu0 0.0
      %1079 = vmatprep.subr.mxu0 0.0
      %1080 = vmatpush2.msra.mxu0 0.0
      %1081 = vmatprep.subr.mxu0 0.0
      %1082 = vmatpush2.msra.mxu0 0.0
      %1083 = vmatprep.subr.mxu0 0.0
      %1084 = vmatpush2.msra.mxu0 0.0
      %1085 = vmatprep.subr.mxu0 0.0
      %1086 = vmatpush2.msra.mxu0 0.0
      %1087 = vmatprep.subr.mxu0 0.0
      %1088 = vmatpush2.msra.mxu0 0.0
      %1089 = vmatprep.subr.mxu0 0.0
      %1090 = vmatpush2.msra.mxu0 0.0
      %1091 = vmatprep.subr.mxu0 0.0
      %1092 = vmatpush2.msra.mxu0 0.0
      %1093 = vmatprep.mubr.f32.mxu0 0.0
      %1094 = vmatmul.mubr.f32.gmra.mxu0 %v1027
      %v1095 = vpop.f32.mrf.mxu0
      %v1096 = vadd.f32 %v1024, %v1095
      %v1097 = vpop.f32.mrf.mxu0
      %1098 = vdwg.mxu0
      %1099 = vst [vmem:[#allocation15] sm:$0x3] %v1096
    $region69: #{tpu_custom_call.1} parent=1 // pred_fallthru
      _
    // Predicated region
    $region70: #{tpu_custom_call.1} parent=1 // pred_check
      _
    $region71: #{tpu_custom_call.1} parent=1 // pred_check_branch
      %1101 = sbr.rel (0) target = $region73
    $region72: #{tpu_custom_call.1} parent=1 // pred_region
      %s1103 = ssub.s32 32, 32
      %1104 = vsyncadd [#allocation8], %s1103
      %s1106 = sshll.u32 [#allocation15], 4
      %s1107 = int_to_ptr.vmem [resolvable:$true] %s1106
      %1109 = dma.vmem_to_hbm [thread:$0]  %s1107, 32, %s10, [#allocation8]
    $region73: #{tpu_custom_call.1} parent=1 // pred_fallthru
      _
    // Predicated region
    $region74: #{tpu_custom_call.1} parent=1 // pred_check
      _
    $region75: #{tpu_custom_call.1} parent=1 // pred_check_branch
      %1111 = sbr.rel (0) target = $region77
    $region76: #{tpu_custom_call.1} parent=1 // pred_region
      %1112 = dma.done [#allocation8], 32
    $region77: #{tpu_custom_call.1} parent=1 // pred_fallthru
      _
    %1113 = vsyncpa [#allocation7], 1
    %1114 = vsyncpa [#allocation10], 1
    %1115 = vsyncpa [#allocation13], 1
    %1116 = vsyncpa [#allocation8], 1

// kernel: tpu_custom_call.1
$region0: #{tpu_custom_call.1}
  #allocation0 [shape = 'u32[]', space=smem, size = 0x4, offset = 0x4, fixed_abs, tag = 'smem constant byte address 0x4 - core index']
  #allocation1 [shape = 'u32[144,128]{1,0:T(1,128)}', space=vmem, size = 0x12000, scoped, tag = 'internal scratch']
  #allocation2 [shape = 'f32[2,32]{1,0:T(2,128)}', space=vmem, size = 0x400, scoped, tag = 'scratch operand']
  #allocation3 [shape = 'f32[2,4]{1,0:T(2,128)}', space=vmem, size = 0x400, scoped, tag = 'scratch operand']
  #allocation4 [shape = 'f32[2,4]{1,0:T(2,128)}', space=vmem, size = 0x400, scoped, tag = 'scratch operand']
  #allocation5 [shape = 'f32[2,32]{1,0:T(2,128)}', space=vmem, size = 0x400, scoped, tag = 'scratch operand']
  %s0 = inlined_call_operand.hbm [shape: f32[2,8,32], index: 0, kind: input, shape index: {}]
  %s1 = inlined_call_operand.vmem [shape: f32[2,32], index: 1, kind: input, shape index: {}]
  %s2 = inlined_call_operand.hbm [shape: f32[2,8], index: 2, kind: input, shape index: {}]
  %s3 = inlined_call_operand.vmem [shape: f32[32,64], index: 3, kind: input, shape index: {}]
  %s4 = inlined_call_operand.hbm [shape: f32[3,32,32], index: 4, kind: input, shape index: {}]
  %s5 = inlined_call_operand.hbm [shape: f32[9,32], index: 5, kind: input, shape index: {}]
  %s6 = inlined_call_operand.vmem [shape: f32[32,4], index: 6, kind: input, shape index: {}]
  %s7 = inlined_call_operand.vmem [shape: f32[4,32], index: 7, kind: input, shape index: {}]
  %s8 = inlined_call_operand.hbm [shape: f32[32,128], index: 8, kind: input, shape index: {}]
  %s9 = inlined_call_operand.vmem [shape: f32[1,128], index: 9, kind: input, shape index: {}]
  %s10 = inlined_call_operand.hbm [shape: f32[2,128], index: 10, kind: output, shape index: {}]
  %s11 = sld [smem:[#allocation0]]
  $region78: #{tpu_custom_call.1} parent=0
    _
  %s13 = ssub.s32 1, %s11
  %s14 = scalar_select 0, %s13, %s11
  $region1: #{tpu_custom_call.1} parent=0
    #allocation6 [shape = 'u8[8192]{0}', space=vmem, size = 0x2000, scoped, tag = 'input window, operand 0, single buffered']
    #allocation7 [shape = 's32[1]{0}', space=sflag, size = 0x4, scoped, tag = 'scoped memory for tpu_custom_call.1']
    #allocation8 [shape = 's32[1]{0}', space=sflag, size = 0x4, scoped, tag = 'scoped memory for tpu_custom_call.1']
    #allocation9 [shape = 'u8[1024]{0}', space=vmem, size = 0x400, scoped, tag = 'input window, operand 2, single buffered']
    #allocation10 [shape = 's32[1]{0}', space=sflag, size = 0x4, scoped, tag = 'scoped memory for tpu_custom_call.1']
    #allocation11 [shape = 'u8[49152]{0}', space=vmem, size = 0xc000, scoped, tag = 'input window, operand 4, single buffered']
    #allocation12 [shape = 'u8[8192]{0}', space=vmem, size = 0x2000, scoped, tag = 'input window, operand 5, single buffered']
    #allocation13 [shape = 's32[1]{0}', space=sflag, size = 0x4, scoped, tag = 'scoped memory for tpu_custom_call.1']
    #allocation14 [shape = 'u8[16384]{0}', space=vmem, size = 0x4000, scoped, tag = 'input window, operand 8, single buffered']
    #allocation15 [shape = 'u8[1024]{0}', space=vmem, size = 0x400, scoped, tag = 'output window, operand 0, single buffered']
    %15 = vsyncpa [#allocation7], 0
    %16 = vsyncpa [#allocation10], 0
    %17 = vsyncpa [#allocation13], 0
    %18 = vsyncpa [#allocation8], 0
    // Predicated region
    $region2: #{tpu_custom_call.1} parent=1 // pred_check
      _
    $region3: #{tpu_custom_call.1} parent=1 // pred_check_branch
      %20 = sbr.rel (0) target = $region5
    $region4: #{tpu_custom_call.1} parent=1 // pred_region
      %s22 = ssub.s32 256, 256
      %23 = vsyncadd [#allocation7], %s22
      %s24 = sshll.u32 [#allocation6], 4
      %s25 = int_to_ptr.vmem [resolvable:$true] %s24
      %30 = dma.hbm_to_vmem [thread:$0]  %s0, 256, %s25, [#allocation7], 128, 128, 8
    $region5: #{tpu_custom_call.1} parent=1 // pred_fallthru
      _
    // Predicated region
    $region6: #{tpu_custom_call.1} parent=1 // pred_check
      _
    $region7: #{tpu_custom_call.1} parent=1 // pred_check_branch
      %32 = sbr.rel (0) target = $region9
    $region8: #{tpu_custom_call.1} parent=1 // pred_region
      _
    $region9: #{tpu_custom_call.1} parent=1 // pred_fallthru
      _
    // Predicated region
    $region10: #{tpu_custom_call.1} parent=1 // pred_check
      _
    $region11: #{tpu_custom_call.1} parent=1 // pred_check_branch
      %34 = sbr.rel (0) target = $region13
    $region12: #{tpu_custom_call.1} parent=1 // pred_region
      %s36 = ssub.s32 32, 32
      %37 = vsyncadd [#allocation10], %s36
      %s39 = sshll.u32 [#allocation9], 4
      %s40 = int_to_ptr.vmem [resolvable:$true] %s39
      %42 = dma.hbm_to_vmem [thread:$0]  %s2, 32, %s40, [#allocation10]
    $region13: #{tpu_custom_call.1} parent=1 // pred_fallthru
      _
    // Predicated region
    $region14: #{tpu_custom_call.1} parent=1 // pred_check
      _
    $region15: #{tpu_custom_call.1} parent=1 // pred_check_branch
      %44 = sbr.rel (0) target = $region17
    $region16: #{tpu_custom_call.1} parent=1 // pred_region
      _
    $region17: #{tpu_custom_call.1} parent=1 // pred_fallthru
      _
    // Predicated region
    $region18: #{tpu_custom_call.1} parent=1 // pred_check
      _
    $region19: #{tpu_custom_call.1} parent=1 // pred_check_branch
      %46 = sbr.rel (0) target = $region21
    $region20: #{tpu_custom_call.1} parent=1 // pred_region
      %s48 = ssub.s32 1536, 1536
      %49 = vsyncadd [#allocation10], %s48
      %s50 = sshll.u32 [#allocation11], 4
      %s51 = int_to_ptr.vmem [resolvable:$true] %s50
      %56 = dma.hbm_to_vmem [thread:$0]  %s4, 1536, %s51, [#allocation10], 128, 128, 8
    $region21: #{tpu_custom_call.1} parent=1 // pred_fallthru
      _
    // Predicated region
    $region22: #{tpu_custom_call.1} parent=1 // pred_check
      _
    $region23: #{tpu_custom_call.1} parent=1 // pred_check_branch
      %58 = sbr.rel (0) target = $region25
    $region24: #{tpu_custom_call.1} parent=1 // pred_region
      %s60 = ssub.s32 256, 256
      %61 = vsyncadd [#allocation13], %s60
      %s62 = sshll.u32 [#allocation12], 4
      %s63 = int_to_ptr.vmem [resolvable:$true] %s62
      %68 = dma.hbm_to_vmem [thread:$0]  %s5, 256, %s63, [#allocation13], 128, 128, 8
    $region25: #{tpu_custom_call.1} parent=1 // pred_fallthru
      _
    // Predicated region
    $region26: #{tpu_custom_call.1} parent=1 // pred_check
      _
    $region27: #{tpu_custom_call.1} parent=1 // pred_check_branch
      %70 = sbr.rel (0) target = $region29
    $region28: #{tpu_custom_call.1} parent=1 // pred_region
      _
    $region29: #{tpu_custom_call.1} parent=1 // pred_fallthru
      _
    // Predicated region
    $region30: #{tpu_custom_call.1} parent=1 // pred_check
      _
    $region31: #{tpu_custom_call.1} parent=1 // pred_check_branch
      %72 = sbr.rel (0) target = $region33
    $region32: #{tpu_custom_call.1} parent=1 // pred_region
      _
    $region33: #{tpu_custom_call.1} parent=1 // pred_fallthru
      _
    // Predicated region
    $region34: #{tpu_custom_call.1} parent=1 // pred_check
      _
    $region35: #{tpu_custom_call.1} parent=1 // pred_check_branch
      %74 = sbr.rel (0) target = $region37
    $region36: #{tpu_custom_call.1} parent=1 // pred_region
      %s76 = ssub.s32 512, 512
      %77 = vsyncadd [#allocation13], %s76
      %s78 = sshll.u32 [#allocation14], 4
      %s79 = int_to_ptr.vmem [resolvable:$true] %s78
      %84 = dma.hbm_to_vmem [thread:$0]  %s8, 512, %s79, [#allocation13], 128, 128, 8
    $region37: #{tpu_custom_call.1} parent=1 // pred_fallthru
      _
    // Predicated region
    $region38: #{tpu_custom_call.1} parent=1 // pred_check
      _
    $region39: #{tpu_custom_call.1} parent=1 // pred_check_branch
      %86 = sbr.rel (0) target = $region41
    $region40: #{tpu_custom_call.1} parent=1 // pred_region
      _
    $region41: #{tpu_custom_call.1} parent=1 // pred_fallthru
      _
    // Predicated region
    $region42: #{tpu_custom_call.1} parent=1 // pred_check
      _
    $region43: #{tpu_custom_call.1} parent=1 // pred_check_branch
      %88 = sbr.rel (0) target = $region45
    $region44: #{tpu_custom_call.1} parent=1 // pred_region
      %89 = dma.done [#allocation7], 256
    $region45: #{tpu_custom_call.1} parent=1 // pred_fallthru
      _
    // Predicated region
    $region46: #{tpu_custom_call.1} parent=1 // pred_check
      _
    $region47: #{tpu_custom_call.1} parent=1 // pred_check_branch
      %91 = sbr.rel (0) target = $region49
    $region48: #{tpu_custom_call.1} parent=1 // pred_region
      %92 = dma.done [#allocation10], 32
    $region49: #{tpu_custom_call.1} parent=1 // pred_fallthru
      _
    // Predicated region
    $region50: #{tpu_custom_call.1} parent=1 // pred_check
      _
    $region51: #{tpu_custom_call.1} parent=1 // pred_check_branch
      %94 = sbr.rel (0) target = $region53
    $region52: #{tpu_custom_call.1} parent=1 // pred_region
      %95 = dma.done [#allocation10], 1536
    $region53: #{tpu_custom_call.1} parent=1 // pred_fallthru
      _
    // Predicated region
    $region54: #{tpu_custom_call.1} parent=1 // pred_check
      _
    $region55: #{tpu_custom_call.1} parent=1 // pred_check_branch
      %97 = sbr.rel (0) target = $region57
    $region56: #{tpu_custom_call.1} parent=1 // pred_region
      %98 = dma.done [#allocation13], 256
    $region57: #{tpu_custom_call.1} parent=1 // pred_fallthru
      _
    // Predicated region
    $region58: #{tpu_custom_call.1} parent=1 // pred_check
      _
    $region59: #{tpu_custom_call.1} parent=1 // pred_check_branch
      %100 = sbr.rel (0) target = $region61
    $region60: #{tpu_custom_call.1} parent=1 // pred_region
      %101 = dma.done [#allocation13], 512
    $region61: #{tpu_custom_call.1} parent=1 // pred_fallthru
      _
    %v102 = vld [vmem:[#allocation12] sm:$0xff]
    %v103 = vld [vmem:[#allocation12 + $0x8] sm:$0x1]
    %p104 = scmp.eq.s32.totalorder 0, 0
    // Predicated region
    $region62: #{tpu_custom_call.1} parent=1 // pred_check
      %p105 = pneg %p104
    $region63: #{tpu_custom_call.1} parent=1 // pred_check_branch
      %107 = sbr.rel (%p105) target = $region65
    $region64: #{tpu_custom_call.1} parent=1 // pred_region
      %v108 = vld [vmem:[%s1] sm:$0x3]
      %v109 = vld [vmem:[#allocation11] sm:$0xff]
      %v110 = vld [vmem:[#allocation11 + $0x8] sm:$0xff]
      %v111 = vld [vmem:[#allocation11 + $0x10] sm:$0xff]
      %v112 = vld [vmem:[#allocation11 + $0x18] sm:$0xff]
      %v113 = vlaneseq
      %v114 = vshrl.u32 %v113, 7
      %v115 = vsub.s32 0, %v114
      %v116 = vrot.slane %v102, %v115
      %vm117 = vcmask 261120
      %v119 = vsel %vm117, %v108, 0
      %121 = vmatprep.subr.mxu0 0.0
      %122 = vmatpush1.msra.mxu0 0.0
      %123 = vmatprep.subr.mxu0 0.0
      %124 = vmatpush1.msra.mxu0 0.0
      %125 = vmatprep.subr.mxu0 0.0
      %126 = vmatpush1.msra.mxu0 0.0
      %127 = vmatprep.subr.mxu0 0.0
      %128 = vmatpush1.msra.mxu0 0.0
      %129 = vmatprep.subr.mxu0 0.0
      %130 = vmatpush1.msra.mxu0 0.0
      %131 = vmatprep.subr.mxu0 0.0
      %132 = vmatpush1.msra.mxu0 0.0
      %133 = vmatprep.subr.mxu0 0.0
      %134 = vmatpush1.msra.mxu0 0.0
      %135 = vmatprep.subr.mxu0 0.0
      %136 = vmatpush1.msra.mxu0 0.0
      %137 = vmatprep.subr.mxu0 0.0
      %138 = vmatpush1.msra.mxu0 0.0
      %139 = vmatprep.subr.mxu0 0.0
      %140 = vmatpush1.msra.mxu0 0.0
      %141 = vmatprep.subr.mxu0 0.0
      %142 = vmatpush1.msra.mxu0 0.0
      %143 = vmatprep.subr.mxu0 0.0
      %144 = vmatpush1.msra.mxu0 0.0
      %145 = vmatprep.subr.mxu0 0.0
      %146 = vmatpush1.msra.mxu0 %v112
      %147 = vmatprep.subr.mxu0 0.0
      %148 = vmatpush1.msra.mxu0 %v111
      %149 = vmatprep.subr.mxu0 0.0
      %150 = vmatpush1.msra.mxu0 %v110
      %151 = vmatprep.subr.mxu0 0.0
      %152 = vmatpush1.msra.mxu0 %v109
      %153 = vmatprep.subr.mxu0 0.0
      %154 = vmatpush2.msra.mxu0 0.0
      %155 = vmatprep.subr.mxu0 0.0
      %156 = vmatpush2.msra.mxu0 0.0
      %157 = vmatprep.subr.mxu0 0.0
      %158 = vmatpush2.msra.mxu0 0.0
      %159 = vmatprep.subr.mxu0 0.0
      %160 = vmatpush2.msra.mxu0 0.0
      %161 = vmatprep.subr.mxu0 0.0
      %162 = vmatpush2.msra.mxu0 0.0
      %163 = vmatprep.subr.mxu0 0.0
      %164 = vmatpush2.msra.mxu0 0.0
      %165 = vmatprep.subr.mxu0 0.0
      %166 = vmatpush2.msra.mxu0 0.0
      %167 = vmatprep.subr.mxu0 0.0
      %168 = vmatpush2.msra.mxu0 0.0
      %169 = vmatprep.subr.mxu0 0.0
      %170 = vmatpush2.msra.mxu0 0.0
      %171 = vmatprep.subr.mxu0 0.0
      %172 = vmatpush2.msra.mxu0 0.0
      %173 = vmatprep.subr.mxu0 0.0
      %174 = vmatpush2.msra.mxu0 0.0
      %175 = vmatprep.subr.mxu0 0.0
      %176 = vmatpush2.msra.mxu0 0.0
      %177 = vmatprep.subr.mxu0 0.0
      %178 = vmatpush2.msra.mxu0 0.0
      %179 = vmatprep.subr.mxu0 0.0
      %180 = vmatpush2.msra.mxu0 0.0
      %181 = vmatprep.subr.mxu0 0.0
      %182 = vmatpush2.msra.mxu0 0.0
      %183 = vmatprep.subr.mxu0 0.0
      %184 = vmatpush2.msra.mxu0 0.0
      %185 = vmatprep.mubr.f32.mxu0 0.0
      %186 = vmatmul.mubr.f32.gmra.mxu0 %v119
      %v187 = vpop.f32.mrf.mxu0
      %v188 = vadd.f32 %v116, %v187
      %v189 = vpop.f32.mrf.mxu0
      %190 = vdwg.mxu0
      %vm191 = vcmask 254976
      %192 = vst.msk [vmem:[#allocation2] sm:$0x3] %vm191, %v188
      %vm193 = vcmask 25600
      %194 = vst.msk [vmem:[#allocation3] sm:$0x3] %vm193, -1e+30
      %195 = vst.msk [vmem:[#allocation4] sm:$0x3] %vm193, 0.0
      %196 = vst.msk [vmem:[#allocation5] sm:$0x3] %vm191, 0.0
    $region65: #{tpu_custom_call.1} parent=1 // pred_fallthru
      _
    %v197 = vld [vmem:[#allocation6] sm:$0xff]
    %v198 = vld [vmem:[#allocation6 + $0x8] sm:$0xff]
    %v199 = vld [vmem:[%s3] sm:$0xff]
    %v200 = vld [vmem:[%s3 + $0x8] sm:$0xff]
    %v201 = vld [vmem:[%s3 + $0x10] sm:$0xff]
    %v202 = vld [vmem:[%s3 + $0x18] sm:$0xff]
    %vm203 = vcmask 261120
    %v205 = vsel %vm203, %v197, 0
    %v208 = vsel %vm203, %v198, 0
    %210 = vmatprep.subr.mxu0 0.0
    %211 = vmatpush1.msra.mxu0 0.0
    %212 = vmatprep.subr.mxu0 0.0
    %213 = vmatpush1.msra.mxu0 0.0
    %214 = vmatprep.subr.mxu0 0.0
    %215 = vmatpush1.msra.mxu0 0.0
    %216 = vmatprep.subr.mxu0 0.0
    %217 = vmatpush1.msra.mxu0 0.0
    %218 = vmatprep.subr.mxu0 0.0
    %219 = vmatpush1.msra.mxu0 0.0
    %220 = vmatprep.subr.mxu0 0.0
    %221 = vmatpush1.msra.mxu0 0.0
    %222 = vmatprep.subr.mxu0 0.0
    %223 = vmatpush1.msra.mxu0 0.0
    %224 = vmatprep.subr.mxu0 0.0
    %225 = vmatpush1.msra.mxu0 0.0
    %226 = vmatprep.subr.mxu0 0.0
    %227 = vmatpush1.msra.mxu0 0.0
    %228 = vmatprep.subr.mxu0 0.0
    %229 = vmatpush1.msra.mxu0 0.0
    %230 = vmatprep.subr.mxu0 0.0
    %231 = vmatpush1.msra.mxu0 0.0
    %232 = vmatprep.subr.mxu0 0.0
    %233 = vmatpush1.msra.mxu0 0.0
    %234 = vmatprep.subr.mxu0 0.0
    %235 = vmatpush1.msra.mxu0 %v202
    %236 = vmatprep.subr.mxu0 0.0
    %237 = vmatpush1.msra.mxu0 %v201
    %238 = vmatprep.subr.mxu0 0.0
    %239 = vmatpush1.msra.mxu0 %v200
    %240 = vmatprep.subr.mxu0 0.0
    %241 = vmatpush1.msra.mxu0 %v199
    %242 = vmatprep.subr.mxu0 0.0
    %243 = vmatpush2.msra.mxu0 0.0
    %244 = vmatprep.subr.mxu0 0.0
    %245 = vmatpush2.msra.mxu0 0.0
    %246 = vmatprep.subr.mxu0 0.0
    %247 = vmatpush2.msra.mxu0 0.0
    %248 = vmatprep.subr.mxu0 0.0
    %249 = vmatpush2.msra.mxu0 0.0
    %250 = vmatprep.subr.mxu0 0.0
    %251 = vmatpush2.msra.mxu0 0.0
    %252 = vmatprep.subr.mxu0 0.0
    %253 = vmatpush2.msra.mxu0 0.0
    %254 = vmatprep.subr.mxu0 0.0
    %255 = vmatpush2.msra.mxu0 0.0
    %256 = vmatprep.subr.mxu0 0.0
    %257 = vmatpush2.msra.mxu0 0.0
    %258 = vmatprep.subr.mxu0 0.0
    %259 = vmatpush2.msra.mxu0 0.0
    %260 = vmatprep.subr.mxu0 0.0
    %261 = vmatpush2.msra.mxu0 0.0
    %262 = vmatprep.subr.mxu0 0.0
    %263 = vmatpush2.msra.mxu0 0.0
    %264 = vmatprep.subr.mxu0 0.0
    %265 = vmatpush2.msra.mxu0 0.0
    %266 = vmatprep.subr.mxu0 0.0
    %267 = vmatpush2.msra.mxu0 0.0
    %268 = vmatprep.subr.mxu0 0.0
    %269 = vmatpush2.msra.mxu0 0.0
    %270 = vmatprep.subr.mxu0 0.0
    %271 = vmatpush2.msra.mxu0 0.0
    %272 = vmatprep.subr.mxu0 0.0
    %273 = vmatpush2.msra.mxu0 0.0
    %274 = vmatprep.mubr.f32.mxu0 0.0
    %275 = vmatmul.mubr.f32.gmra.mxu0 %v205
    %v276 = vpop.f32.mrf.mxu0
    %v277 = vadd.f32 0.0, %v276
    %v278 = vpop.f32.mrf.mxu0
    %279 = vmatprep.mubr.f32.mxu0 0.0
    %280 = vmatmul.mubr.f32.gmra.mxu0 %v208
    %v281 = vpop.f32.mrf.mxu0
    %v282 = vadd.f32 0.0, %v281
    %v283 = vpop.f32.mrf.mxu0
    %284 = vdwg.mxu0
    %v285 = vlaneseq
    %v286 = vshrl.u32 %v285, 7
    %v287 = vsub.s32 1, %v286
    %v288 = vrot.slane %v102, %v287
    %v289 = vadd.f32 %v277, %v288
    %v290 = vadd.f32 %v282, %v288
    %v291 = vlaneseq
    %v292 = vshrl.u32 %v291, 7
    %v293 = vsub.s32 2, %v292
    %v294 = vrot.slane %v102, %v293
    %296 = vrot.lane.b32.xlu0 %v294, 32
    %v297 = vpop.permute.xlu0 %296
    %v299 = vadd.f32 %v277, %v297
    %v300 = vadd.f32 %v282, %v297
    %v301 = vld [vmem:[#allocation2] sm:$0x3]
    %v304 = vunpack.c.l.s4 1966171168
    %v305 = vunpack.c.0.s8 %v304
    %v306 = vlaneseq
    %v307 = vshrl.u32 %v306, 7
    %v308 = vsub.s32 %v305, %v307
    %v309 = vrot.slane %v301, %v308
    %v310 = vcombine.high %v309, %v309
    %v312 = vunpack.c.l.s4 1966171168
    %v313 = vunpack.c.0.s8 %v312
    %v314 = vlaneseq
    %v315 = vshrl.u32 %v314, 7
    %v316 = vsub.s32 %v313, %v315
    %v317 = vrot.slane %v309, %v316
    %v319 = vunpack.c.l.s4 1966171168
    %v320 = vunpack.c.0.s8 %v319
    %v321 = vlaneseq
    %v322 = vshrl.u32 %v321, 7
    %v323 = vsub.s32 %v320, %v322
    %v324 = vrot.slane %v310, %v323
    %v325 = vlaneseq
    %v326 = vshrl.u32 %v325, 7
    %v327 = vsub.s32 0, %v326
    %v328 = vrot.slane %v317, %v327
    %v329 = vlaneseq
    %v330 = vshrl.u32 %v329, 7
    %v331 = vsub.s32 0, %v330
    %v332 = vrot.slane %v324, %v331
    %v335 = vmul.f32 %v289, %v328
    %v336 = vmul.f32 %v290, %v332
    %v337 = vld [vmem:[%s6] sm:$0xff]
    %v338 = vld [vmem:[%s6 + $0x8] sm:$0xff]
    %v339 = vld [vmem:[%s6 + $0x10] sm:$0xff]
    %v340 = vld [vmem:[%s6 + $0x18] sm:$0xff]
    %v342 = vsel %vm203, %v335, 0
    %v345 = vsel %vm203, %v336, 0
    %347 = vmatprep.subr.mxu0 0.0
    %348 = vmatpush1.msra.mxu0 0.0
    %349 = vmatprep.subr.mxu0 0.0
    %350 = vmatpush1.msra.mxu0 0.0
    %351 = vmatprep.subr.mxu0 0.0
    %352 = vmatpush1.msra.mxu0 0.0
    %353 = vmatprep.subr.mxu0 0.0
    %354 = vmatpush1.msra.mxu0 0.0
    %355 = vmatprep.subr.mxu0 0.0
    %356 = vmatpush1.msra.mxu0 0.0
    %357 = vmatprep.subr.mxu0 0.0
    %358 = vmatpush1.msra.mxu0 0.0
    %359 = vmatprep.subr.mxu0 0.0
    %360 = vmatpush1.msra.mxu0 0.0
    %361 = vmatprep.subr.mxu0 0.0
    %362 = vmatpush1.msra.mxu0 0.0
    %363 = vmatprep.subr.mxu0 0.0
    %364 = vmatpush1.msra.mxu0 0.0
    %365 = vmatprep.subr.mxu0 0.0
    %366 = vmatpush1.msra.mxu0 0.0
    %367 = vmatprep.subr.mxu0 0.0
    %368 = vmatpush1.msra.mxu0 0.0
    %369 = vmatprep.subr.mxu0 0.0
    %370 = vmatpush1.msra.mxu0 0.0
    %371 = vmatprep.subr.mxu0 0.0
    %372 = vmatpush1.msra.mxu0 %v340
    %373 = vmatprep.subr.mxu0 0.0
    %374 = vmatpush1.msra.mxu0 %v339
    %375 = vmatprep.subr.mxu0 0.0
    %376 = vmatpush1.msra.mxu0 %v338
    %377 = vmatprep.subr.mxu0 0.0
    %378 = vmatpush1.msra.mxu0 %v337
    %379 = vmatprep.subr.mxu0 0.0
    %380 = vmatpush2.msra.mxu0 0.0
    %381 = vmatprep.subr.mxu0 0.0
    %382 = vmatpush2.msra.mxu0 0.0
    %383 = vmatprep.subr.mxu0 0.0
    %384 = vmatpush2.msra.mxu0 0.0
    %385 = vmatprep.subr.mxu0 0.0
    %386 = vmatpush2.msra.mxu0 0.0
    %387 = vmatprep.subr.mxu0 0.0
    %388 = vmatpush2.msra.mxu0 0.0
    %389 = vmatprep.subr.mxu0 0.0
    %390 = vmatpush2.msra.mxu0 0.0
    %391 = vmatprep.subr.mxu0 0.0
    %392 = vmatpush2.msra.mxu0 0.0
    %393 = vmatprep.subr.mxu0 0.0
    %394 = vmatpush2.msra.mxu0 0.0
    %395 = vmatprep.subr.mxu0 0.0
    %396 = vmatpush2.msra.mxu0 0.0
    %397 = vmatprep.subr.mxu0 0.0
    %398 = vmatpush2.msra.mxu0 0.0
    %399 = vmatprep.subr.mxu0 0.0
    %400 = vmatpush2.msra.mxu0 0.0
    %401 = vmatprep.subr.mxu0 0.0
    %402 = vmatpush2.msra.mxu0 0.0
    %403 = vmatprep.subr.mxu0 0.0
    %404 = vmatpush2.msra.mxu0 0.0
    %405 = vmatprep.subr.mxu0 0.0
    %406 = vmatpush2.msra.mxu0 0.0
    %407 = vmatprep.subr.mxu0 0.0
    %408 = vmatpush2.msra.mxu0 0.0
    %409 = vmatprep.subr.mxu0 0.0
    %410 = vmatpush2.msra.mxu0 0.0
    %411 = vmatprep.mubr.f32.mxu0 0.0
    %412 = vmatmul.mubr.f32.gmra.mxu0 %v342
    %v413 = vpop.f32.mrf.mxu0
    %v414 = vadd.f32 0.0, %v413
    %v415 = vpop.f32.mrf.mxu0
    %416 = vmatprep.mubr.f32.mxu0 0.0
    %417 = vmatmul.mubr.f32.gmra.mxu0 %v345
    %v418 = vpop.f32.mrf.mxu0
    %v419 = vadd.f32 0.0, %v418
    %v420 = vpop.f32.mrf.mxu0
    %421 = vdwg.mxu0
    %v422 = vld [vmem:[#allocation9] sm:$0x3]
    %v423 = vlaneseq
    %v424 = vshrl.u32 %v423, 7
    %v425 = vsub.s32 0, %v424
    %v426 = vrot.slane %v422, %v425
    %428 = vbcast.lane.b32.xlu0 %v426, 256
    %v429 = vpop.permute.xlu0 %428
    %v430 = vlaneseq
    %v431 = vshrl.u32 %v430, 7
    %v432 = vsub.s32 1, %v431
    %v433 = vrot.slane %v422, %v432
    %435 = vbcast.lane.b32.xlu0 %v433, 256
    %v436 = vpop.permute.xlu0 %435
    %v437 = vadd.f32 %v414, %v429
    %v438 = vadd.f32 %v419, %v436
    %v439 = vld [vmem:[#allocation3] sm:$0x3]
    %vm440 = vcmask 31744
    %v441 = vsel %vm440, %v437, -inf
    %v442 = vrot.slane %v441, 4
    %v443 = vmax.f32 %v441, %v442
    %v444 = vrot.slane %v443, 2
    %v445 = vmax.f32 %v443, %v444
    %v446 = vrot.slane %v445, 1
    %v447 = vmax.f32 %v445, %v446
    %v448 = vsel %vm440, %v438, -inf
    %v449 = vrot.slane %v448, 4
    %v450 = vmax.f32 %v448, %v449
    %v451 = vrot.slane %v450, 2
    %v452 = vmax.f32 %v450, %v451
    %v453 = vrot.slane %v452, 1
    %v454 = vmax.f32 %v452, %v453
    %vm457 = vcmask 1041409
    %v458 = vsel %vm457, %v454, %v447
    %v460 = vmax.f32 %v439, %v458
    %v461 = vsub.f32 %v439, %v460
    %v462 = vmul.f32 %v461, 1.442695
    %v463 = vpow.pop %v462
    %v466 = vunpack.c.l.s4 1966171168
    %v467 = vunpack.c.0.s8 %v466
    %v468 = vlaneseq
    %v469 = vshrl.u32 %v468, 7
    %v470 = vsub.s32 %v467, %v469
    %v471 = vrot.slane %v460, %v470
    %v472 = vcombine.high %v471, %v471
    %v474 = vunpack.c.l.s4 1966171168
    %v475 = vunpack.c.0.s8 %v474
    %v476 = vlaneseq
    %v477 = vshrl.u32 %v476, 7
    %v478 = vsub.s32 %v475, %v477
    %v479 = vrot.slane %v471, %v478
    %v481 = vunpack.c.l.s4 1966171168
    %v482 = vunpack.c.0.s8 %v481
    %v483 = vlaneseq
    %v484 = vshrl.u32 %v483, 7
    %v485 = vsub.s32 %v482, %v484
    %v486 = vrot.slane %v472, %v485
    %v487 = vlaneseq
    %v488 = vshrl.u32 %v487, 7
    %v489 = vsub.s32 0, %v488
    %v490 = vrot.slane %v479, %v489
    %v491 = vlaneseq
    %v492 = vshrl.u32 %v491, 7
    %v493 = vsub.s32 0, %v492
    %v494 = vrot.slane %v486, %v493
    %v497 = vsub.f32 %v437, %v490
    %v498 = vsub.f32 %v438, %v494
    %v499 = vmul.f32 %v497, 1.442695
    %v500 = vpow.pop %v499
    %v501 = vmul.f32 %v498, 1.442695
    %v502 = vpow.pop %v501
    %v503 = vld [vmem:[#allocation4] sm:$0x3]
    %v504 = vmul.f32 %v463, %v503
    %v505 = vsel %vm440, %v500, 0.0
    %v506 = vrot.slane %v505, 4
    %v507 = vadd.f32 %v505, %v506
    %v508 = vrot.slane %v507, 2
    %v509 = vadd.f32 %v507, %v508
    %v510 = vrot.slane %v509, 1
    %v511 = vadd.f32 %v509, %v510
    %v512 = vsel %vm440, %v502, 0.0
    %v513 = vrot.slane %v512, 4
    %v514 = vadd.f32 %v512, %v513
    %v515 = vrot.slane %v514, 2
    %v516 = vadd.f32 %v514, %v515
    %v517 = vrot.slane %v516, 1
    %v518 = vadd.f32 %v516, %v517
    %v521 = vsel %vm457, %v518, %v511
    %v523 = vadd.f32 %v504, %v521
    %vm524 = vcmask 25600
    %525 = vst.msk [vmem:[#allocation4] sm:$0x3] %vm524, %v523
    %526 = vst.msk [vmem:[#allocation3] sm:$0x3] %vm524, %v460
    %v527 = vld [vmem:[%s7] sm:$0xf]
    %v529 = vsel %vm440, %v500, 0
    %v532 = vsel %vm440, %v502, 0
    %vm534 = vcmask 1043456
    %v536 = vsel %vm534, %v527, 0
    %538 = vmatprep.subr.mxu0 0.0
    %539 = vmatpush1.msra.mxu0 0.0
    %540 = vmatprep.subr.mxu0 0.0
    %541 = vmatpush1.msra.mxu0 0.0
    %542 = vmatprep.subr.mxu0 0.0
    %543 = vmatpush1.msra.mxu0 0.0
    %544 = vmatprep.subr.mxu0 0.0
    %545 = vmatpush1.msra.mxu0 0.0
    %546 = vmatprep.subr.mxu0 0.0
    %547 = vmatpush1.msra.mxu0 0.0
    %548 = vmatprep.subr.mxu0 0.0
    %549 = vmatpush1.msra.mxu0 0.0
    %550 = vmatprep.subr.mxu0 0.0
    %551 = vmatpush1.msra.mxu0 0.0
    %552 = vmatprep.subr.mxu0 0.0
    %553 = vmatpush1.msra.mxu0 0.0
    %554 = vmatprep.subr.mxu0 0.0
    %555 = vmatpush1.msra.mxu0 0.0
    %556 = vmatprep.subr.mxu0 0.0
    %557 = vmatpush1.msra.mxu0 0.0
    %558 = vmatprep.subr.mxu0 0.0
    %559 = vmatpush1.msra.mxu0 0.0
    %560 = vmatprep.subr.mxu0 0.0
    %561 = vmatpush1.msra.mxu0 0.0
    %562 = vmatprep.subr.mxu0 0.0
    %563 = vmatpush1.msra.mxu0 0.0
    %564 = vmatprep.subr.mxu0 0.0
    %565 = vmatpush1.msra.mxu0 0.0
    %566 = vmatprep.subr.mxu0 0.0
    %567 = vmatpush1.msra.mxu0 0.0
    %568 = vmatprep.subr.mxu0 0.0
    %569 = vmatpush1.msra.mxu0 %v536
    %570 = vmatprep.subr.mxu0 0.0
    %571 = vmatpush2.msra.mxu0 0.0
    %572 = vmatprep.subr.mxu0 0.0
    %573 = vmatpush2.msra.mxu0 0.0
    %574 = vmatprep.subr.mxu0 0.0
    %575 = vmatpush2.msra.mxu0 0.0
    %576 = vmatprep.subr.mxu0 0.0
    %577 = vmatpush2.msra.mxu0 0.0
    %578 = vmatprep.subr.mxu0 0.0
    %579 = vmatpush2.msra.mxu0 0.0
    %580 = vmatprep.subr.mxu0 0.0
    %581 = vmatpush2.msra.mxu0 0.0
    %582 = vmatprep.subr.mxu0 0.0
    %583 = vmatpush2.msra.mxu0 0.0
    %584 = vmatprep.subr.mxu0 0.0
    %585 = vmatpush2.msra.mxu0 0.0
    %586 = vmatprep.subr.mxu0 0.0
    %587 = vmatpush2.msra.mxu0 0.0
    %588 = vmatprep.subr.mxu0 0.0
    %589 = vmatpush2.msra.mxu0 0.0
    %590 = vmatprep.subr.mxu0 0.0
    %591 = vmatpush2.msra.mxu0 0.0
    %592 = vmatprep.subr.mxu0 0.0
    %593 = vmatpush2.msra.mxu0 0.0
    %594 = vmatprep.subr.mxu0 0.0
    %595 = vmatpush2.msra.mxu0 0.0
    %596 = vmatprep.subr.mxu0 0.0
    %597 = vmatpush2.msra.mxu0 0.0
    %598 = vmatprep.subr.mxu0 0.0
    %599 = vmatpush2.msra.mxu0 0.0
    %600 = vmatprep.subr.mxu0 0.0
    %601 = vmatpush2.msra.mxu0 0.0
    %602 = vmatprep.mubr.f32.mxu0 0.0
    %603 = vmatmul.mubr.f32.gmra.mxu0 %v529
    %v604 = vpop.f32.mrf.mxu0
    %v605 = vadd.f32 0.0, %v604
    %v606 = vpop.f32.mrf.mxu0
    %607 = vmatprep.mubr.f32.mxu0 0.0
    %608 = vmatmul.mubr.f32.gmra.mxu0 %v532
    %v609 = vpop.f32.mrf.mxu0
    %v610 = vadd.f32 0.0, %v609
    %v611 = vpop.f32.mrf.mxu0
    %612 = vdwg.mxu0
    %v614 = vsel %vm440, %v463, 0
    %616 = vmatprep.subr.mxu0 0.0
    %617 = vmatpush1.msra.mxu0 0.0
    %618 = vmatprep.subr.mxu0 0.0
    %619 = vmatpush1.msra.mxu0 0.0
    %620 = vmatprep.subr.mxu0 0.0
    %621 = vmatpush1.msra.mxu0 0.0
    %622 = vmatprep.subr.mxu0 0.0
    %623 = vmatpush1.msra.mxu0 0.0
    %624 = vmatprep.subr.mxu0 0.0
    %625 = vmatpush1.msra.mxu0 0.0
    %626 = vmatprep.subr.mxu0 0.0
    %627 = vmatpush1.msra.mxu0 0.0
    %628 = vmatprep.subr.mxu0 0.0
    %629 = vmatpush1.msra.mxu0 0.0
    %630 = vmatprep.subr.mxu0 0.0
    %631 = vmatpush1.msra.mxu0 0.0
    %632 = vmatprep.subr.mxu0 0.0
    %633 = vmatpush1.msra.mxu0 0.0
    %634 = vmatprep.subr.mxu0 0.0
    %635 = vmatpush1.msra.mxu0 0.0
    %636 = vmatprep.subr.mxu0 0.0
    %637 = vmatpush1.msra.mxu0 0.0
    %638 = vmatprep.subr.mxu0 0.0
    %639 = vmatpush1.msra.mxu0 0.0
    %640 = vmatprep.subr.mxu0 0.0
    %641 = vmatpush1.msra.mxu0 0.0
    %642 = vmatprep.subr.mxu0 0.0
    %643 = vmatpush1.msra.mxu0 0.0
    %644 = vmatprep.subr.mxu0 0.0
    %645 = vmatpush1.msra.mxu0 0.0
    %646 = vmatprep.subr.mxu0 0.0
    %647 = vmatpush1.msra.mxu0 %v536
    %648 = vmatprep.subr.mxu0 0.0
    %649 = vmatpush2.msra.mxu0 0.0
    %650 = vmatprep.subr.mxu0 0.0
    %651 = vmatpush2.msra.mxu0 0.0
    %652 = vmatprep.subr.mxu0 0.0
    %653 = vmatpush2.msra.mxu0 0.0
    %654 = vmatprep.subr.mxu0 0.0
    %655 = vmatpush2.msra.mxu0 0.0
    %656 = vmatprep.subr.mxu0 0.0
    %657 = vmatpush2.msra.mxu0 0.0
    %658 = vmatprep.subr.mxu0 0.0
    %659 = vmatpush2.msra.mxu0 0.0
    %660 = vmatprep.subr.mxu0 0.0
    %661 = vmatpush2.msra.mxu0 0.0
    %662 = vmatprep.subr.mxu0 0.0
    %663 = vmatpush2.msra.mxu0 0.0
    %664 = vmatprep.subr.mxu0 0.0
    %665 = vmatpush2.msra.mxu0 0.0
    %666 = vmatprep.subr.mxu0 0.0
    %667 = vmatpush2.msra.mxu0 0.0
    %668 = vmatprep.subr.mxu0 0.0
    %669 = vmatpush2.msra.mxu0 0.0
    %670 = vmatprep.subr.mxu0 0.0
    %671 = vmatpush2.msra.mxu0 0.0
    %672 = vmatprep.subr.mxu0 0.0
    %673 = vmatpush2.msra.mxu0 0.0
    %674 = vmatprep.subr.mxu0 0.0
    %675 = vmatpush2.msra.mxu0 0.0
    %676 = vmatprep.subr.mxu0 0.0
    %677 = vmatpush2.msra.mxu0 0.0
    %678 = vmatprep.subr.mxu0 0.0
    %679 = vmatpush2.msra.mxu0 0.0
    %680 = vmatprep.mubr.f32.mxu0 0.0
    %681 = vmatmul.mubr.f32.gmra.mxu0 %v614
    %v682 = vpop.f32.mrf.mxu0
    %v683 = vadd.f32 0.0, %v682
    %v684 = vpop.f32.mrf.mxu0
    %685 = vdwg.mxu0
    %688 = vrot.lane.b32.xlu0 %v299, 96
    %v689 = vpop.permute.xlu0 %688
    %690 = vrot.lane.b32.xlu0 %v300, 96
    %v691 = vpop.permute.xlu0 %690
    %v694 = vmul.f32 %v605, %v689
    %v695 = vmul.f32 %v610, %v691
    %v696 = vsel %vm203, %v694, 0.0
    %v697 = vrot.slane %v696, 4
    %v698 = vadd.f32 %v696, %v697
    %v699 = vrot.slane %v698, 2
    %v700 = vadd.f32 %v698, %v699
    %v701 = vrot.slane %v700, 1
    %v702 = vadd.f32 %v700, %v701
    %v703 = vsel %vm203, %v695, 0.0
    %v704 = vrot.slane %v703, 4
    %v705 = vadd.f32 %v703, %v704
    %v706 = vrot.slane %v705, 2
    %v707 = vadd.f32 %v705, %v706
    %v708 = vrot.slane %v707, 1
    %v709 = vadd.f32 %v707, %v708
    %v710 = vld [vmem:[#allocation5] sm:$0x3]
    %v711 = vmul.f32 %v683, %v710
    %v714 = vsel %vm457, %v709, %v702
    %v716 = vadd.f32 %v711, %v714
    %vm717 = vcmask 254976
    %718 = vst.msk [vmem:[#allocation5] sm:$0x3] %vm717, %v716
    // Predicated region
    $region66: #{tpu_custom_call.1} parent=1 // pred_check
      %p719 = pneg %p104
    $region67: #{tpu_custom_call.1} parent=1 // pred_check_branch
      %721 = sbr.rel (%p719) target = $region69
    $region68: #{tpu_custom_call.1} parent=1 // pred_region
      %v722 = vld [vmem:[#allocation4] sm:$0x3]
      %v723 = vrcp.pop %v722
      %v724 = vld [vmem:[#allocation5] sm:$0x3]
      %v725 = vld [vmem:[%s7] sm:$0xf]
      %v727 = vsel %vm440, %v723, 0
      %v730 = vsel %vm534, %v725, 0
      %732 = vmatprep.subr.mxu0 0.0
      %733 = vmatpush1.msra.mxu0 0.0
      %734 = vmatprep.subr.mxu0 0.0
      %735 = vmatpush1.msra.mxu0 0.0
      %736 = vmatprep.subr.mxu0 0.0
      %737 = vmatpush1.msra.mxu0 0.0
      %738 = vmatprep.subr.mxu0 0.0
      %739 = vmatpush1.msra.mxu0 0.0
      %740 = vmatprep.subr.mxu0 0.0
      %741 = vmatpush1.msra.mxu0 0.0
      %742 = vmatprep.subr.mxu0 0.0
      %743 = vmatpush1.msra.mxu0 0.0
      %744 = vmatprep.subr.mxu0 0.0
      %745 = vmatpush1.msra.mxu0 0.0
      %746 = vmatprep.subr.mxu0 0.0
      %747 = vmatpush1.msra.mxu0 0.0
      %748 = vmatprep.subr.mxu0 0.0
      %749 = vmatpush1.msra.mxu0 0.0
      %750 = vmatprep.subr.mxu0 0.0
      %751 = vmatpush1.msra.mxu0 0.0
      %752 = vmatprep.subr.mxu0 0.0
      %753 = vmatpush1.msra.mxu0 0.0
      %754 = vmatprep.subr.mxu0 0.0
      %755 = vmatpush1.msra.mxu0 0.0
      %756 = vmatprep.subr.mxu0 0.0
      %757 = vmatpush1.msra.mxu0 0.0
      %758 = vmatprep.subr.mxu0 0.0
      %759 = vmatpush1.msra.mxu0 0.0
      %760 = vmatprep.subr.mxu0 0.0
      %761 = vmatpush1.msra.mxu0 0.0
      %762 = vmatprep.subr.mxu0 0.0
      %763 = vmatpush1.msra.mxu0 %v730
      %764 = vmatprep.subr.mxu0 0.0
      %765 = vmatpush2.msra.mxu0 0.0
      %766 = vmatprep.subr.mxu0 0.0
      %767 = vmatpush2.msra.mxu0 0.0
      %768 = vmatprep.subr.mxu0 0.0
      %769 = vmatpush2.msra.mxu0 0.0
      %770 = vmatprep.subr.mxu0 0.0
      %771 = vmatpush2.msra.mxu0 0.0
      %772 = vmatprep.subr.mxu0 0.0
      %773 = vmatpush2.msra.mxu0 0.0
      %774 = vmatprep.subr.mxu0 0.0
      %775 = vmatpush2.msra.mxu0 0.0
      %776 = vmatprep.subr.mxu0 0.0
      %777 = vmatpush2.msra.mxu0 0.0
      %778 = vmatprep.subr.mxu0 0.0
      %779 = vmatpush2.msra.mxu0 0.0
      %780 = vmatprep.subr.mxu0 0.0
      %781 = vmatpush2.msra.mxu0 0.0
      %782 = vmatprep.subr.mxu0 0.0
      %783 = vmatpush2.msra.mxu0 0.0
      %784 = vmatprep.subr.mxu0 0.0
      %785 = vmatpush2.msra.mxu0 0.0
      %786 = vmatprep.subr.mxu0 0.0
      %787 = vmatpush2.msra.mxu0 0.0
      %788 = vmatprep.subr.mxu0 0.0
      %789 = vmatpush2.msra.mxu0 0.0
      %790 = vmatprep.subr.mxu0 0.0
      %791 = vmatpush2.msra.mxu0 0.0
      %792 = vmatprep.subr.mxu0 0.0
      %793 = vmatpush2.msra.mxu0 0.0
      %794 = vmatprep.subr.mxu0 0.0
      %795 = vmatpush2.msra.mxu0 0.0
      %796 = vmatprep.mubr.f32.mxu0 0.0
      %797 = vmatmul.mubr.f32.gmra.mxu0 %v727
      %v798 = vpop.f32.mrf.mxu0
      %v799 = vadd.f32 0.0, %v798
      %v800 = vpop.f32.mrf.mxu0
      %801 = vdwg.mxu0
      %v802 = vmul.f32 %v724, %v799
      %s803 = scalar_lea.vmem [#allocation11], 32
      %v804 = vld [vmem:[%s803] sm:$0xff]
      %v805 = vld [vmem:[%s803 + $0x8] sm:$0xff]
      %v806 = vld [vmem:[%s803 + $0x10] sm:$0xff]
      %v807 = vld [vmem:[%s803 + $0x18] sm:$0xff]
      %v808 = vlaneseq
      %v809 = vshrl.u32 %v808, 7
      %v810 = vsub.s32 3, %v809
      %v811 = vrot.slane %v102, %v810
      %v813 = vsel %vm203, %v802, 0
      %815 = vmatprep.subr.mxu0 0.0
      %816 = vmatpush1.msra.mxu0 0.0
      %817 = vmatprep.subr.mxu0 0.0
      %818 = vmatpush1.msra.mxu0 0.0
      %819 = vmatprep.subr.mxu0 0.0
      %820 = vmatpush1.msra.mxu0 0.0
      %821 = vmatprep.subr.mxu0 0.0
      %822 = vmatpush1.msra.mxu0 0.0
      %823 = vmatprep.subr.mxu0 0.0
      %824 = vmatpush1.msra.mxu0 0.0
      %825 = vmatprep.subr.mxu0 0.0
      %826 = vmatpush1.msra.mxu0 0.0
      %827 = vmatprep.subr.mxu0 0.0
      %828 = vmatpush1.msra.mxu0 0.0
      %829 = vmatprep.subr.mxu0 0.0
      %830 = vmatpush1.msra.mxu0 0.0
      %831 = vmatprep.subr.mxu0 0.0
      %832 = vmatpush1.msra.mxu0 0.0
      %833 = vmatprep.subr.mxu0 0.0
      %834 = vmatpush1.msra.mxu0 0.0
      %835 = vmatprep.subr.mxu0 0.0
      %836 = vmatpush1.msra.mxu0 0.0
      %837 = vmatprep.subr.mxu0 0.0
      %838 = vmatpush1.msra.mxu0 0.0
      %839 = vmatprep.subr.mxu0 0.0
      %840 = vmatpush1.msra.mxu0 %v807
      %841 = vmatprep.subr.mxu0 0.0
      %842 = vmatpush1.msra.mxu0 %v806
      %843 = vmatprep.subr.mxu0 0.0
      %844 = vmatpush1.msra.mxu0 %v805
      %845 = vmatprep.subr.mxu0 0.0
      %846 = vmatpush1.msra.mxu0 %v804
      %847 = vmatprep.subr.mxu0 0.0
      %848 = vmatpush2.msra.mxu0 0.0
      %849 = vmatprep.subr.mxu0 0.0
      %850 = vmatpush2.msra.mxu0 0.0
      %851 = vmatprep.subr.mxu0 0.0
      %852 = vmatpush2.msra.mxu0 0.0
      %853 = vmatprep.subr.mxu0 0.0
      %854 = vmatpush2.msra.mxu0 0.0
      %855 = vmatprep.subr.mxu0 0.0
      %856 = vmatpush2.msra.mxu0 0.0
      %857 = vmatprep.subr.mxu0 0.0
      %858 = vmatpush2.msra.mxu0 0.0
      %859 = vmatprep.subr.mxu0 0.0
      %860 = vmatpush2.msra.mxu0 0.0
      %861 = vmatprep.subr.mxu0 0.0
      %862 = vmatpush2.msra.mxu0 0.0
      %863 = vmatprep.subr.mxu0 0.0
      %864 = vmatpush2.msra.mxu0 0.0
      %865 = vmatprep.subr.mxu0 0.0
      %866 = vmatpush2.msra.mxu0 0.0
      %867 = vmatprep.subr.mxu0 0.0
      %868 = vmatpush2.msra.mxu0 0.0
      %869 = vmatprep.subr.mxu0 0.0
      %870 = vmatpush2.msra.mxu0 0.0
      %871 = vmatprep.subr.mxu0 0.0
      %872 = vmatpush2.msra.mxu0 0.0
      %873 = vmatprep.subr.mxu0 0.0
      %874 = vmatpush2.msra.mxu0 0.0
      %875 = vmatprep.subr.mxu0 0.0
      %876 = vmatpush2.msra.mxu0 0.0
      %877 = vmatprep.subr.mxu0 0.0
      %878 = vmatpush2.msra.mxu0 0.0
      %879 = vmatprep.mubr.f32.mxu0 0.0
      %880 = vmatmul.mubr.f32.gmra.mxu0 %v813
      %v881 = vpop.f32.mrf.mxu0
      %v882 = vadd.f32 %v811, %v881
      %v883 = vpop.f32.mrf.mxu0
      %884 = vdwg.mxu0
      %v885 = vsel %vm717, %v882, 0.0
      %886 = vadd.xlane.f32.xlu0 %v885
      %v887 = vpop.xlane.xlu0 %886
      %v888 = vrcp.pop 32.0
      %v889 = vmul.f32 %v887, %v888
      %v890 = vsub.f32 %v882, %v889
      %v891 = vmul.f32 %v890, %v890
      %v892 = vsel %vm717, %v891, 0.0
      %893 = vadd.xlane.f32.xlu0 %v892
      %v894 = vpop.xlane.xlu0 %893
      %v895 = vmul.f32 %v894, %v888
      %v896 = vadd.f32 %v895, 1e-05
      %v897 = vrsqrt.pop %v896
      %v898 = vmul.f32 %v890, %v897
      %v899 = vlaneseq
      %v900 = vshrl.u32 %v899, 7
      %v901 = vsub.s32 4, %v900
      %v902 = vrot.slane %v102, %v901
      %v903 = vmul.f32 %v898, %v902
      %v904 = vlaneseq
      %v905 = vshrl.u32 %v904, 7
      %v906 = vsub.s32 5, %v905
      %v907 = vrot.slane %v102, %v906
      %v908 = vadd.f32 %v903, %v907
      %s909 = scalar_lea.vmem [#allocation11], 64
      %v910 = vld [vmem:[%s909] sm:$0xff]
      %v911 = vld [vmem:[%s909 + $0x8] sm:$0xff]
      %v912 = vld [vmem:[%s909 + $0x10] sm:$0xff]
      %v913 = vld [vmem:[%s909 + $0x18] sm:$0xff]
      %v914 = vlaneseq
      %v915 = vshrl.u32 %v914, 7
      %v916 = vsub.s32 6, %v915
      %v917 = vrot.slane %v102, %v916
      %v919 = vsel %vm203, %v908, 0
      %921 = vmatprep.subr.mxu0 0.0
      %922 = vmatpush1.msra.mxu0 0.0
      %923 = vmatprep.subr.mxu0 0.0
      %924 = vmatpush1.msra.mxu0 0.0
      %925 = vmatprep.subr.mxu0 0.0
      %926 = vmatpush1.msra.mxu0 0.0
      %927 = vmatprep.subr.mxu0 0.0
      %928 = vmatpush1.msra.mxu0 0.0
      %929 = vmatprep.subr.mxu0 0.0
      %930 = vmatpush1.msra.mxu0 0.0
      %931 = vmatprep.subr.mxu0 0.0
      %932 = vmatpush1.msra.mxu0 0.0
      %933 = vmatprep.subr.mxu0 0.0
      %934 = vmatpush1.msra.mxu0 0.0
      %935 = vmatprep.subr.mxu0 0.0
      %936 = vmatpush1.msra.mxu0 0.0
      %937 = vmatprep.subr.mxu0 0.0
      %938 = vmatpush1.msra.mxu0 0.0
      %939 = vmatprep.subr.mxu0 0.0
      %940 = vmatpush1.msra.mxu0 0.0
      %941 = vmatprep.subr.mxu0 0.0
      %942 = vmatpush1.msra.mxu0 0.0
      %943 = vmatprep.subr.mxu0 0.0
      %944 = vmatpush1.msra.mxu0 0.0
      %945 = vmatprep.subr.mxu0 0.0
      %946 = vmatpush1.msra.mxu0 %v913
      %947 = vmatprep.subr.mxu0 0.0
      %948 = vmatpush1.msra.mxu0 %v912
      %949 = vmatprep.subr.mxu0 0.0
      %950 = vmatpush1.msra.mxu0 %v911
      %951 = vmatprep.subr.mxu0 0.0
      %952 = vmatpush1.msra.mxu0 %v910
      %953 = vmatprep.subr.mxu0 0.0
      %954 = vmatpush2.msra.mxu0 0.0
      %955 = vmatprep.subr.mxu0 0.0
      %956 = vmatpush2.msra.mxu0 0.0
      %957 = vmatprep.subr.mxu0 0.0
      %958 = vmatpush2.msra.mxu0 0.0
      %959 = vmatprep.subr.mxu0 0.0
      %960 = vmatpush2.msra.mxu0 0.0
      %961 = vmatprep.subr.mxu0 0.0
      %962 = vmatpush2.msra.mxu0 0.0
      %963 = vmatprep.subr.mxu0 0.0
      %964 = vmatpush2.msra.mxu0 0.0
      %965 = vmatprep.subr.mxu0 0.0
      %966 = vmatpush2.msra.mxu0 0.0
      %967 = vmatprep.subr.mxu0 0.0
      %968 = vmatpush2.msra.mxu0 0.0
      %969 = vmatprep.subr.mxu0 0.0
      %970 = vmatpush2.msra.mxu0 0.0
      %971 = vmatprep.subr.mxu0 0.0
      %972 = vmatpush2.msra.mxu0 0.0
      %973 = vmatprep.subr.mxu0 0.0
      %974 = vmatpush2.msra.mxu0 0.0
      %975 = vmatprep.subr.mxu0 0.0
      %976 = vmatpush2.msra.mxu0 0.0
      %977 = vmatprep.subr.mxu0 0.0
      %978 = vmatpush2.msra.mxu0 0.0
      %979 = vmatprep.subr.mxu0 0.0
      %980 = vmatpush2.msra.mxu0 0.0
      %981 = vmatprep.subr.mxu0 0.0
      %982 = vmatpush2.msra.mxu0 0.0
      %983 = vmatprep.subr.mxu0 0.0
      %984 = vmatpush2.msra.mxu0 0.0
      %985 = vmatprep.mubr.f32.mxu0 0.0
      %986 = vmatmul.mubr.f32.gmra.mxu0 %v919
      %v987 = vpop.f32.mrf.mxu0
      %v988 = vadd.f32 %v917, %v987
      %v989 = vpop.f32.mrf.mxu0
      %990 = vdwg.mxu0
      %v991 = vmax.f32 %v988, 0.0
      %v992 = vsel %vm717, %v991, 0.0
      %993 = vadd.xlane.f32.xlu0 %v992
      %v994 = vpop.xlane.xlu0 %993
      %v995 = vmul.f32 %v994, %v888
      %v996 = vsub.f32 %v991, %v995
      %v997 = vmul.f32 %v996, %v996
      %v998 = vsel %vm717, %v997, 0.0
      %999 = vadd.xlane.f32.xlu0 %v998
      %v1000 = vpop.xlane.xlu0 %999
      %v1001 = vmul.f32 %v1000, %v888
      %v1002 = vadd.f32 %v1001, 1e-05
      %v1003 = vrsqrt.pop %v1002
      %v1004 = vmul.f32 %v996, %v1003
      %v1005 = vlaneseq
      %v1006 = vshrl.u32 %v1005, 7
      %v1007 = vsub.s32 7, %v1006
      %v1008 = vrot.slane %v102, %v1007
      %v1009 = vmul.f32 %v1004, %v1008
      %v1010 = vlaneseq
      %v1011 = vshrl.u32 %v1010, 7
      %v1012 = vsub.s32 0, %v1011
      %v1013 = vrot.slane %v103, %v1012
      %v1014 = vadd.f32 %v1009, %v1013
      %v1015 = vld [vmem:[#allocation14] sm:$0xff]
      %v1016 = vld [vmem:[#allocation14 + $0x8] sm:$0xff]
      %v1017 = vld [vmem:[#allocation14 + $0x10] sm:$0xff]
      %v1018 = vld [vmem:[#allocation14 + $0x18] sm:$0xff]
      %v1019 = vld [vmem:[%s9] sm:$0x1]
      %v1021 = vlaneseq
      %v1022 = vshrl.u32 %v1021, 7
      %v1023 = vsub.s32 0, %v1022
      %v1024 = vrot.slane %v1019, %v1023
      %v1027 = vsel %vm203, %v1014, 0
      %1029 = vmatprep.subr.mxu0 0.0
      %1030 = vmatpush1.msra.mxu0 0.0
      %1031 = vmatprep.subr.mxu0 0.0
      %1032 = vmatpush1.msra.mxu0 0.0
      %1033 = vmatprep.subr.mxu0 0.0
      %1034 = vmatpush1.msra.mxu0 0.0
      %1035 = vmatprep.subr.mxu0 0.0
      %1036 = vmatpush1.msra.mxu0 0.0
      %1037 = vmatprep.subr.mxu0 0.0
      %1038 = vmatpush1.msra.mxu0 0.0
      %1039 = vmatprep.subr.mxu0 0.0
      %1040 = vmatpush1.msra.mxu0 0.0
      %1041 = vmatprep.subr.mxu0 0.0
      %1042 = vmatpush1.msra.mxu0 0.0
      %1043 = vmatprep.subr.mxu0 0.0
      %1044 = vmatpush1.msra.mxu0 0.0
      %1045 = vmatprep.subr.mxu0 0.0
      %1046 = vmatpush1.msra.mxu0 0.0
      %1047 = vmatprep.subr.mxu0 0.0
      %1048 = vmatpush1.msra.mxu0 0.0
      %1049 = vmatprep.subr.mxu0 0.0
      %1050 = vmatpush1.msra.mxu0 0.0
      %1051 = vmatprep.subr.mxu0 0.0
      %1052 = vmatpush1.msra.mxu0 0.0
      %1053 = vmatprep.subr.mxu0 0.0
      %1054 = vmatpush1.msra.mxu0 %v1018
      %1055 = vmatprep.subr.mxu0 0.0
      %1056 = vmatpush1.msra.mxu0 %v1017
      %1057 = vmatprep.subr.mxu0 0.0
      %1058 = vmatpush1.msra.mxu0 %v1016
      %1059 = vmatprep.subr.mxu0 0.0
      %1060 = vmatpush1.msra.mxu0 %v1015
      %1061 = vmatprep.subr.mxu0 0.0
      %1062 = vmatpush2.msra.mxu0 0.0
      %1063 = vmatprep.subr.mxu0 0.0
      %1064 = vmatpush2.msra.mxu0 0.0
      %1065 = vmatprep.subr.mxu0 0.0
      %1066 = vmatpush2.msra.mxu0 0.0
      %1067 = vmatprep.subr.mxu0 0.0
      %1068 = vmatpush2.msra.mxu0 0.0
      %1069 = vmatprep.subr.mxu0 0.0
      %1070 = vmatpush2.msra.mxu0 0.0
      %1071 = vmatprep.subr.mxu0 0.0
      %1072 = vmatpush2.msra.mxu0 0.0
      %1073 = vmatprep.subr.mxu0 0.0
      %1074 = vmatpush2.msra.mxu0 0.0
      %1075 = vmatprep.subr.mxu0 0.0
      %1076 = vmatpush2.msra.mxu0 0.0
      %1077 = vmatprep.subr.mxu0 0.0
      %1078 = vmatpush2.msra.mxu0 0.0
      %1079 = vmatprep.subr.mxu0 0.0
      %1080 = vmatpush2.msra.mxu0 0.0
      %1081 = vmatprep.subr.mxu0 0.0
      %1082 = vmatpush2.msra.mxu0 0.0
      %1083 = vmatprep.subr.mxu0 0.0
      %1084 = vmatpush2.msra.mxu0 0.0
      %1085 = vmatprep.subr.mxu0 0.0
      %1086 = vmatpush2.msra.mxu0 0.0
      %1087 = vmatprep.subr.mxu0 0.0
      %1088 = vmatpush2.msra.mxu0 0.0
      %1089 = vmatprep.subr.mxu0 0.0
      %1090 = vmatpush2.msra.mxu0 0.0
      %1091 = vmatprep.subr.mxu0 0.0
      %1092 = vmatpush2.msra.mxu0 0.0
      %1093 = vmatprep.mubr.f32.mxu0 0.0
      %1094 = vmatmul.mubr.f32.gmra.mxu0 %v1027
      %v1095 = vpop.f32.mrf.mxu0
      %v1096 = vadd.f32 %v1024, %v1095
      %v1097 = vpop.f32.mrf.mxu0
      %1098 = vdwg.mxu0
      %1099 = vst [vmem:[#allocation15] sm:$0x3] %v1096
    $region69: #{tpu_custom_call.1} parent=1 // pred_fallthru
      _
    // Predicated region
    $region70: #{tpu_custom_call.1} parent=1 // pred_check
      _
    $region71: #{tpu_custom_call.1} parent=1 // pred_check_branch
      %1101 = sbr.rel (0) target = $region73
    $region72: #{tpu_custom_call.1} parent=1 // pred_region
      %s1103 = ssub.s32 32, 32
      %1104 = vsyncadd [#allocation8], %s1103
      %s1106 = sshll.u32 [#allocation15], 4
      %s1107 = int_to_ptr.vmem [resolvable:$true] %s1106
      %1109 = dma.vmem_to_hbm [thread:$0]  %s1107, 32, %s10, [#allocation8]
    $region73: #{tpu_custom_call.1} parent=1 // pred_fallthru
      _
    // Predicated region
    $region74: #{tpu_custom_call.1} parent=1 // pred_check
      _
    $region75: #{tpu_custom_call.1} parent=1 // pred_check_branch
      %1111 = sbr.rel (0) target = $region77
    $region76: #{tpu_custom_call.1} parent=1 // pred_region
      %1112 = dma.done [#allocation8], 32
    $region77: #{tpu_custom_call.1} parent=1 // pred_fallthru
      _
    %1113 = vsyncpa [#allocation7], 1
    %1114 = vsyncpa [#allocation10], 1
    %1115 = vsyncpa [#allocation13], 1
    %1116 = vsyncpa [#allocation8], 1

</llo_original>
